<compile_context>
chip_gen: v5e
topology: v5e:2x2
jax: 0.10.0
libtpu: 0.0.40
codegen_flags: <defaults>
</compile_context>

<pallas_src>
import functools

import jax
import jax.numpy as jnp
from jax.experimental import pallas as pl
from jax.experimental.pallas import tpu as pltpu


def _round_up(x, m):
    return ((x + m - 1) // m) * m


_COMPILER_PARAMS = pltpu.CompilerParams(
    dimension_semantics=("parallel",),          # batch / M-tile axis
    vmem_limit_bytes=32 * 1024 * 1024,          # explicit, safe on v5e/v6e/v7x
)


# ---------------------------------------------------------------------------
# Kernel 1: fused conv (in-VMEM im2col) + bias + ReLU + 2x2 max-pool.
# One grid step == one image.
# ---------------------------------------------------------------------------
def _conv_pool_kernel(x_ref, w_ref, b_ref, o_ref, col_ref, row_ref, *,
                      kh, kw, ho, wo, cin, cout):
    po, qo = ho // 2, wo // 2

    def conv_row(r):
        # Build the (wo, kh*kw*cin) patch matrix for conv-output row `r`
        # directly in VMEM scratch (no HBM im2col duplication).
        for i in range(kh):
            for j in range(kw):
                c0 = (i * kw + j) * cin
                col_ref[:, c0:c0 + cin] = x_ref[0, r + i, j:j + wo, :]
        y = jnp.dot(col_ref[...], w_ref[...],
                    preferred_element_type=jnp.float32)
        return jnp.maximum(y + b_ref[...], 0.0)            # (wo, cout)

    def body(h, carry):
        r = 2 * h
        y0 = conv_row(r)
        y1 = conv_row(r + 1)
        row_ref[...] = jnp.maximum(y0, y1)                 # vertical 2-max
        left = row_ref[pl.ds(0, qo, 2), :]                 # even output cols
        right = row_ref[pl.ds(1, qo, 2), :]                # odd output cols
        o_ref[0, h, :, :] = jnp.maximum(left, right)       # horizontal 2-max
        return carry

    jax.lax.fori_loop(0, po, body, 0)


def conv_pool(x, w, b, *, kh, kw, cout):
    """x: (N, Hp, Wp, Cin) NHWC (already padded), w: (kh*kw*Cin, Cout), b: (1, Cout).
    Returns ReLU(conv(x)) max-pooled 2x2: (N, Ho/2, Wo/2, Cout)."""
    n, hp, wp, cin = x.shape
    ho, wo = hp - kh + 1, wp - kw + 1
    po, qo = ho // 2, wo // 2
    kernel = functools.partial(_conv_pool_kernel, kh=kh, kw=kw, ho=ho, wo=wo,
                               cin=cin, cout=cout)
    return pl.pallas_call(
        kernel,
        out_shape=jax.ShapeDtypeStruct((n, po, qo, cout), x.dtype),
        grid_spec=pltpu.PrefetchScalarGridSpec(
            num_scalar_prefetch=0,
            grid=(n,),
            in_specs=[
                pl.BlockSpec((1, hp, wp, cin), lambda i: (i, 0, 0, 0)),
                pl.BlockSpec((kh * kw * cin, cout), lambda i: (0, 0)),
                pl.BlockSpec((1, cout), lambda i: (0, 0)),
            ],
            out_specs=pl.BlockSpec((1, po, qo, cout), lambda i: (i, 0, 0, 0)),
            scratch_shapes=[
                pltpu.VMEM((wo, kh * kw * cin), jnp.float32),   # im2col row tile
                pltpu.VMEM((wo, cout), jnp.float32),            # pooling staging
            ],
        ),
        compiler_params=_COMPILER_PARAMS,
    )(x, w, b)


# ---------------------------------------------------------------------------
# Kernel 2: fused fc1 -> ReLU -> fc2 -> ReLU -> fc3, all hidden dims padded to
# 128 (lane-dense), gridded over M row-tiles.
# ---------------------------------------------------------------------------
def _fc_stack_kernel(x_ref, w1_ref, b1_ref, w2_ref, b2_ref, w3_ref, b3_ref,
                     o_ref):
    h = jnp.dot(x_ref[...], w1_ref[...], preferred_element_type=jnp.float32)
    h = jnp.maximum(h + b1_ref[...], 0.0)
    h = jnp.dot(h, w2_ref[...], preferred_element_type=jnp.float32)
    h = jnp.maximum(h + b2_ref[...], 0.0)
    h = jnp.dot(h, w3_ref[...], preferred_element_type=jnp.float32)
    o_ref[...] = (h + b3_ref[...]).astype(o_ref.dtype)


def fc_stack(x, w1, b1, w2, b2, w3, b3, *, max_tile_m=256):
    m, k = x.shape
    tm = min(max_tile_m, _round_up(m, 8))       # M tile, multiple of 8
    mp = _round_up(m, tm)
    if mp != m:
        x = jnp.pad(x, ((0, mp - m), (0, 0)))
    nout = w3.shape[1]                          # 128 (padded, lane-dense)
    out = pl.pallas_call(
        _fc_stack_kernel,
        out_shape=jax.ShapeDtypeStruct((mp, nout), x.dtype),
        grid_spec=pltpu.PrefetchScalarGridSpec(
            num_scalar_prefetch=0,
            grid=(mp // tm,),
            in_specs=[
                pl.BlockSpec((tm, k), lambda i: (i, 0)),
                pl.BlockSpec(w1.shape, lambda i: (0, 0)),
                pl.BlockSpec(b1.shape, lambda i: (0, 0)),
                pl.BlockSpec(w2.shape, lambda i: (0, 0)),
                pl.BlockSpec(b2.shape, lambda i: (0, 0)),
                pl.BlockSpec(w3.shape, lambda i: (0, 0)),
                pl.BlockSpec(b3.shape, lambda i: (0, 0)),
            ],
            out_specs=pl.BlockSpec((tm, nout), lambda i: (i, 0)),
        ),
        compiler_params=_COMPILER_PARAMS,
    )(x, w1, b1, w2, b2, w3, b3)
    return out


# ------------------------------- parameters --------------------------------
def init_params(key):
    """Deterministic PyTorch-default-style uniform(-1/sqrt(fan_in), +) init."""
    ks = jax.random.split(key, 10)

    def unif(k, shape, fan_in):
        bound = 1.0 / jnp.sqrt(jnp.float32(fan_in))
        return jax.random.uniform(k, shape, jnp.float32, -bound, bound)

    return {
        "conv1_w": unif(ks[0], (6, 1, 5, 5), 1 * 5 * 5),
        "conv1_b": unif(ks[1], (6,), 1 * 5 * 5),
        "conv2_w": unif(ks[2], (16, 6, 5, 5), 6 * 5 * 5),
        "conv2_b": unif(ks[3], (16,), 6 * 5 * 5),
        "fc1_w": unif(ks[4], (120, 400), 400),
        "fc1_b": unif(ks[5], (120,), 400),
        "fc2_w": unif(ks[6], (84, 120), 120),
        "fc2_b": unif(ks[7], (84,), 120),
        "fc3_w": unif(ks[8], (10, 84), 84),
        "fc3_b": unif(ks[9], (10,), 84),
    }


def prepare_params(params):
    """One-time weight layout prep (hoisted out of the forward pass)."""
    # conv weights -> (kh*kw*cin, cout), rows ordered (kh, kw, cin)
    w1 = jnp.transpose(params["conv1_w"], (2, 3, 1, 0)).reshape(25, 6)
    w2 = jnp.transpose(params["conv2_w"], (2, 3, 1, 0)).reshape(150, 16)
    # fc1: torch flattens NCHW (16,5,5); our features are NHWC (5,5,16).
    # Permute fc1 columns so no activation transpose is needed at runtime.
    f1 = (params["fc1_w"].reshape(120, 16, 5, 5)
          .transpose(0, 2, 3, 1).reshape(120, 400).T)       # (400, 120)
    f1 = jnp.pad(f1, ((0, 0), (0, 8)))                      # (400, 128)
    fb1 = jnp.pad(params["fc1_b"], (0, 8)).reshape(1, 128)
    f2 = jnp.pad(params["fc2_w"].T, ((0, 8), (0, 44)))      # (128, 128)
    fb2 = jnp.pad(params["fc2_b"], (0, 44)).reshape(1, 128)
    f3 = jnp.pad(params["fc3_w"].T, ((0, 44), (0, 118)))    # (128, 128)
    fb3 = jnp.pad(params["fc3_b"], (0, 118)).reshape(1, 128)
    return {
        "conv1_w": w1, "conv1_b": params["conv1_b"].reshape(1, 6),
        "conv2_w": w2, "conv2_b": params["conv2_b"].reshape(1, 16),
        "fc1_w": f1, "fc1_b": fb1,
        "fc2_w": f2, "fc2_b": fb2,
        "fc3_w": f3, "fc3_b": fb3,
    }


# -------------------------------- forward ----------------------------------
def fashion_class_forward(prep, x_nchw):
    # x_nchw: (N, 1, 28, 28) float32, PyTorch NCHW convention.
    n = x_nchw.shape[0]
    x = jnp.transpose(x_nchw, (0, 2, 3, 1))                        # NHWC (N,28,28,1)
    x = jnp.pad(x, ((0, 0), (2, 2), (2, 2), (0, 0)))               # conv1 padding=2
    x = conv_pool(x, prep["conv1_w"], prep["conv1_b"],
                  kh=5, kw=5, cout=6)                              # (N,14,14,6)
    x = conv_pool(x, prep["conv2_w"], prep["conv2_b"],
                  kh=5, kw=5, cout=16)                             # (N,5,5,16)
    feat = x.reshape(n, 400)           # NHWC flatten; fc1 weight already permuted
    logits = fc_stack(feat, prep["fc1_w"], prep["fc1_b"],
                      prep["fc2_w"], prep["fc2_b"],
                      prep["fc3_w"], prep["fc3_b"])                # (Mp, 128) padded
    return logits[:n, :10]                                         # (N, 10)


if __name__ == "__main__":
    key = jax.random.PRNGKey(0)
    pkey, xkey = jax.random.split(key)
    params = init_params(pkey)
    prep = prepare_params(params)
    # LeNet geometry requires 28x28 single-channel input (FashionMNIST).
    x = jax.random.normal(xkey, (2, 1, 28, 28), jnp.float32)
    out = jax.jit(fashion_class_forward)(prep, x)
    out = jax.block_until_ready(out)
    assert out.shape == (2, 10) and out.dtype == jnp.float32
    print("KERNEL_OK")
</pallas_src>

<mosaic_0001>
module attributes {stable_mosaic.version = 11 : i64} {
  func.func @_conv_pool_kernel(%arg0: i32, %arg1: memref<1x32x32x1xf32, #tpu.memory_space<vmem>>, %arg2: memref<25x6xf32, #tpu.memory_space<vmem>>, %arg3: memref<1x6xf32, #tpu.memory_space<vmem>>, %arg4: memref<1x14x14x6xf32, #tpu.memory_space<vmem>>, %arg5: memref<28x25xf32, #tpu.memory_space<vmem>>, %arg6: memref<28x6xf32, #tpu.memory_space<vmem>>) attributes {dimension_semantics = [#tpu.dimension_semantics<parallel>], iteration_bounds = array<i64: 2>, scalar_prefetch = 0 : i64, scratch_operands = 2 : i64, tpu.core_type = #tpu.core_type<tc>, window_params = [{transform_indices = @transform_0, window_bounds = array<i64: 1, 32, 32, 1>}, {pipeline_mode = #tpu.pipeline_mode<synchronous>, transform_indices = @transform_1, window_bounds = array<i64: 25, 6>}, {pipeline_mode = #tpu.pipeline_mode<synchronous>, transform_indices = @transform_2, window_bounds = array<i64: 1, 6>}, {transform_indices = @transform_3, window_bounds = array<i64: 1, 14, 14, 6>}]} {
    %c0_i32 = arith.constant 0 : i32
    %c14_i32 = arith.constant 14 : i32
    %0 = arith.addi %c0_i32, %c14_i32 : i32
    %c1_i32 = arith.constant 1 : i32
    scf.for %arg7 = %c0_i32 to %0 step %c1_i32  : i32 {
      %c2_i32 = arith.constant 2 : i32
      %1 = arith.muli %c2_i32, %arg7 : i32
      %c0_i32_1 = arith.constant 0 : i32
      %2 = arith.addi %1, %c0_i32_1 : i32
      %c0 = arith.constant 0 : index
      %3 = arith.index_cast %2 : i32 to index
      %c0_2 = arith.constant 0 : index
      %c0_3 = arith.constant 0 : index
      %4 = vector.load %arg1[%c0, %3, %c0_2, %c0_3] : memref<1x32x32x1xf32, #tpu.memory_space<vmem>>, vector<1x1x28x1xf32>
      %5 = vector.shape_cast %4 : vector<1x1x28x1xf32> to vector<28x1xf32>
      %c0_4 = arith.constant 0 : index
      %c0_5 = arith.constant 0 : index
      %6 = vector.load %arg5[%c0_4, %c0_5] : memref<28x25xf32, #tpu.memory_space<vmem>>, vector<28x1xf32>
      tpu.vector_store %arg5[%c0_4, %c0_5], %5 {strides = array<i32>} : memref<28x25xf32, #tpu.memory_space<vmem>>, vector<28x1xf32>,
      %c0_i32_6 = arith.constant 0 : i32
      %7 = arith.addi %1, %c0_i32_6 : i32
      %c0_7 = arith.constant 0 : index
      %8 = arith.index_cast %7 : i32 to index
      %c1 = arith.constant 1 : index
      %c0_8 = arith.constant 0 : index
      %9 = vector.load %arg1[%c0_7, %8, %c1, %c0_8] : memref<1x32x32x1xf32, #tpu.memory_space<vmem>>, vector<1x1x28x1xf32>
      %10 = vector.shape_cast %9 : vector<1x1x28x1xf32> to vector<28x1xf32>
      %c0_9 = arith.constant 0 : index
      %c1_10 = arith.constant 1 : index
      %11 = vector.load %arg5[%c0_9, %c1_10] : memref<28x25xf32, #tpu.memory_space<vmem>>, vector<28x1xf32>
      tpu.vector_store %arg5[%c0_9, %c1_10], %10 {strides = array<i32>} : memref<28x25xf32, #tpu.memory_space<vmem>>, vector<28x1xf32>,
      %c0_i32_11 = arith.constant 0 : i32
      %12 = arith.addi %1, %c0_i32_11 : i32
      %c0_12 = arith.constant 0 : index
      %13 = arith.index_cast %12 : i32 to index
      %c2 = arith.constant 2 : index
      %c0_13 = arith.constant 0 : index
      %14 = vector.load %arg1[%c0_12, %13, %c2, %c0_13] : memref<1x32x32x1xf32, #tpu.memory_space<vmem>>, vector<1x1x28x1xf32>
      %15 = vector.shape_cast %14 : vector<1x1x28x1xf32> to vector<28x1xf32>
      %c0_14 = arith.constant 0 : index
      %c2_15 = arith.constant 2 : index
      %16 = vector.load %arg5[%c0_14, %c2_15] : memref<28x25xf32, #tpu.memory_space<vmem>>, vector<28x1xf32>
      tpu.vector_store %arg5[%c0_14, %c2_15], %15 {strides = array<i32>} : memref<28x25xf32, #tpu.memory_space<vmem>>, vector<28x1xf32>,
      %c0_i32_16 = arith.constant 0 : i32
      %17 = arith.addi %1, %c0_i32_16 : i32
      %c0_17 = arith.constant 0 : index
      %18 = arith.index_cast %17 : i32 to index
      %c3 = arith.constant 3 : index
      %c0_18 = arith.constant 0 : index
      %19 = vector.load %arg1[%c0_17, %18, %c3, %c0_18] : memref<1x32x32x1xf32, #tpu.memory_space<vmem>>, vector<1x1x28x1xf32>
      %20 = vector.shape_cast %19 : vector<1x1x28x1xf32> to vector<28x1xf32>
      %c0_19 = arith.constant 0 : index
      %c3_20 = arith.constant 3 : index
      %21 = vector.load %arg5[%c0_19, %c3_20] : memref<28x25xf32, #tpu.memory_space<vmem>>, vector<28x1xf32>
      tpu.vector_store %arg5[%c0_19, %c3_20], %20 {strides = array<i32>} : memref<28x25xf32, #tpu.memory_space<vmem>>, vector<28x1xf32>,
      %c0_i32_21 = arith.constant 0 : i32
      %22 = arith.addi %1, %c0_i32_21 : i32
      %c0_22 = arith.constant 0 : index
      %23 = arith.index_cast %22 : i32 to index
      %c4 = arith.constant 4 : index
      %c0_23 = arith.constant 0 : index
      %24 = vector.load %arg1[%c0_22, %23, %c4, %c0_23] : memref<1x32x32x1xf32, #tpu.memory_space<vmem>>, vector<1x1x28x1xf32>
      %25 = vector.shape_cast %24 : vector<1x1x28x1xf32> to vector<28x1xf32>
      %c0_24 = arith.constant 0 : index
      %c4_25 = arith.constant 4 : index
      %26 = vector.load %arg5[%c0_24, %c4_25] : memref<28x25xf32, #tpu.memory_space<vmem>>, vector<28x1xf32>
      tpu.vector_store %arg5[%c0_24, %c4_25], %25 {strides = array<i32>} : memref<28x25xf32, #tpu.memory_space<vmem>>, vector<28x1xf32>,
      %c1_i32_26 = arith.constant 1 : i32
      %27 = arith.addi %1, %c1_i32_26 : i32
      %c0_27 = arith.constant 0 : index
      %28 = arith.index_cast %27 : i32 to index
      %c0_28 = arith.constant 0 : index
      %c0_29 = arith.constant 0 : index
      %29 = vector.load %arg1[%c0_27, %28, %c0_28, %c0_29] : memref<1x32x32x1xf32, #tpu.memory_space<vmem>>, vector<1x1x28x1xf32>
      %30 = vector.shape_cast %29 : vector<1x1x28x1xf32> to vector<28x1xf32>
      %c0_30 = arith.constant 0 : index
      %c5 = arith.constant 5 : index
      %31 = vector.load %arg5[%c0_30, %c5] : memref<28x25xf32, #tpu.memory_space<vmem>>, vector<28x1xf32>
      tpu.vector_store %arg5[%c0_30, %c5], %30 {strides = array<i32>} : memref<28x25xf32, #tpu.memory_space<vmem>>, vector<28x1xf32>,
      %c1_i32_31 = arith.constant 1 : i32
      %32 = arith.addi %1, %c1_i32_31 : i32
      %c0_32 = arith.constant 0 : index
      %33 = arith.index_cast %32 : i32 to index
      %c1_33 = arith.constant 1 : index
      %c0_34 = arith.constant 0 : index
      %34 = vector.load %arg1[%c0_32, %33, %c1_33, %c0_34] : memref<1x32x32x1xf32, #tpu.memory_space<vmem>>, vector<1x1x28x1xf32>
      %35 = vector.shape_cast %34 : vector<1x1x28x1xf32> to vector<28x1xf32>
      %c0_35 = arith.constant 0 : index
      %c6 = arith.constant 6 : index
      %36 = vector.load %arg5[%c0_35, %c6] : memref<28x25xf32, #tpu.memory_space<vmem>>, vector<28x1xf32>
      tpu.vector_store %arg5[%c0_35, %c6], %35 {strides = array<i32>} : memref<28x25xf32, #tpu.memory_space<vmem>>, vector<28x1xf32>,
      %c1_i32_36 = arith.constant 1 : i32
      %37 = arith.addi %1, %c1_i32_36 : i32
      %c0_37 = arith.constant 0 : index
      %38 = arith.index_cast %37 : i32 to index
      %c2_38 = arith.constant 2 : index
      %c0_39 = arith.constant 0 : index
      %39 = vector.load %arg1[%c0_37, %38, %c2_38, %c0_39] : memref<1x32x32x1xf32, #tpu.memory_space<vmem>>, vector<1x1x28x1xf32>
      %40 = vector.shape_cast %39 : vector<1x1x28x1xf32> to vector<28x1xf32>
      %c0_40 = arith.constant 0 : index
      %c7 = arith.constant 7 : index
      %41 = vector.load %arg5[%c0_40, %c7] : memref<28x25xf32, #tpu.memory_space<vmem>>, vector<28x1xf32>
      tpu.vector_store %arg5[%c0_40, %c7], %40 {strides = array<i32>} : memref<28x25xf32, #tpu.memory_space<vmem>>, vector<28x1xf32>,
      %c1_i32_41 = arith.constant 1 : i32
      %42 = arith.addi %1, %c1_i32_41 : i32
      %c0_42 = arith.constant 0 : index
      %43 = arith.index_cast %42 : i32 to index
      %c3_43 = arith.constant 3 : index
      %c0_44 = arith.constant 0 : index
      %44 = vector.load %arg1[%c0_42, %43, %c3_43, %c0_44] : memref<1x32x32x1xf32, #tpu.memory_space<vmem>>, vector<1x1x28x1xf32>
      %45 = vector.shape_cast %44 : vector<1x1x28x1xf32> to vector<28x1xf32>
      %c0_45 = arith.constant 0 : index
      %c8 = arith.constant 8 : index
      %46 = vector.load %arg5[%c0_45, %c8] : memref<28x25xf32, #tpu.memory_space<vmem>>, vector<28x1xf32>
      tpu.vector_store %arg5[%c0_45, %c8], %45 {strides = array<i32>} : memref<28x25xf32, #tpu.memory_space<vmem>>, vector<28x1xf32>,
      %c1_i32_46 = arith.constant 1 : i32
      %47 = arith.addi %1, %c1_i32_46 : i32
      %c0_47 = arith.constant 0 : index
      %48 = arith.index_cast %47 : i32 to index
      %c4_48 = arith.constant 4 : index
      %c0_49 = arith.constant 0 : index
      %49 = vector.load %arg1[%c0_47, %48, %c4_48, %c0_49] : memref<1x32x32x1xf32, #tpu.memory_space<vmem>>, vector<1x1x28x1xf32>
      %50 = vector.shape_cast %49 : vector<1x1x28x1xf32> to vector<28x1xf32>
      %c0_50 = arith.constant 0 : index
      %c9 = arith.constant 9 : index
      %51 = vector.load %arg5[%c0_50, %c9] : memref<28x25xf32, #tpu.memory_space<vmem>>, vector<28x1xf32>
      tpu.vector_store %arg5[%c0_50, %c9], %50 {strides = array<i32>} : memref<28x25xf32, #tpu.memory_space<vmem>>, vector<28x1xf32>,
      %c2_i32_51 = arith.constant 2 : i32
      %52 = arith.addi %1, %c2_i32_51 : i32
      %c0_52 = arith.constant 0 : index
      %53 = arith.index_cast %52 : i32 to index
      %c0_53 = arith.constant 0 : index
      %c0_54 = arith.constant 0 : index
      %54 = vector.load %arg1[%c0_52, %53, %c0_53, %c0_54] : memref<1x32x32x1xf32, #tpu.memory_space<vmem>>, vector<1x1x28x1xf32>
      %55 = vector.shape_cast %54 : vector<1x1x28x1xf32> to vector<28x1xf32>
      %c0_55 = arith.constant 0 : index
      %c10 = arith.constant 10 : index
      %56 = vector.load %arg5[%c0_55, %c10] : memref<28x25xf32, #tpu.memory_space<vmem>>, vector<28x1xf32>
      tpu.vector_store %arg5[%c0_55, %c10], %55 {strides = array<i32>} : memref<28x25xf32, #tpu.memory_space<vmem>>, vector<28x1xf32>,
      %c2_i32_56 = arith.constant 2 : i32
      %57 = arith.addi %1, %c2_i32_56 : i32
      %c0_57 = arith.constant 0 : index
      %58 = arith.index_cast %57 : i32 to index
      %c1_58 = arith.constant 1 : index
      %c0_59 = arith.constant 0 : index
      %59 = vector.load %arg1[%c0_57, %58, %c1_58, %c0_59] : memref<1x32x32x1xf32, #tpu.memory_space<vmem>>, vector<1x1x28x1xf32>
      %60 = vector.shape_cast %59 : vector<1x1x28x1xf32> to vector<28x1xf32>
      %c0_60 = arith.constant 0 : index
      %c11 = arith.constant 11 : index
      %61 = vector.load %arg5[%c0_60, %c11] : memref<28x25xf32, #tpu.memory_space<vmem>>, vector<28x1xf32>
      tpu.vector_store %arg5[%c0_60, %c11], %60 {strides = array<i32>} : memref<28x25xf32, #tpu.memory_space<vmem>>, vector<28x1xf32>,
      %c2_i32_61 = arith.constant 2 : i32
      %62 = arith.addi %1, %c2_i32_61 : i32
      %c0_62 = arith.constant 0 : index
      %63 = arith.index_cast %62 : i32 to index
      %c2_63 = arith.constant 2 : index
      %c0_64 = arith.constant 0 : index
      %64 = vector.load %arg1[%c0_62, %63, %c2_63, %c0_64] : memref<1x32x32x1xf32, #tpu.memory_space<vmem>>, vector<1x1x28x1xf32>
      %65 = vector.shape_cast %64 : vector<1x1x28x1xf32> to vector<28x1xf32>
      %c0_65 = arith.constant 0 : index
      %c12 = arith.constant 12 : index
      %66 = vector.load %arg5[%c0_65, %c12] : memref<28x25xf32, #tpu.memory_space<vmem>>, vector<28x1xf32>
      tpu.vector_store %arg5[%c0_65, %c12], %65 {strides = array<i32>} : memref<28x25xf32, #tpu.memory_space<vmem>>, vector<28x1xf32>,
      %c2_i32_66 = arith.constant 2 : i32
      %67 = arith.addi %1, %c2_i32_66 : i32
      %c0_67 = arith.constant 0 : index
      %68 = arith.index_cast %67 : i32 to index
      %c3_68 = arith.constant 3 : index
      %c0_69 = arith.constant 0 : index
      %69 = vector.load %arg1[%c0_67, %68, %c3_68, %c0_69] : memref<1x32x32x1xf32, #tpu.memory_space<vmem>>, vector<1x1x28x1xf32>
      %70 = vector.shape_cast %69 : vector<1x1x28x1xf32> to vector<28x1xf32>
      %c0_70 = arith.constant 0 : index
      %c13 = arith.constant 13 : index
      %71 = vector.load %arg5[%c0_70, %c13] : memref<28x25xf32, #tpu.memory_space<vmem>>, vector<28x1xf32>
      tpu.vector_store %arg5[%c0_70, %c13], %70 {strides = array<i32>} : memref<28x25xf32, #tpu.memory_space<vmem>>, vector<28x1xf32>,
      %c2_i32_71 = arith.constant 2 : i32
      %72 = arith.addi %1, %c2_i32_71 : i32
      %c0_72 = arith.constant 0 : index
      %73 = arith.index_cast %72 : i32 to index
      %c4_73 = arith.constant 4 : index
      %c0_74 = arith.constant 0 : index
      %74 = vector.load %arg1[%c0_72, %73, %c4_73, %c0_74] : memref<1x32x32x1xf32, #tpu.memory_space<vmem>>, vector<1x1x28x1xf32>
      %75 = vector.shape_cast %74 : vector<1x1x28x1xf32> to vector<28x1xf32>
      %c0_75 = arith.constant 0 : index
      %c14 = arith.constant 14 : index
      %76 = vector.load %arg5[%c0_75, %c14] : memref<28x25xf32, #tpu.memory_space<vmem>>, vector<28x1xf32>
      tpu.vector_store %arg5[%c0_75, %c14], %75 {strides = array<i32>} : memref<28x25xf32, #tpu.memory_space<vmem>>, vector<28x1xf32>,
      %c3_i32 = arith.constant 3 : i32
      %77 = arith.addi %1, %c3_i32 : i32
      %c0_76 = arith.constant 0 : index
      %78 = arith.index_cast %77 : i32 to index
      %c0_77 = arith.constant 0 : index
      %c0_78 = arith.constant 0 : index
      %79 = vector.load %arg1[%c0_76, %78, %c0_77, %c0_78] : memref<1x32x32x1xf32, #tpu.memory_space<vmem>>, vector<1x1x28x1xf32>
      %80 = vector.shape_cast %79 : vector<1x1x28x1xf32> to vector<28x1xf32>
      %c0_79 = arith.constant 0 : index
      %c15 = arith.constant 15 : index
      %81 = vector.load %arg5[%c0_79, %c15] : memref<28x25xf32, #tpu.memory_space<vmem>>, vector<28x1xf32>
      tpu.vector_store %arg5[%c0_79, %c15], %80 {strides = array<i32>} : memref<28x25xf32, #tpu.memory_space<vmem>>, vector<28x1xf32>,
      %c3_i32_80 = arith.constant 3 : i32
      %82 = arith.addi %1, %c3_i32_80 : i32
      %c0_81 = arith.constant 0 : index
      %83 = arith.index_cast %82 : i32 to index
      %c1_82 = arith.constant 1 : index
      %c0_83 = arith.constant 0 : index
      %84 = vector.load %arg1[%c0_81, %83, %c1_82, %c0_83] : memref<1x32x32x1xf32, #tpu.memory_space<vmem>>, vector<1x1x28x1xf32>
      %85 = vector.shape_cast %84 : vector<1x1x28x1xf32> to vector<28x1xf32>
      %c0_84 = arith.constant 0 : index
      %c16 = arith.constant 16 : index
      %86 = vector.load %arg5[%c0_84, %c16] : memref<28x25xf32, #tpu.memory_space<vmem>>, vector<28x1xf32>
      tpu.vector_store %arg5[%c0_84, %c16], %85 {strides = array<i32>} : memref<28x25xf32, #tpu.memory_space<vmem>>, vector<28x1xf32>,
      %c3_i32_85 = arith.constant 3 : i32
      %87 = arith.addi %1, %c3_i32_85 : i32
      %c0_86 = arith.constant 0 : index
      %88 = arith.index_cast %87 : i32 to index
      %c2_87 = arith.constant 2 : index
      %c0_88 = arith.constant 0 : index
      %89 = vector.load %arg1[%c0_86, %88, %c2_87, %c0_88] : memref<1x32x32x1xf32, #tpu.memory_space<vmem>>, vector<1x1x28x1xf32>
      %90 = vector.shape_cast %89 : vector<1x1x28x1xf32> to vector<28x1xf32>
      %c0_89 = arith.constant 0 : index
      %c17 = arith.constant 17 : index
      %91 = vector.load %arg5[%c0_89, %c17] : memref<28x25xf32, #tpu.memory_space<vmem>>, vector<28x1xf32>
      tpu.vector_store %arg5[%c0_89, %c17], %90 {strides = array<i32>} : memref<28x25xf32, #tpu.memory_space<vmem>>, vector<28x1xf32>,
      %c3_i32_90 = arith.constant 3 : i32
      %92 = arith.addi %1, %c3_i32_90 : i32
      %c0_91 = arith.constant 0 : index
      %93 = arith.index_cast %92 : i32 to index
      %c3_92 = arith.constant 3 : index
      %c0_93 = arith.constant 0 : index
      %94 = vector.load %arg1[%c0_91, %93, %c3_92, %c0_93] : memref<1x32x32x1xf32, #tpu.memory_space<vmem>>, vector<1x1x28x1xf32>
      %95 = vector.shape_cast %94 : vector<1x1x28x1xf32> to vector<28x1xf32>
      %c0_94 = arith.constant 0 : index
      %c18 = arith.constant 18 : index
      %96 = vector.load %arg5[%c0_94, %c18] : memref<28x25xf32, #tpu.memory_space<vmem>>, vector<28x1xf32>
      tpu.vector_store %arg5[%c0_94, %c18], %95 {strides = array<i32>} : memref<28x25xf32, #tpu.memory_space<vmem>>, vector<28x1xf32>,
      %c3_i32_95 = arith.constant 3 : i32
      %97 = arith.addi %1, %c3_i32_95 : i32
      %c0_96 = arith.constant 0 : index
      %98 = arith.index_cast %97 : i32 to index
      %c4_97 = arith.constant 4 : index
      %c0_98 = arith.constant 0 : index
      %99 = vector.load %arg1[%c0_96, %98, %c4_97, %c0_98] : memref<1x32x32x1xf32, #tpu.memory_space<vmem>>, vector<1x1x28x1xf32>
      %100 = vector.shape_cast %99 : vector<1x1x28x1xf32> to vector<28x1xf32>
      %c0_99 = arith.constant 0 : index
      %c19 = arith.constant 19 : index
      %101 = vector.load %arg5[%c0_99, %c19] : memref<28x25xf32, #tpu.memory_space<vmem>>, vector<28x1xf32>
      tpu.vector_store %arg5[%c0_99, %c19], %100 {strides = array<i32>} : memref<28x25xf32, #tpu.memory_space<vmem>>, vector<28x1xf32>,
      %c4_i32 = arith.constant 4 : i32
      %102 = arith.addi %1, %c4_i32 : i32
      %c0_100 = arith.constant 0 : index
      %103 = arith.index_cast %102 : i32 to index
      %c0_101 = arith.constant 0 : index
      %c0_102 = arith.constant 0 : index
      %104 = vector.load %arg1[%c0_100, %103, %c0_101, %c0_102] : memref<1x32x32x1xf32, #tpu.memory_space<vmem>>, vector<1x1x28x1xf32>
      %105 = vector.shape_cast %104 : vector<1x1x28x1xf32> to vector<28x1xf32>
      %c0_103 = arith.constant 0 : index
      %c20 = arith.constant 20 : index
      %106 = vector.load %arg5[%c0_103, %c20] : memref<28x25xf32, #tpu.memory_space<vmem>>, vector<28x1xf32>
      tpu.vector_store %arg5[%c0_103, %c20], %105 {strides = array<i32>} : memref<28x25xf32, #tpu.memory_space<vmem>>, vector<28x1xf32>,
      %c4_i32_104 = arith.constant 4 : i32
      %107 = arith.addi %1, %c4_i32_104 : i32
      %c0_105 = arith.constant 0 : index
      %108 = arith.index_cast %107 : i32 to index
      %c1_106 = arith.constant 1 : index
      %c0_107 = arith.constant 0 : index
      %109 = vector.load %arg1[%c0_105, %108, %c1_106, %c0_107] : memref<1x32x32x1xf32, #tpu.memory_space<vmem>>, vector<1x1x28x1xf32>
      %110 = vector.shape_cast %109 : vector<1x1x28x1xf32> to vector<28x1xf32>
      %c0_108 = arith.constant 0 : index
      %c21 = arith.constant 21 : index
      %111 = vector.load %arg5[%c0_108, %c21] : memref<28x25xf32, #tpu.memory_space<vmem>>, vector<28x1xf32>
      tpu.vector_store %arg5[%c0_108, %c21], %110 {strides = array<i32>} : memref<28x25xf32, #tpu.memory_space<vmem>>, vector<28x1xf32>,
      %c4_i32_109 = arith.constant 4 : i32
      %112 = arith.addi %1, %c4_i32_109 : i32
      %c0_110 = arith.constant 0 : index
      %113 = arith.index_cast %112 : i32 to index
      %c2_111 = arith.constant 2 : index
      %c0_112 = arith.constant 0 : index
      %114 = vector.load %arg1[%c0_110, %113, %c2_111, %c0_112] : memref<1x32x32x1xf32, #tpu.memory_space<vmem>>, vector<1x1x28x1xf32>
      %115 = vector.shape_cast %114 : vector<1x1x28x1xf32> to vector<28x1xf32>
      %c0_113 = arith.constant 0 : index
      %c22 = arith.constant 22 : index
      %116 = vector.load %arg5[%c0_113, %c22] : memref<28x25xf32, #tpu.memory_space<vmem>>, vector<28x1xf32>
      tpu.vector_store %arg5[%c0_113, %c22], %115 {strides = array<i32>} : memref<28x25xf32, #tpu.memory_space<vmem>>, vector<28x1xf32>,
      %c4_i32_114 = arith.constant 4 : i32
      %117 = arith.addi %1, %c4_i32_114 : i32
      %c0_115 = arith.constant 0 : index
      %118 = arith.index_cast %117 : i32 to index
      %c3_116 = arith.constant 3 : index
      %c0_117 = arith.constant 0 : index
      %119 = vector.load %arg1[%c0_115, %118, %c3_116, %c0_117] : memref<1x32x32x1xf32, #tpu.memory_space<vmem>>, vector<1x1x28x1xf32>
      %120 = vector.shape_cast %119 : vector<1x1x28x1xf32> to vector<28x1xf32>
      %c0_118 = arith.constant 0 : index
      %c23 = arith.constant 23 : index
      %121 = vector.load %arg5[%c0_118, %c23] : memref<28x25xf32, #tpu.memory_space<vmem>>, vector<28x1xf32>
      tpu.vector_store %arg5[%c0_118, %c23], %120 {strides = array<i32>} : memref<28x25xf32, #tpu.memory_space<vmem>>, vector<28x1xf32>,
      %c4_i32_119 = arith.constant 4 : i32
      %122 = arith.addi %1, %c4_i32_119 : i32
      %c0_120 = arith.constant 0 : index
      %123 = arith.index_cast %122 : i32 to index
      %c4_121 = arith.constant 4 : index
      %c0_122 = arith.constant 0 : index
      %124 = vector.load %arg1[%c0_120, %123, %c4_121, %c0_122] : memref<1x32x32x1xf32, #tpu.memory_space<vmem>>, vector<1x1x28x1xf32>
      %125 = vector.shape_cast %124 : vector<1x1x28x1xf32> to vector<28x1xf32>
      %c0_123 = arith.constant 0 : index
      %c24 = arith.constant 24 : index
      %126 = vector.load %arg5[%c0_123, %c24] : memref<28x25xf32, #tpu.memory_space<vmem>>, vector<28x1xf32>
      tpu.vector_store %arg5[%c0_123, %c24], %125 {strides = array<i32>} : memref<28x25xf32, #tpu.memory_space<vmem>>, vector<28x1xf32>,
      %c0_124 = arith.constant 0 : index
      %c0_125 = arith.constant 0 : index
      %127 = vector.load %arg5[%c0_124, %c0_125] : memref<28x25xf32, #tpu.memory_space<vmem>>, vector<28x25xf32>
      %c0_126 = arith.constant 0 : index
      %c0_127 = arith.constant 0 : index
      %128 = vector.load %arg2[%c0_126, %c0_127] : memref<25x6xf32, #tpu.memory_space<vmem>>, vector<25x6xf32>
      %cst = arith.constant dense<0.000000e+00> : vector<28x6xf32>
      %129 = tpu.matmul %127, %128, %cst {dimension_numbers = #tpu.dot_dimension_numbers<[1], [0], [0], [1], [0, 0, 1, 1], [], []>} : vector<28x25xf32>, vector<25x6xf32>, vector<28x6xf32> -> vector<28x6xf32>
      %c0_128 = arith.constant 0 : index
      %c0_129 = arith.constant 0 : index
      %130 = vector.load %arg3[%c0_128, %c0_129] : memref<1x6xf32, #tpu.memory_space<vmem>>, vector<1x6xf32>
      %131 = vector.broadcast %130 : vector<1x6xf32> to vector<28x6xf32>
      %132 = arith.addf %129, %131 : vector<28x6xf32>
      %cst_130 = arith.constant 0.000000e+00 : f32
      %133 = vector.broadcast %cst_130 : f32 to vector<28x6xf32>
      %134 = arith.maximumf %132, %133 : vector<28x6xf32>
      %c1_i32_131 = arith.constant 1 : i32
      %135 = arith.addi %1, %c1_i32_131 : i32
      %c0_i32_132 = arith.constant 0 : i32
      %136 = arith.addi %135, %c0_i32_132 : i32
      %c0_133 = arith.constant 0 : index
      %137 = arith.index_cast %136 : i32 to index
      %c0_134 = arith.constant 0 : index
      %c0_135 = arith.constant 0 : index
      %138 = vector.load %arg1[%c0_133, %137, %c0_134, %c0_135] : memref<1x32x32x1xf32, #tpu.memory_space<vmem>>, vector<1x1x28x1xf32>
      %139 = vector.shape_cast %138 : vector<1x1x28x1xf32> to vector<28x1xf32>
      %c0_136 = arith.constant 0 : index
      %c0_137 = arith.constant 0 : index
      %140 = vector.load %arg5[%c0_136, %c0_137] : memref<28x25xf32, #tpu.memory_space<vmem>>, vector<28x1xf32>
      tpu.vector_store %arg5[%c0_136, %c0_137], %139 {strides = array<i32>} : memref<28x25xf32, #tpu.memory_space<vmem>>, vector<28x1xf32>,
      %c0_i32_138 = arith.constant 0 : i32
      %141 = arith.addi %135, %c0_i32_138 : i32
      %c0_139 = arith.constant 0 : index
      %142 = arith.index_cast %141 : i32 to index
      %c1_140 = arith.constant 1 : index
      %c0_141 = arith.constant 0 : index
      %143 = vector.load %arg1[%c0_139, %142, %c1_140, %c0_141] : memref<1x32x32x1xf32, #tpu.memory_space<vmem>>, vector<1x1x28x1xf32>
      %144 = vector.shape_cast %143 : vector<1x1x28x1xf32> to vector<28x1xf32>
      %c0_142 = arith.constant 0 : index
      %c1_143 = arith.constant 1 : index
      %145 = vector.load %arg5[%c0_142, %c1_143] : memref<28x25xf32, #tpu.memory_space<vmem>>, vector<28x1xf32>
      tpu.vector_store %arg5[%c0_142, %c1_143], %144 {strides = array<i32>} : memref<28x25xf32, #tpu.memory_space<vmem>>, vector<28x1xf32>,
      %c0_i32_144 = arith.constant 0 : i32
      %146 = arith.addi %135, %c0_i32_144 : i32
      %c0_145 = arith.constant 0 : index
      %147 = arith.index_cast %146 : i32 to index
      %c2_146 = arith.constant 2 : index
      %c0_147 = arith.constant 0 : index
      %148 = vector.load %arg1[%c0_145, %147, %c2_146, %c0_147] : memref<1x32x32x1xf32, #tpu.memory_space<vmem>>, vector<1x1x28x1xf32>
      %149 = vector.shape_cast %148 : vector<1x1x28x1xf32> to vector<28x1xf32>
      %c0_148 = arith.constant 0 : index
      %c2_149 = arith.constant 2 : index
      %150 = vector.load %arg5[%c0_148, %c2_149] : memref<28x25xf32, #tpu.memory_space<vmem>>, vector<28x1xf32>
      tpu.vector_store %arg5[%c0_148, %c2_149], %149 {strides = array<i32>} : memref<28x25xf32, #tpu.memory_space<vmem>>, vector<28x1xf32>,
      %c0_i32_150 = arith.constant 0 : i32
      %151 = arith.addi %135, %c0_i32_150 : i32
      %c0_151 = arith.constant 0 : index
      %152 = arith.index_cast %151 : i32 to index
      %c3_152 = arith.constant 3 : index
      %c0_153 = arith.constant 0 : index
      %153 = vector.load %arg1[%c0_151, %152, %c3_152, %c0_153] : memref<1x32x32x1xf32, #tpu.memory_space<vmem>>, vector<1x1x28x1xf32>
      %154 = vector.shape_cast %153 : vector<1x1x28x1xf32> to vector<28x1xf32>
      %c0_154 = arith.constant 0 : index
      %c3_155 = arith.constant 3 : index
      %155 = vector.load %arg5[%c0_154, %c3_155] : memref<28x25xf32, #tpu.memory_space<vmem>>, vector<28x1xf32>
      tpu.vector_store %arg5[%c0_154, %c3_155], %154 {strides = array<i32>} : memref<28x25xf32, #tpu.memory_space<vmem>>, vector<28x1xf32>,
      %c0_i32_156 = arith.constant 0 : i32
      %156 = arith.addi %135, %c0_i32_156 : i32
      %c0_157 = arith.constant 0 : index
      %157 = arith.index_cast %156 : i32 to index
      %c4_158 = arith.constant 4 : index
      %c0_159 = arith.constant 0 : index
      %158 = vector.load %arg1[%c0_157, %157, %c4_158, %c0_159] : memref<1x32x32x1xf32, #tpu.memory_space<vmem>>, vector<1x1x28x1xf32>
      %159 = vector.shape_cast %158 : vector<1x1x28x1xf32> to vector<28x1xf32>
      %c0_160 = arith.constant 0 : index
      %c4_161 = arith.constant 4 : index
      %160 = vector.load %arg5[%c0_160, %c4_161] : memref<28x25xf32, #tpu.memory_space<vmem>>, vector<28x1xf32>
      tpu.vector_store %arg5[%c0_160, %c4_161], %159 {strides = array<i32>} : memref<28x25xf32, #tpu.memory_space<vmem>>, vector<28x1xf32>,
      %c1_i32_162 = arith.constant 1 : i32
      %161 = arith.addi %135, %c1_i32_162 : i32
      %c0_163 = arith.constant 0 : index
      %162 = arith.index_cast %161 : i32 to index
      %c0_164 = arith.constant 0 : index
      %c0_165 = arith.constant 0 : index
      %163 = vector.load %arg1[%c0_163, %162, %c0_164, %c0_165] : memref<1x32x32x1xf32, #tpu.memory_space<vmem>>, vector<1x1x28x1xf32>
      %164 = vector.shape_cast %163 : vector<1x1x28x1xf32> to vector<28x1xf32>
      %c0_166 = arith.constant 0 : index
      %c5_167 = arith.constant 5 : index
      %165 = vector.load %arg5[%c0_166, %c5_167] : memref<28x25xf32, #tpu.memory_space<vmem>>, vector<28x1xf32>
      tpu.vector_store %arg5[%c0_166, %c5_167], %164 {strides = array<i32>} : memref<28x25xf32, #tpu.memory_space<vmem>>, vector<28x1xf32>,
      %c1_i32_168 = arith.constant 1 : i32
      %166 = arith.addi %135, %c1_i32_168 : i32
      %c0_169 = arith.constant 0 : index
      %167 = arith.index_cast %166 : i32 to index
      %c1_170 = arith.constant 1 : index
      %c0_171 = arith.constant 0 : index
      %168 = vector.load %arg1[%c0_169, %167, %c1_170, %c0_171] : memref<1x32x32x1xf32, #tpu.memory_space<vmem>>, vector<1x1x28x1xf32>
      %169 = vector.shape_cast %168 : vector<1x1x28x1xf32> to vector<28x1xf32>
      %c0_172 = arith.constant 0 : index
      %c6_173 = arith.constant 6 : index
      %170 = vector.load %arg5[%c0_172, %c6_173] : memref<28x25xf32, #tpu.memory_space<vmem>>, vector<28x1xf32>
      tpu.vector_store %arg5[%c0_172, %c6_173], %169 {strides = array<i32>} : memref<28x25xf32, #tpu.memory_space<vmem>>, vector<28x1xf32>,
      %c1_i32_174 = arith.constant 1 : i32
      %171 = arith.addi %135, %c1_i32_174 : i32
      %c0_175 = arith.constant 0 : index
      %172 = arith.index_cast %171 : i32 to index
      %c2_176 = arith.constant 2 : index
      %c0_177 = arith.constant 0 : index
      %173 = vector.load %arg1[%c0_175, %172, %c2_176, %c0_177] : memref<1x32x32x1xf32, #tpu.memory_space<vmem>>, vector<1x1x28x1xf32>
      %174 = vector.shape_cast %173 : vector<1x1x28x1xf32> to vector<28x1xf32>
      %c0_178 = arith.constant 0 : index
      %c7_179 = arith.constant 7 : index
      %175 = vector.load %arg5[%c0_178, %c7_179] : memref<28x25xf32, #tpu.memory_space<vmem>>, vector<28x1xf32>
      tpu.vector_store %arg5[%c0_178, %c7_179], %174 {strides = array<i32>} : memref<28x25xf32, #tpu.memory_space<vmem>>, vector<28x1xf32>,
      %c1_i32_180 = arith.constant 1 : i32
      %176 = arith.addi %135, %c1_i32_180 : i32
      %c0_181 = arith.constant 0 : index
      %177 = arith.index_cast %176 : i32 to index
      %c3_182 = arith.constant 3 : index
      %c0_183 = arith.constant 0 : index
      %178 = vector.load %arg1[%c0_181, %177, %c3_182, %c0_183] : memref<1x32x32x1xf32, #tpu.memory_space<vmem>>, vector<1x1x28x1xf32>
      %179 = vector.shape_cast %178 : vector<1x1x28x1xf32> to vector<28x1xf32>
      %c0_184 = arith.constant 0 : index
      %c8_185 = arith.constant 8 : index
      %180 = vector.load %arg5[%c0_184, %c8_185] : memref<28x25xf32, #tpu.memory_space<vmem>>, vector<28x1xf32>
      tpu.vector_store %arg5[%c0_184, %c8_185], %179 {strides = array<i32>} : memref<28x25xf32, #tpu.memory_space<vmem>>, vector<28x1xf32>,
      %c1_i32_186 = arith.constant 1 : i32
      %181 = arith.addi %135, %c1_i32_186 : i32
      %c0_187 = arith.constant 0 : index
      %182 = arith.index_cast %181 : i32 to index
      %c4_188 = arith.constant 4 : index
      %c0_189 = arith.constant 0 : index
      %183 = vector.load %arg1[%c0_187, %182, %c4_188, %c0_189] : memref<1x32x32x1xf32, #tpu.memory_space<vmem>>, vector<1x1x28x1xf32>
      %184 = vector.shape_cast %183 : vector<1x1x28x1xf32> to vector<28x1xf32>
      %c0_190 = arith.constant 0 : index
      %c9_191 = arith.constant 9 : index
      %185 = vector.load %arg5[%c0_190, %c9_191] : memref<28x25xf32, #tpu.memory_space<vmem>>, vector<28x1xf32>
      tpu.vector_store %arg5[%c0_190, %c9_191], %184 {strides = array<i32>} : memref<28x25xf32, #tpu.memory_space<vmem>>, vector<28x1xf32>,
      %c2_i32_192 = arith.constant 2 : i32
      %186 = arith.addi %135, %c2_i32_192 : i32
      %c0_193 = arith.constant 0 : index
      %187 = arith.index_cast %186 : i32 to index
      %c0_194 = arith.constant 0 : index
      %c0_195 = arith.constant 0 : index
      %188 = vector.load %arg1[%c0_193, %187, %c0_194, %c0_195] : memref<1x32x32x1xf32, #tpu.memory_space<vmem>>, vector<1x1x28x1xf32>
      %189 = vector.shape_cast %188 : vector<1x1x28x1xf32> to vector<28x1xf32>
      %c0_196 = arith.constant 0 : index
      %c10_197 = arith.constant 10 : index
      %190 = vector.load %arg5[%c0_196, %c10_197] : memref<28x25xf32, #tpu.memory_space<vmem>>, vector<28x1xf32>
      tpu.vector_store %arg5[%c0_196, %c10_197], %189 {strides = array<i32>} : memref<28x25xf32, #tpu.memory_space<vmem>>, vector<28x1xf32>,
      %c2_i32_198 = arith.constant 2 : i32
      %191 = arith.addi %135, %c2_i32_198 : i32
      %c0_199 = arith.constant 0 : index
      %192 = arith.index_cast %191 : i32 to index
      %c1_200 = arith.constant 1 : index
      %c0_201 = arith.constant 0 : index
      %193 = vector.load %arg1[%c0_199, %192, %c1_200, %c0_201] : memref<1x32x32x1xf32, #tpu.memory_space<vmem>>, vector<1x1x28x1xf32>
      %194 = vector.shape_cast %193 : vector<1x1x28x1xf32> to vector<28x1xf32>
      %c0_202 = arith.constant 0 : index
      %c11_203 = arith.constant 11 : index
      %195 = vector.load %arg5[%c0_202, %c11_203] : memref<28x25xf32, #tpu.memory_space<vmem>>, vector<28x1xf32>
      tpu.vector_store %arg5[%c0_202, %c11_203], %194 {strides = array<i32>} : memref<28x25xf32, #tpu.memory_space<vmem>>, vector<28x1xf32>,
      %c2_i32_204 = arith.constant 2 : i32
      %196 = arith.addi %135, %c2_i32_204 : i32
      %c0_205 = arith.constant 0 : index
      %197 = arith.index_cast %196 : i32 to index
      %c2_206 = arith.constant 2 : index
      %c0_207 = arith.constant 0 : index
      %198 = vector.load %arg1[%c0_205, %197, %c2_206, %c0_207] : memref<1x32x32x1xf32, #tpu.memory_space<vmem>>, vector<1x1x28x1xf32>
      %199 = vector.shape_cast %198 : vector<1x1x28x1xf32> to vector<28x1xf32>
      %c0_208 = arith.constant 0 : index
      %c12_209 = arith.constant 12 : index
      %200 = vector.load %arg5[%c0_208, %c12_209] : memref<28x25xf32, #tpu.memory_space<vmem>>, vector<28x1xf32>
      tpu.vector_store %arg5[%c0_208, %c12_209], %199 {strides = array<i32>} : memref<28x25xf32, #tpu.memory_space<vmem>>, vector<28x1xf32>,
      %c2_i32_210 = arith.constant 2 : i32
      %201 = arith.addi %135, %c2_i32_210 : i32
      %c0_211 = arith.constant 0 : index
      %202 = arith.index_cast %201 : i32 to index
      %c3_212 = arith.constant 3 : index
      %c0_213 = arith.constant 0 : index
      %203 = vector.load %arg1[%c0_211, %202, %c3_212, %c0_213] : memref<1x32x32x1xf32, #tpu.memory_space<vmem>>, vector<1x1x28x1xf32>
      %204 = vector.shape_cast %203 : vector<1x1x28x1xf32> to vector<28x1xf32>
      %c0_214 = arith.constant 0 : index
      %c13_215 = arith.constant 13 : index
      %205 = vector.load %arg5[%c0_214, %c13_215] : memref<28x25xf32, #tpu.memory_space<vmem>>, vector<28x1xf32>
      tpu.vector_store %arg5[%c0_214, %c13_215], %204 {strides = array<i32>} : memref<28x25xf32, #tpu.memory_space<vmem>>, vector<28x1xf32>,
      %c2_i32_216 = arith.constant 2 : i32
      %206 = arith.addi %135, %c2_i32_216 : i32
      %c0_217 = arith.constant 0 : index
      %207 = arith.index_cast %206 : i32 to index
      %c4_218 = arith.constant 4 : index
      %c0_219 = arith.constant 0 : index
      %208 = vector.load %arg1[%c0_217, %207, %c4_218, %c0_219] : memref<1x32x32x1xf32, #tpu.memory_space<vmem>>, vector<1x1x28x1xf32>
      %209 = vector.shape_cast %208 : vector<1x1x28x1xf32> to vector<28x1xf32>
      %c0_220 = arith.constant 0 : index
      %c14_221 = arith.constant 14 : index
      %210 = vector.load %arg5[%c0_220, %c14_221] : memref<28x25xf32, #tpu.memory_space<vmem>>, vector<28x1xf32>
      tpu.vector_store %arg5[%c0_220, %c14_221], %209 {strides = array<i32>} : memref<28x25xf32, #tpu.memory_space<vmem>>, vector<28x1xf32>,
      %c3_i32_222 = arith.constant 3 : i32
      %211 = arith.addi %135, %c3_i32_222 : i32
      %c0_223 = arith.constant 0 : index
      %212 = arith.index_cast %211 : i32 to index
      %c0_224 = arith.constant 0 : index
      %c0_225 = arith.constant 0 : index
      %213 = vector.load %arg1[%c0_223, %212, %c0_224, %c0_225] : memref<1x32x32x1xf32, #tpu.memory_space<vmem>>, vector<1x1x28x1xf32>
      %214 = vector.shape_cast %213 : vector<1x1x28x1xf32> to vector<28x1xf32>
      %c0_226 = arith.constant 0 : index
      %c15_227 = arith.constant 15 : index
      %215 = vector.load %arg5[%c0_226, %c15_227] : memref<28x25xf32, #tpu.memory_space<vmem>>, vector<28x1xf32>
      tpu.vector_store %arg5[%c0_226, %c15_227], %214 {strides = array<i32>} : memref<28x25xf32, #tpu.memory_space<vmem>>, vector<28x1xf32>,
      %c3_i32_228 = arith.constant 3 : i32
      %216 = arith.addi %135, %c3_i32_228 : i32
      %c0_229 = arith.constant 0 : index
      %217 = arith.index_cast %216 : i32 to index
      %c1_230 = arith.constant 1 : index
      %c0_231 = arith.constant 0 : index
      %218 = vector.load %arg1[%c0_229, %217, %c1_230, %c0_231] : memref<1x32x32x1xf32, #tpu.memory_space<vmem>>, vector<1x1x28x1xf32>
      %219 = vector.shape_cast %218 : vector<1x1x28x1xf32> to vector<28x1xf32>
      %c0_232 = arith.constant 0 : index
      %c16_233 = arith.constant 16 : index
      %220 = vector.load %arg5[%c0_232, %c16_233] : memref<28x25xf32, #tpu.memory_space<vmem>>, vector<28x1xf32>
      tpu.vector_store %arg5[%c0_232, %c16_233], %219 {strides = array<i32>} : memref<28x25xf32, #tpu.memory_space<vmem>>, vector<28x1xf32>,
      %c3_i32_234 = arith.constant 3 : i32
      %221 = arith.addi %135, %c3_i32_234 : i32
      %c0_235 = arith.constant 0 : index
      %222 = arith.index_cast %221 : i32 to index
      %c2_236 = arith.constant 2 : index
      %c0_237 = arith.constant 0 : index
      %223 = vector.load %arg1[%c0_235, %222, %c2_236, %c0_237] : memref<1x32x32x1xf32, #tpu.memory_space<vmem>>, vector<1x1x28x1xf32>
      %224 = vector.shape_cast %223 : vector<1x1x28x1xf32> to vector<28x1xf32>
      %c0_238 = arith.constant 0 : index
      %c17_239 = arith.constant 17 : index
      %225 = vector.load %arg5[%c0_238, %c17_239] : memref<28x25xf32, #tpu.memory_space<vmem>>, vector<28x1xf32>
      tpu.vector_store %arg5[%c0_238, %c17_239], %224 {strides = array<i32>} : memref<28x25xf32, #tpu.memory_space<vmem>>, vector<28x1xf32>,
      %c3_i32_240 = arith.constant 3 : i32
      %226 = arith.addi %135, %c3_i32_240 : i32
      %c0_241 = arith.constant 0 : index
      %227 = arith.index_cast %226 : i32 to index
      %c3_242 = arith.constant 3 : index
      %c0_243 = arith.constant 0 : index
      %228 = vector.load %arg1[%c0_241, %227, %c3_242, %c0_243] : memref<1x32x32x1xf32, #tpu.memory_space<vmem>>, vector<1x1x28x1xf32>
      %229 = vector.shape_cast %228 : vector<1x1x28x1xf32> to vector<28x1xf32>
      %c0_244 = arith.constant 0 : index
      %c18_245 = arith.constant 18 : index
      %230 = vector.load %arg5[%c0_244, %c18_245] : memref<28x25xf32, #tpu.memory_space<vmem>>, vector<28x1xf32>
      tpu.vector_store %arg5[%c0_244, %c18_245], %229 {strides = array<i32>} : memref<28x25xf32, #tpu.memory_space<vmem>>, vector<28x1xf32>,
      %c3_i32_246 = arith.constant 3 : i32
      %231 = arith.addi %135, %c3_i32_246 : i32
      %c0_247 = arith.constant 0 : index
      %232 = arith.index_cast %231 : i32 to index
      %c4_248 = arith.constant 4 : index
      %c0_249 = arith.constant 0 : index
      %233 = vector.load %arg1[%c0_247, %232, %c4_248, %c0_249] : memref<1x32x32x1xf32, #tpu.memory_space<vmem>>, vector<1x1x28x1xf32>
      %234 = vector.shape_cast %233 : vector<1x1x28x1xf32> to vector<28x1xf32>
      %c0_250 = arith.constant 0 : index
      %c19_251 = arith.constant 19 : index
      %235 = vector.load %arg5[%c0_250, %c19_251] : memref<28x25xf32, #tpu.memory_space<vmem>>, vector<28x1xf32>
      tpu.vector_store %arg5[%c0_250, %c19_251], %234 {strides = array<i32>} : memref<28x25xf32, #tpu.memory_space<vmem>>, vector<28x1xf32>,
      %c4_i32_252 = arith.constant 4 : i32
      %236 = arith.addi %135, %c4_i32_252 : i32
      %c0_253 = arith.constant 0 : index
      %237 = arith.index_cast %236 : i32 to index
      %c0_254 = arith.constant 0 : index
      %c0_255 = arith.constant 0 : index
      %238 = vector.load %arg1[%c0_253, %237, %c0_254, %c0_255] : memref<1x32x32x1xf32, #tpu.memory_space<vmem>>, vector<1x1x28x1xf32>
      %239 = vector.shape_cast %238 : vector<1x1x28x1xf32> to vector<28x1xf32>
      %c0_256 = arith.constant 0 : index
      %c20_257 = arith.constant 20 : index
      %240 = vector.load %arg5[%c0_256, %c20_257] : memref<28x25xf32, #tpu.memory_space<vmem>>, vector<28x1xf32>
      tpu.vector_store %arg5[%c0_256, %c20_257], %239 {strides = array<i32>} : memref<28x25xf32, #tpu.memory_space<vmem>>, vector<28x1xf32>,
      %c4_i32_258 = arith.constant 4 : i32
      %241 = arith.addi %135, %c4_i32_258 : i32
      %c0_259 = arith.constant 0 : index
      %242 = arith.index_cast %241 : i32 to index
      %c1_260 = arith.constant 1 : index
      %c0_261 = arith.constant 0 : index
      %243 = vector.load %arg1[%c0_259, %242, %c1_260, %c0_261] : memref<1x32x32x1xf32, #tpu.memory_space<vmem>>, vector<1x1x28x1xf32>
      %244 = vector.shape_cast %243 : vector<1x1x28x1xf32> to vector<28x1xf32>
      %c0_262 = arith.constant 0 : index
      %c21_263 = arith.constant 21 : index
      %245 = vector.load %arg5[%c0_262, %c21_263] : memref<28x25xf32, #tpu.memory_space<vmem>>, vector<28x1xf32>
      tpu.vector_store %arg5[%c0_262, %c21_263], %244 {strides = array<i32>} : memref<28x25xf32, #tpu.memory_space<vmem>>, vector<28x1xf32>,
      %c4_i32_264 = arith.constant 4 : i32
      %246 = arith.addi %135, %c4_i32_264 : i32
      %c0_265 = arith.constant 0 : index
      %247 = arith.index_cast %246 : i32 to index
      %c2_266 = arith.constant 2 : index
      %c0_267 = arith.constant 0 : index
      %248 = vector.load %arg1[%c0_265, %247, %c2_266, %c0_267] : memref<1x32x32x1xf32, #tpu.memory_space<vmem>>, vector<1x1x28x1xf32>
      %249 = vector.shape_cast %248 : vector<1x1x28x1xf32> to vector<28x1xf32>
      %c0_268 = arith.constant 0 : index
      %c22_269 = arith.constant 22 : index
      %250 = vector.load %arg5[%c0_268, %c22_269] : memref<28x25xf32, #tpu.memory_space<vmem>>, vector<28x1xf32>
      tpu.vector_store %arg5[%c0_268, %c22_269], %249 {strides = array<i32>} : memref<28x25xf32, #tpu.memory_space<vmem>>, vector<28x1xf32>,
      %c4_i32_270 = arith.constant 4 : i32
      %251 = arith.addi %135, %c4_i32_270 : i32
      %c0_271 = arith.constant 0 : index
      %252 = arith.index_cast %251 : i32 to index
      %c3_272 = arith.constant 3 : index
      %c0_273 = arith.constant 0 : index
      %253 = vector.load %arg1[%c0_271, %252, %c3_272, %c0_273] : memref<1x32x32x1xf32, #tpu.memory_space<vmem>>, vector<1x1x28x1xf32>
      %254 = vector.shape_cast %253 : vector<1x1x28x1xf32> to vector<28x1xf32>
      %c0_274 = arith.constant 0 : index
      %c23_275 = arith.constant 23 : index
      %255 = vector.load %arg5[%c0_274, %c23_275] : memref<28x25xf32, #tpu.memory_space<vmem>>, vector<28x1xf32>
      tpu.vector_store %arg5[%c0_274, %c23_275], %254 {strides = array<i32>} : memref<28x25xf32, #tpu.memory_space<vmem>>, vector<28x1xf32>,
      %c4_i32_276 = arith.constant 4 : i32
      %256 = arith.addi %135, %c4_i32_276 : i32
      %c0_277 = arith.constant 0 : index
      %257 = arith.index_cast %256 : i32 to index
      %c4_278 = arith.constant 4 : index
      %c0_279 = arith.constant 0 : index
      %258 = vector.load %arg1[%c0_277, %257, %c4_278, %c0_279] : memref<1x32x32x1xf32, #tpu.memory_space<vmem>>, vector<1x1x28x1xf32>
      %259 = vector.shape_cast %258 : vector<1x1x28x1xf32> to vector<28x1xf32>
      %c0_280 = arith.constant 0 : index
      %c24_281 = arith.constant 24 : index
      %260 = vector.load %arg5[%c0_280, %c24_281] : memref<28x25xf32, #tpu.memory_space<vmem>>, vector<28x1xf32>
      tpu.vector_store %arg5[%c0_280, %c24_281], %259 {strides = array<i32>} : memref<28x25xf32, #tpu.memory_space<vmem>>, vector<28x1xf32>,
      %c0_282 = arith.constant 0 : index
      %c0_283 = arith.constant 0 : index
      %261 = vector.load %arg5[%c0_282, %c0_283] : memref<28x25xf32, #tpu.memory_space<vmem>>, vector<28x25xf32>
      %c0_284 = arith.constant 0 : index
      %c0_285 = arith.constant 0 : index
      %262 = vector.load %arg2[%c0_284, %c0_285] : memref<25x6xf32, #tpu.memory_space<vmem>>, vector<25x6xf32>
      %cst_286 = arith.constant dense<0.000000e+00> : vector<28x6xf32>
      %263 = tpu.matmul %261, %262, %cst_286 {dimension_numbers = #tpu.dot_dimension_numbers<[1], [0], [0], [1], [0, 0, 1, 1], [], []>} : vector<28x25xf32>, vector<25x6xf32>, vector<28x6xf32> -> vector<28x6xf32>
      %c0_287 = arith.constant 0 : index
      %c0_288 = arith.constant 0 : index
      %264 = vector.load %arg3[%c0_287, %c0_288] : memref<1x6xf32, #tpu.memory_space<vmem>>, vector<1x6xf32>
      %265 = vector.broadcast %264 : vector<1x6xf32> to vector<28x6xf32>
      %266 = arith.addf %263, %265 : vector<28x6xf32>
      %cst_289 = arith.constant 0.000000e+00 : f32
      %267 = vector.broadcast %cst_289 : f32 to vector<28x6xf32>
      %268 = arith.maximumf %266, %267 : vector<28x6xf32>
      %269 = arith.maximumf %134, %268 : vector<28x6xf32>
      %c0_290 = arith.constant 0 : index
      %c0_291 = arith.constant 0 : index
      %270 = vector.load %arg6[%c0_290, %c0_291] : memref<28x6xf32, #tpu.memory_space<vmem>>, vector<28x6xf32>
      tpu.vector_store %arg6[%c0_290, %c0_291], %269 {strides = array<i32>} : memref<28x6xf32, #tpu.memory_space<vmem>>, vector<28x6xf32>,
      %c0_292 = arith.constant 0 : index
      %c0_293 = arith.constant 0 : index
      %271 = tpu.strided_load %arg6[%c0_292, %c0_293] {strides = array<i32: 2, 1>} : memref<28x6xf32, #tpu.memory_space<vmem>>, vector<14x6xf32>
      %c1_294 = arith.constant 1 : index
      %c0_295 = arith.constant 0 : index
      %272 = tpu.strided_load %arg6[%c1_294, %c0_295] {strides = array<i32: 2, 1>} : memref<28x6xf32, #tpu.memory_space<vmem>>, vector<14x6xf32>
      %273 = arith.maximumf %271, %272 : vector<14x6xf32>
      %c0_296 = arith.constant 0 : index
      %274 = arith.index_cast %arg7 : i32 to index
      %c0_297 = arith.constant 0 : index
      %c0_298 = arith.constant 0 : index
      %275 = vector.load %arg4[%c0_296, %274, %c0_297, %c0_298] : memref<1x14x14x6xf32, #tpu.memory_space<vmem>>, vector<1x1x14x6xf32>
      %276 = vector.shape_cast %275 : vector<1x1x14x6xf32> to vector<14x6xf32>
      %277 = vector.shape_cast %273 : vector<14x6xf32> to vector<1x1x14x6xf32>
      tpu.vector_store %arg4[%c0_296, %274, %c0_297, %c0_298], %277 {strides = array<i32>} : memref<1x14x14x6xf32, #tpu.memory_space<vmem>>, vector<1x1x14x6xf32>,
    }
    %c14_i32_0 = arith.constant 14 : i32
    return
  }
  func.func @transform_0(%arg0: i32) -> (i32, i32, i32, i32) {
    %c0_i32 = arith.constant 0 : i32
    %c0_i32_0 = arith.constant 0 : i32
    %c0_i32_1 = arith.constant 0 : i32
    %c0_i32_2 = arith.constant 0 : i32
    return %arg0, %c0_i32, %c0_i32_0, %c0_i32_1 : i32, i32, i32, i32
  }
  func.func @transform_1(%arg0: i32) -> (i32, i32) {
    %c0_i32 = arith.constant 0 : i32
    %c0_i32_0 = arith.constant 0 : i32
    %c0_i32_1 = arith.constant 0 : i32
    return %c0_i32, %c0_i32_0 : i32, i32
  }
  func.func @transform_2(%arg0: i32) -> (i32, i32) {
    %c0_i32 = arith.constant 0 : i32
    %c0_i32_0 = arith.constant 0 : i32
    %c0_i32_1 = arith.constant 0 : i32
    return %c0_i32, %c0_i32_0 : i32, i32
  }
  func.func @transform_3(%arg0: i32) -> (i32, i32, i32, i32) {
    %c0_i32 = arith.constant 0 : i32
    %c0_i32_0 = arith.constant 0 : i32
    %c0_i32_1 = arith.constant 0 : i32
    %c0_i32_2 = arith.constant 0 : i32
    return %arg0, %c0_i32, %c0_i32_0, %c0_i32_1 : i32, i32, i32, i32
  }
}

module attributes {stable_mosaic.version = 11 : i64} {
  func.func @_conv_pool_kernel(%arg0: i32, %arg1: memref<1x14x14x6xf32, #tpu.memory_space<vmem>>, %arg2: memref<150x16xf32, #tpu.memory_space<vmem>>, %arg3: memref<1x16xf32, #tpu.memory_space<vmem>>, %arg4: memref<1x5x5x16xf32, #tpu.memory_space<vmem>>, %arg5: memref<10x150xf32, #tpu.memory_space<vmem>>, %arg6: memref<10x16xf32, #tpu.memory_space<vmem>>) attributes {dimension_semantics = [#tpu.dimension_semantics<parallel>], iteration_bounds = array<i64: 2>, scalar_prefetch = 0 : i64, scratch_operands = 2 : i64, tpu.core_type = #tpu.core_type<tc>, window_params = [{transform_indices = @transform_0, window_bounds = array<i64: 1, 14, 14, 6>}, {pipeline_mode = #tpu.pipeline_mode<synchronous>, transform_indices = @transform_1, window_bounds = array<i64: 150, 16>}, {pipeline_mode = #tpu.pipeline_mode<synchronous>, transform_indices = @transform_2, window_bounds = array<i64: 1, 16>}, {transform_indices = @transform_3, window_bounds = array<i64: 1, 5, 5, 16>}]} {
    %c0_i32 = arith.constant 0 : i32
    %c5_i32 = arith.constant 5 : i32
    %0 = arith.addi %c0_i32, %c5_i32 : i32
    %c1_i32 = arith.constant 1 : i32
    scf.for %arg7 = %c0_i32 to %0 step %c1_i32  : i32 {
      %c2_i32 = arith.constant 2 : i32
      %1 = arith.muli %c2_i32, %arg7 : i32
      %c0_i32_1 = arith.constant 0 : i32
      %2 = arith.addi %1, %c0_i32_1 : i32
      %c0 = arith.constant 0 : index
      %3 = arith.index_cast %2 : i32 to index
      %c0_2 = arith.constant 0 : index
      %c0_3 = arith.constant 0 : index
      %4 = vector.load %arg1[%c0, %3, %c0_2, %c0_3] : memref<1x14x14x6xf32, #tpu.memory_space<vmem>>, vector<1x1x10x6xf32>
      %5 = vector.shape_cast %4 : vector<1x1x10x6xf32> to vector<10x6xf32>
      %c0_4 = arith.constant 0 : index
      %c0_5 = arith.constant 0 : index
      %6 = vector.load %arg5[%c0_4, %c0_5] : memref<10x150xf32, #tpu.memory_space<vmem>>, vector<10x6xf32>
      tpu.vector_store %arg5[%c0_4, %c0_5], %5 {strides = array<i32>} : memref<10x150xf32, #tpu.memory_space<vmem>>, vector<10x6xf32>,
      %c0_i32_6 = arith.constant 0 : i32
      %7 = arith.addi %1, %c0_i32_6 : i32
      %c0_7 = arith.constant 0 : index
      %8 = arith.index_cast %7 : i32 to index
      %c1 = arith.constant 1 : index
      %c0_8 = arith.constant 0 : index
      %9 = vector.load %arg1[%c0_7, %8, %c1, %c0_8] : memref<1x14x14x6xf32, #tpu.memory_space<vmem>>, vector<1x1x10x6xf32>
      %10 = vector.shape_cast %9 : vector<1x1x10x6xf32> to vector<10x6xf32>
      %c0_9 = arith.constant 0 : index
      %c6 = arith.constant 6 : index
      %11 = vector.load %arg5[%c0_9, %c6] : memref<10x150xf32, #tpu.memory_space<vmem>>, vector<10x6xf32>
      tpu.vector_store %arg5[%c0_9, %c6], %10 {strides = array<i32>} : memref<10x150xf32, #tpu.memory_space<vmem>>, vector<10x6xf32>,
      %c0_i32_10 = arith.constant 0 : i32
      %12 = arith.addi %1, %c0_i32_10 : i32
      %c0_11 = arith.constant 0 : index
      %13 = arith.index_cast %12 : i32 to index
      %c2 = arith.constant 2 : index
      %c0_12 = arith.constant 0 : index
      %14 = vector.load %arg1[%c0_11, %13, %c2, %c0_12] : memref<1x14x14x6xf32, #tpu.memory_space<vmem>>, vector<1x1x10x6xf32>
      %15 = vector.shape_cast %14 : vector<1x1x10x6xf32> to vector<10x6xf32>
      %c0_13 = arith.constant 0 : index
      %c12 = arith.constant 12 : index
      %16 = vector.load %arg5[%c0_13, %c12] : memref<10x150xf32, #tpu.memory_space<vmem>>, vector<10x6xf32>
      tpu.vector_store %arg5[%c0_13, %c12], %15 {strides = array<i32>} : memref<10x150xf32, #tpu.memory_space<vmem>>, vector<10x6xf32>,
      %c0_i32_14 = arith.constant 0 : i32
      %17 = arith.addi %1, %c0_i32_14 : i32
      %c0_15 = arith.constant 0 : index
      %18 = arith.index_cast %17 : i32 to index
      %c3 = arith.constant 3 : index
      %c0_16 = arith.constant 0 : index
      %19 = vector.load %arg1[%c0_15, %18, %c3, %c0_16] : memref<1x14x14x6xf32, #tpu.memory_space<vmem>>, vector<1x1x10x6xf32>
      %20 = vector.shape_cast %19 : vector<1x1x10x6xf32> to vector<10x6xf32>
      %c0_17 = arith.constant 0 : index
      %c18 = arith.constant 18 : index
      %21 = vector.load %arg5[%c0_17, %c18] : memref<10x150xf32, #tpu.memory_space<vmem>>, vector<10x6xf32>
      tpu.vector_store %arg5[%c0_17, %c18], %20 {strides = array<i32>} : memref<10x150xf32, #tpu.memory_space<vmem>>, vector<10x6xf32>,
      %c0_i32_18 = arith.constant 0 : i32
      %22 = arith.addi %1, %c0_i32_18 : i32
      %c0_19 = arith.constant 0 : index
      %23 = arith.index_cast %22 : i32 to index
      %c4 = arith.constant 4 : index
      %c0_20 = arith.constant 0 : index
      %24 = vector.load %arg1[%c0_19, %23, %c4, %c0_20] : memref<1x14x14x6xf32, #tpu.memory_space<vmem>>, vector<1x1x10x6xf32>
      %25 = vector.shape_cast %24 : vector<1x1x10x6xf32> to vector<10x6xf32>
      %c0_21 = arith.constant 0 : index
      %c24 = arith.constant 24 : index
      %26 = vector.load %arg5[%c0_21, %c24] : memref<10x150xf32, #tpu.memory_space<vmem>>, vector<10x6xf32>
      tpu.vector_store %arg5[%c0_21, %c24], %25 {strides = array<i32>} : memref<10x150xf32, #tpu.memory_space<vmem>>, vector<10x6xf32>,
      %c1_i32_22 = arith.constant 1 : i32
      %27 = arith.addi %1, %c1_i32_22 : i32
      %c0_23 = arith.constant 0 : index
      %28 = arith.index_cast %27 : i32 to index
      %c0_24 = arith.constant 0 : index
      %c0_25 = arith.constant 0 : index
      %29 = vector.load %arg1[%c0_23, %28, %c0_24, %c0_25] : memref<1x14x14x6xf32, #tpu.memory_space<vmem>>, vector<1x1x10x6xf32>
      %30 = vector.shape_cast %29 : vector<1x1x10x6xf32> to vector<10x6xf32>
      %c0_26 = arith.constant 0 : index
      %c30 = arith.constant 30 : index
      %31 = vector.load %arg5[%c0_26, %c30] : memref<10x150xf32, #tpu.memory_space<vmem>>, vector<10x6xf32>
      tpu.vector_store %arg5[%c0_26, %c30], %30 {strides = array<i32>} : memref<10x150xf32, #tpu.memory_space<vmem>>, vector<10x6xf32>,
      %c1_i32_27 = arith.constant 1 : i32
      %32 = arith.addi %1, %c1_i32_27 : i32
      %c0_28 = arith.constant 0 : index
      %33 = arith.index_cast %32 : i32 to index
      %c1_29 = arith.constant 1 : index
      %c0_30 = arith.constant 0 : index
      %34 = vector.load %arg1[%c0_28, %33, %c1_29, %c0_30] : memref<1x14x14x6xf32, #tpu.memory_space<vmem>>, vector<1x1x10x6xf32>
      %35 = vector.shape_cast %34 : vector<1x1x10x6xf32> to vector<10x6xf32>
      %c0_31 = arith.constant 0 : index
      %c36 = arith.constant 36 : index
      %36 = vector.load %arg5[%c0_31, %c36] : memref<10x150xf32, #tpu.memory_space<vmem>>, vector<10x6xf32>
      tpu.vector_store %arg5[%c0_31, %c36], %35 {strides = array<i32>} : memref<10x150xf32, #tpu.memory_space<vmem>>, vector<10x6xf32>,
      %c1_i32_32 = arith.constant 1 : i32
      %37 = arith.addi %1, %c1_i32_32 : i32
      %c0_33 = arith.constant 0 : index
      %38 = arith.index_cast %37 : i32 to index
      %c2_34 = arith.constant 2 : index
      %c0_35 = arith.constant 0 : index
      %39 = vector.load %arg1[%c0_33, %38, %c2_34, %c0_35] : memref<1x14x14x6xf32, #tpu.memory_space<vmem>>, vector<1x1x10x6xf32>
      %40 = vector.shape_cast %39 : vector<1x1x10x6xf32> to vector<10x6xf32>
      %c0_36 = arith.constant 0 : index
      %c42 = arith.constant 42 : index
      %41 = vector.load %arg5[%c0_36, %c42] : memref<10x150xf32, #tpu.memory_space<vmem>>, vector<10x6xf32>
      tpu.vector_store %arg5[%c0_36, %c42], %40 {strides = array<i32>} : memref<10x150xf32, #tpu.memory_space<vmem>>, vector<10x6xf32>,
      %c1_i32_37 = arith.constant 1 : i32
      %42 = arith.addi %1, %c1_i32_37 : i32
      %c0_38 = arith.constant 0 : index
      %43 = arith.index_cast %42 : i32 to index
      %c3_39 = arith.constant 3 : index
      %c0_40 = arith.constant 0 : index
      %44 = vector.load %arg1[%c0_38, %43, %c3_39, %c0_40] : memref<1x14x14x6xf32, #tpu.memory_space<vmem>>, vector<1x1x10x6xf32>
      %45 = vector.shape_cast %44 : vector<1x1x10x6xf32> to vector<10x6xf32>
      %c0_41 = arith.constant 0 : index
      %c48 = arith.constant 48 : index
      %46 = vector.load %arg5[%c0_41, %c48] : memref<10x150xf32, #tpu.memory_space<vmem>>, vector<10x6xf32>
      tpu.vector_store %arg5[%c0_41, %c48], %45 {strides = array<i32>} : memref<10x150xf32, #tpu.memory_space<vmem>>, vector<10x6xf32>,
      %c1_i32_42 = arith.constant 1 : i32
      %47 = arith.addi %1, %c1_i32_42 : i32
      %c0_43 = arith.constant 0 : index
      %48 = arith.index_cast %47 : i32 to index
      %c4_44 = arith.constant 4 : index
      %c0_45 = arith.constant 0 : index
      %49 = vector.load %arg1[%c0_43, %48, %c4_44, %c0_45] : memref<1x14x14x6xf32, #tpu.memory_space<vmem>>, vector<1x1x10x6xf32>
      %50 = vector.shape_cast %49 : vector<1x1x10x6xf32> to vector<10x6xf32>
      %c0_46 = arith.constant 0 : index
      %c54 = arith.constant 54 : index
      %51 = vector.load %arg5[%c0_46, %c54] : memref<10x150xf32, #tpu.memory_space<vmem>>, vector<10x6xf32>
      tpu.vector_store %arg5[%c0_46, %c54], %50 {strides = array<i32>} : memref<10x150xf32, #tpu.memory_space<vmem>>, vector<10x6xf32>,
      %c2_i32_47 = arith.constant 2 : i32
      %52 = arith.addi %1, %c2_i32_47 : i32
      %c0_48 = arith.constant 0 : index
      %53 = arith.index_cast %52 : i32 to index
      %c0_49 = arith.constant 0 : index
      %c0_50 = arith.constant 0 : index
      %54 = vector.load %arg1[%c0_48, %53, %c0_49, %c0_50] : memref<1x14x14x6xf32, #tpu.memory_space<vmem>>, vector<1x1x10x6xf32>
      %55 = vector.shape_cast %54 : vector<1x1x10x6xf32> to vector<10x6xf32>
      %c0_51 = arith.constant 0 : index
      %c60 = arith.constant 60 : index
      %56 = vector.load %arg5[%c0_51, %c60] : memref<10x150xf32, #tpu.memory_space<vmem>>, vector<10x6xf32>
      tpu.vector_store %arg5[%c0_51, %c60], %55 {strides = array<i32>} : memref<10x150xf32, #tpu.memory_space<vmem>>, vector<10x6xf32>,
      %c2_i32_52 = arith.constant 2 : i32
      %57 = arith.addi %1, %c2_i32_52 : i32
      %c0_53 = arith.constant 0 : index
      %58 = arith.index_cast %57 : i32 to index
      %c1_54 = arith.constant 1 : index
      %c0_55 = arith.constant 0 : index
      %59 = vector.load %arg1[%c0_53, %58, %c1_54, %c0_55] : memref<1x14x14x6xf32, #tpu.memory_space<vmem>>, vector<1x1x10x6xf32>
      %60 = vector.shape_cast %59 : vector<1x1x10x6xf32> to vector<10x6xf32>
      %c0_56 = arith.constant 0 : index
      %c66 = arith.constant 66 : index
      %61 = vector.load %arg5[%c0_56, %c66] : memref<10x150xf32, #tpu.memory_space<vmem>>, vector<10x6xf32>
      tpu.vector_store %arg5[%c0_56, %c66], %60 {strides = array<i32>} : memref<10x150xf32, #tpu.memory_space<vmem>>, vector<10x6xf32>,
      %c2_i32_57 = arith.constant 2 : i32
      %62 = arith.addi %1, %c2_i32_57 : i32
      %c0_58 = arith.constant 0 : index
      %63 = arith.index_cast %62 : i32 to index
      %c2_59 = arith.constant 2 : index
      %c0_60 = arith.constant 0 : index
      %64 = vector.load %arg1[%c0_58, %63, %c2_59, %c0_60] : memref<1x14x14x6xf32, #tpu.memory_space<vmem>>, vector<1x1x10x6xf32>
      %65 = vector.shape_cast %64 : vector<1x1x10x6xf32> to vector<10x6xf32>
      %c0_61 = arith.constant 0 : index
      %c72 = arith.constant 72 : index
      %66 = vector.load %arg5[%c0_61, %c72] : memref<10x150xf32, #tpu.memory_space<vmem>>, vector<10x6xf32>
      tpu.vector_store %arg5[%c0_61, %c72], %65 {strides = array<i32>} : memref<10x150xf32, #tpu.memory_space<vmem>>, vector<10x6xf32>,
      %c2_i32_62 = arith.constant 2 : i32
      %67 = arith.addi %1, %c2_i32_62 : i32
      %c0_63 = arith.constant 0 : index
      %68 = arith.index_cast %67 : i32 to index
      %c3_64 = arith.constant 3 : index
      %c0_65 = arith.constant 0 : index
      %69 = vector.load %arg1[%c0_63, %68, %c3_64, %c0_65] : memref<1x14x14x6xf32, #tpu.memory_space<vmem>>, vector<1x1x10x6xf32>
      %70 = vector.shape_cast %69 : vector<1x1x10x6xf32> to vector<10x6xf32>
      %c0_66 = arith.constant 0 : index
      %c78 = arith.constant 78 : index
      %71 = vector.load %arg5[%c0_66, %c78] : memref<10x150xf32, #tpu.memory_space<vmem>>, vector<10x6xf32>
      tpu.vector_store %arg5[%c0_66, %c78], %70 {strides = array<i32>} : memref<10x150xf32, #tpu.memory_space<vmem>>, vector<10x6xf32>,
      %c2_i32_67 = arith.constant 2 : i32
      %72 = arith.addi %1, %c2_i32_67 : i32
      %c0_68 = arith.constant 0 : index
      %73 = arith.index_cast %72 : i32 to index
      %c4_69 = arith.constant 4 : index
      %c0_70 = arith.constant 0 : index
      %74 = vector.load %arg1[%c0_68, %73, %c4_69, %c0_70] : memref<1x14x14x6xf32, #tpu.memory_space<vmem>>, vector<1x1x10x6xf32>
      %75 = vector.shape_cast %74 : vector<1x1x10x6xf32> to vector<10x6xf32>
      %c0_71 = arith.constant 0 : index
      %c84 = arith.constant 84 : index
      %76 = vector.load %arg5[%c0_71, %c84] : memref<10x150xf32, #tpu.memory_space<vmem>>, vector<10x6xf32>
      tpu.vector_store %arg5[%c0_71, %c84], %75 {strides = array<i32>} : memref<10x150xf32, #tpu.memory_space<vmem>>, vector<10x6xf32>,
      %c3_i32 = arith.constant 3 : i32
      %77 = arith.addi %1, %c3_i32 : i32
      %c0_72 = arith.constant 0 : index
      %78 = arith.index_cast %77 : i32 to index
      %c0_73 = arith.constant 0 : index
      %c0_74 = arith.constant 0 : index
      %79 = vector.load %arg1[%c0_72, %78, %c0_73, %c0_74] : memref<1x14x14x6xf32, #tpu.memory_space<vmem>>, vector<1x1x10x6xf32>
      %80 = vector.shape_cast %79 : vector<1x1x10x6xf32> to vector<10x6xf32>
      %c0_75 = arith.constant 0 : index
      %c90 = arith.constant 90 : index
      %81 = vector.load %arg5[%c0_75, %c90] : memref<10x150xf32, #tpu.memory_space<vmem>>, vector<10x6xf32>
      tpu.vector_store %arg5[%c0_75, %c90], %80 {strides = array<i32>} : memref<10x150xf32, #tpu.memory_space<vmem>>, vector<10x6xf32>,
      %c3_i32_76 = arith.constant 3 : i32
      %82 = arith.addi %1, %c3_i32_76 : i32
      %c0_77 = arith.constant 0 : index
      %83 = arith.index_cast %82 : i32 to index
      %c1_78 = arith.constant 1 : index
      %c0_79 = arith.constant 0 : index
      %84 = vector.load %arg1[%c0_77, %83, %c1_78, %c0_79] : memref<1x14x14x6xf32, #tpu.memory_space<vmem>>, vector<1x1x10x6xf32>
      %85 = vector.shape_cast %84 : vector<1x1x10x6xf32> to vector<10x6xf32>
      %c0_80 = arith.constant 0 : index
      %c96 = arith.constant 96 : index
      %86 = vector.load %arg5[%c0_80, %c96] : memref<10x150xf32, #tpu.memory_space<vmem>>, vector<10x6xf32>
      tpu.vector_store %arg5[%c0_80, %c96], %85 {strides = array<i32>} : memref<10x150xf32, #tpu.memory_space<vmem>>, vector<10x6xf32>,
      %c3_i32_81 = arith.constant 3 : i32
      %87 = arith.addi %1, %c3_i32_81 : i32
      %c0_82 = arith.constant 0 : index
      %88 = arith.index_cast %87 : i32 to index
      %c2_83 = arith.constant 2 : index
      %c0_84 = arith.constant 0 : index
      %89 = vector.load %arg1[%c0_82, %88, %c2_83, %c0_84] : memref<1x14x14x6xf32, #tpu.memory_space<vmem>>, vector<1x1x10x6xf32>
      %90 = vector.shape_cast %89 : vector<1x1x10x6xf32> to vector<10x6xf32>
      %c0_85 = arith.constant 0 : index
      %c102 = arith.constant 102 : index
      %91 = vector.load %arg5[%c0_85, %c102] : memref<10x150xf32, #tpu.memory_space<vmem>>, vector<10x6xf32>
      tpu.vector_store %arg5[%c0_85, %c102], %90 {strides = array<i32>} : memref<10x150xf32, #tpu.memory_space<vmem>>, vector<10x6xf32>,
      %c3_i32_86 = arith.constant 3 : i32
      %92 = arith.addi %1, %c3_i32_86 : i32
      %c0_87 = arith.constant 0 : index
      %93 = arith.index_cast %92 : i32 to index
      %c3_88 = arith.constant 3 : index
      %c0_89 = arith.constant 0 : index
      %94 = vector.load %arg1[%c0_87, %93, %c3_88, %c0_89] : memref<1x14x14x6xf32, #tpu.memory_space<vmem>>, vector<1x1x10x6xf32>
      %95 = vector.shape_cast %94 : vector<1x1x10x6xf32> to vector<10x6xf32>
      %c0_90 = arith.constant 0 : index
      %c108 = arith.constant 108 : index
      %96 = vector.load %arg5[%c0_90, %c108] : memref<10x150xf32, #tpu.memory_space<vmem>>, vector<10x6xf32>
      tpu.vector_store %arg5[%c0_90, %c108], %95 {strides = array<i32>} : memref<10x150xf32, #tpu.memory_space<vmem>>, vector<10x6xf32>,
      %c3_i32_91 = arith.constant 3 : i32
      %97 = arith.addi %1, %c3_i32_91 : i32
      %c0_92 = arith.constant 0 : index
      %98 = arith.index_cast %97 : i32 to index
      %c4_93 = arith.constant 4 : index
      %c0_94 = arith.constant 0 : index
      %99 = vector.load %arg1[%c0_92, %98, %c4_93, %c0_94] : memref<1x14x14x6xf32, #tpu.memory_space<vmem>>, vector<1x1x10x6xf32>
      %100 = vector.shape_cast %99 : vector<1x1x10x6xf32> to vector<10x6xf32>
      %c0_95 = arith.constant 0 : index
      %c114 = arith.constant 114 : index
      %101 = vector.load %arg5[%c0_95, %c114] : memref<10x150xf32, #tpu.memory_space<vmem>>, vector<10x6xf32>
      tpu.vector_store %arg5[%c0_95, %c114], %100 {strides = array<i32>} : memref<10x150xf32, #tpu.memory_space<vmem>>, vector<10x6xf32>,
      %c4_i32 = arith.constant 4 : i32
      %102 = arith.addi %1, %c4_i32 : i32
      %c0_96 = arith.constant 0 : index
      %103 = arith.index_cast %102 : i32 to index
      %c0_97 = arith.constant 0 : index
      %c0_98 = arith.constant 0 : index
      %104 = vector.load %arg1[%c0_96, %103, %c0_97, %c0_98] : memref<1x14x14x6xf32, #tpu.memory_space<vmem>>, vector<1x1x10x6xf32>
      %105 = vector.shape_cast %104 : vector<1x1x10x6xf32> to vector<10x6xf32>
      %c0_99 = arith.constant 0 : index
      %c120 = arith.constant 120 : index
      %106 = vector.load %arg5[%c0_99, %c120] : memref<10x150xf32, #tpu.memory_space<vmem>>, vector<10x6xf32>
      tpu.vector_store %arg5[%c0_99, %c120], %105 {strides = array<i32>} : memref<10x150xf32, #tpu.memory_space<vmem>>, vector<10x6xf32>,
      %c4_i32_100 = arith.constant 4 : i32
      %107 = arith.addi %1, %c4_i32_100 : i32
      %c0_101 = arith.constant 0 : index
      %108 = arith.index_cast %107 : i32 to index
      %c1_102 = arith.constant 1 : index
      %c0_103 = arith.constant 0 : index
      %109 = vector.load %arg1[%c0_101, %108, %c1_102, %c0_103] : memref<1x14x14x6xf32, #tpu.memory_space<vmem>>, vector<1x1x10x6xf32>
      %110 = vector.shape_cast %109 : vector<1x1x10x6xf32> to vector<10x6xf32>
      %c0_104 = arith.constant 0 : index
      %c126 = arith.constant 126 : index
      %111 = vector.load %arg5[%c0_104, %c126] : memref<10x150xf32, #tpu.memory_space<vmem>>, vector<10x6xf32>
      tpu.vector_store %arg5[%c0_104, %c126], %110 {strides = array<i32>} : memref<10x150xf32, #tpu.memory_space<vmem>>, vector<10x6xf32>,
      %c4_i32_105 = arith.constant 4 : i32
      %112 = arith.addi %1, %c4_i32_105 : i32
      %c0_106 = arith.constant 0 : index
      %113 = arith.index_cast %112 : i32 to index
      %c2_107 = arith.constant 2 : index
      %c0_108 = arith.constant 0 : index
      %114 = vector.load %arg1[%c0_106, %113, %c2_107, %c0_108] : memref<1x14x14x6xf32, #tpu.memory_space<vmem>>, vector<1x1x10x6xf32>
      %115 = vector.shape_cast %114 : vector<1x1x10x6xf32> to vector<10x6xf32>
      %c0_109 = arith.constant 0 : index
      %c132 = arith.constant 132 : index
      %116 = vector.load %arg5[%c0_109, %c132] : memref<10x150xf32, #tpu.memory_space<vmem>>, vector<10x6xf32>
      tpu.vector_store %arg5[%c0_109, %c132], %115 {strides = array<i32>} : memref<10x150xf32, #tpu.memory_space<vmem>>, vector<10x6xf32>,
      %c4_i32_110 = arith.constant 4 : i32
      %117 = arith.addi %1, %c4_i32_110 : i32
      %c0_111 = arith.constant 0 : index
      %118 = arith.index_cast %117 : i32 to index
      %c3_112 = arith.constant 3 : index
      %c0_113 = arith.constant 0 : index
      %119 = vector.load %arg1[%c0_111, %118, %c3_112, %c0_113] : memref<1x14x14x6xf32, #tpu.memory_space<vmem>>, vector<1x1x10x6xf32>
      %120 = vector.shape_cast %119 : vector<1x1x10x6xf32> to vector<10x6xf32>
      %c0_114 = arith.constant 0 : index
      %c138 = arith.constant 138 : index
      %121 = vector.load %arg5[%c0_114, %c138] : memref<10x150xf32, #tpu.memory_space<vmem>>, vector<10x6xf32>
      tpu.vector_store %arg5[%c0_114, %c138], %120 {strides = array<i32>} : memref<10x150xf32, #tpu.memory_space<vmem>>, vector<10x6xf32>,
      %c4_i32_115 = arith.constant 4 : i32
      %122 = arith.addi %1, %c4_i32_115 : i32
      %c0_116 = arith.constant 0 : index
      %123 = arith.index_cast %122 : i32 to index
      %c4_117 = arith.constant 4 : index
      %c0_118 = arith.constant 0 : index
      %124 = vector.load %arg1[%c0_116, %123, %c4_117, %c0_118] : memref<1x14x14x6xf32, #tpu.memory_space<vmem>>, vector<1x1x10x6xf32>
      %125 = vector.shape_cast %124 : vector<1x1x10x6xf32> to vector<10x6xf32>
      %c0_119 = arith.constant 0 : index
      %c144 = arith.constant 144 : index
      %126 = vector.load %arg5[%c0_119, %c144] : memref<10x150xf32, #tpu.memory_space<vmem>>, vector<10x6xf32>
      tpu.vector_store %arg5[%c0_119, %c144], %125 {strides = array<i32>} : memref<10x150xf32, #tpu.memory_space<vmem>>, vector<10x6xf32>,
      %c0_120 = arith.constant 0 : index
      %c0_121 = arith.constant 0 : index
      %127 = vector.load %arg5[%c0_120, %c0_121] : memref<10x150xf32, #tpu.memory_space<vmem>>, vector<10x150xf32>
      %c0_122 = arith.constant 0 : index
      %c0_123 = arith.constant 0 : index
      %128 = vector.load %arg2[%c0_122, %c0_123] : memref<150x16xf32, #tpu.memory_space<vmem>>, vector<150x16xf32>
      %cst = arith.constant dense<0.000000e+00> : vector<10x16xf32>
      %129 = tpu.matmul %127, %128, %cst {dimension_numbers = #tpu.dot_dimension_numbers<[1], [0], [0], [1], [0, 0, 1, 1], [], []>} : vector<10x150xf32>, vector<150x16xf32>, vector<10x16xf32> -> vector<10x16xf32>
      %c0_124 = arith.constant 0 : index
      %c0_125 = arith.constant 0 : index
      %130 = vector.load %arg3[%c0_124, %c0_125] : memref<1x16xf32, #tpu.memory_space<vmem>>, vector<1x16xf32>
      %131 = vector.broadcast %130 : vector<1x16xf32> to vector<10x16xf32>
      %132 = arith.addf %129, %131 : vector<10x16xf32>
      %cst_126 = arith.constant 0.000000e+00 : f32
      %133 = vector.broadcast %cst_126 : f32 to vector<10x16xf32>
      %134 = arith.maximumf %132, %133 : vector<10x16xf32>
      %c1_i32_127 = arith.constant 1 : i32
      %135 = arith.addi %1, %c1_i32_127 : i32
      %c0_i32_128 = arith.constant 0 : i32
      %136 = arith.addi %135, %c0_i32_128 : i32
      %c0_129 = arith.constant 0 : index
      %137 = arith.index_cast %136 : i32 to index
      %c0_130 = arith.constant 0 : index
      %c0_131 = arith.constant 0 : index
      %138 = vector.load %arg1[%c0_129, %137, %c0_130, %c0_131] : memref<1x14x14x6xf32, #tpu.memory_space<vmem>>, vector<1x1x10x6xf32>
      %139 = vector.shape_cast %138 : vector<1x1x10x6xf32> to vector<10x6xf32>
      %c0_132 = arith.constant 0 : index
      %c0_133 = arith.constant 0 : index
      %140 = vector.load %arg5[%c0_132, %c0_133] : memref<10x150xf32, #tpu.memory_space<vmem>>, vector<10x6xf32>
      tpu.vector_store %arg5[%c0_132, %c0_133], %139 {strides = array<i32>} : memref<10x150xf32, #tpu.memory_space<vmem>>, vector<10x6xf32>,
      %c0_i32_134 = arith.constant 0 : i32
      %141 = arith.addi %135, %c0_i32_134 : i32
      %c0_135 = arith.constant 0 : index
      %142 = arith.index_cast %141 : i32 to index
      %c1_136 = arith.constant 1 : index
      %c0_137 = arith.constant 0 : index
      %143 = vector.load %arg1[%c0_135, %142, %c1_136, %c0_137] : memref<1x14x14x6xf32, #tpu.memory_space<vmem>>, vector<1x1x10x6xf32>
      %144 = vector.shape_cast %143 : vector<1x1x10x6xf32> to vector<10x6xf32>
      %c0_138 = arith.constant 0 : index
      %c6_139 = arith.constant 6 : index
      %145 = vector.load %arg5[%c0_138, %c6_139] : memref<10x150xf32, #tpu.memory_space<vmem>>, vector<10x6xf32>
      tpu.vector_store %arg5[%c0_138, %c6_139], %144 {strides = array<i32>} : memref<10x150xf32, #tpu.memory_space<vmem>>, vector<10x6xf32>,
      %c0_i32_140 = arith.constant 0 : i32
      %146 = arith.addi %135, %c0_i32_140 : i32
      %c0_141 = arith.constant 0 : index
      %147 = arith.index_cast %146 : i32 to index
      %c2_142 = arith.constant 2 : index
      %c0_143 = arith.constant 0 : index
      %148 = vector.load %arg1[%c0_141, %147, %c2_142, %c0_143] : memref<1x14x14x6xf32, #tpu.memory_space<vmem>>, vector<1x1x10x6xf32>
      %149 = vector.shape_cast %148 : vector<1x1x10x6xf32> to vector<10x6xf32>
      %c0_144 = arith.constant 0 : index
      %c12_145 = arith.constant 12 : index
      %150 = vector.load %arg5[%c0_144, %c12_145] : memref<10x150xf32, #tpu.memory_space<vmem>>, vector<10x6xf32>
      tpu.vector_store %arg5[%c0_144, %c12_145], %149 {strides = array<i32>} : memref<10x150xf32, #tpu.memory_space<vmem>>, vector<10x6xf32>,
      %c0_i32_146 = arith.constant 0 : i32
      %151 = arith.addi %135, %c0_i32_146 : i32
      %c0_147 = arith.constant 0 : index
      %152 = arith.index_cast %151 : i32 to index
      %c3_148 = arith.constant 3 : index
      %c0_149 = arith.constant 0 : index
      %153 = vector.load %arg1[%c0_147, %152, %c3_148, %c0_149] : memref<1x14x14x6xf32, #tpu.memory_space<vmem>>, vector<1x1x10x6xf32>
      %154 = vector.shape_cast %153 : vector<1x1x10x6xf32> to vector<10x6xf32>
      %c0_150 = arith.constant 0 : index
      %c18_151 = arith.constant 18 : index
      %155 = vector.load %arg5[%c0_150, %c18_151] : memref<10x150xf32, #tpu.memory_space<vmem>>, vector<10x6xf32>
      tpu.vector_store %arg5[%c0_150, %c18_151], %154 {strides = array<i32>} : memref<10x150xf32, #tpu.memory_space<vmem>>, vector<10x6xf32>,
      %c0_i32_152 = arith.constant 0 : i32
      %156 = arith.addi %135, %c0_i32_152 : i32
      %c0_153 = arith.constant 0 : index
      %157 = arith.index_cast %156 : i32 to index
      %c4_154 = arith.constant 4 : index
      %c0_155 = arith.constant 0 : index
      %158 = vector.load %arg1[%c0_153, %157, %c4_154, %c0_155] : memref<1x14x14x6xf32, #tpu.memory_space<vmem>>, vector<1x1x10x6xf32>
      %159 = vector.shape_cast %158 : vector<1x1x10x6xf32> to vector<10x6xf32>
      %c0_156 = arith.constant 0 : index
      %c24_157 = arith.constant 24 : index
      %160 = vector.load %arg5[%c0_156, %c24_157] : memref<10x150xf32, #tpu.memory_space<vmem>>, vector<10x6xf32>
      tpu.vector_store %arg5[%c0_156, %c24_157], %159 {strides = array<i32>} : memref<10x150xf32, #tpu.memory_space<vmem>>, vector<10x6xf32>,
      %c1_i32_158 = arith.constant 1 : i32
      %161 = arith.addi %135, %c1_i32_158 : i32
      %c0_159 = arith.constant 0 : index
      %162 = arith.index_cast %161 : i32 to index
      %c0_160 = arith.constant 0 : index
      %c0_161 = arith.constant 0 : index
      %163 = vector.load %arg1[%c0_159, %162, %c0_160, %c0_161] : memref<1x14x14x6xf32, #tpu.memory_space<vmem>>, vector<1x1x10x6xf32>
      %164 = vector.shape_cast %163 : vector<1x1x10x6xf32> to vector<10x6xf32>
      %c0_162 = arith.constant 0 : index
      %c30_163 = arith.constant 30 : index
      %165 = vector.load %arg5[%c0_162, %c30_163] : memref<10x150xf32, #tpu.memory_space<vmem>>, vector<10x6xf32>
      tpu.vector_store %arg5[%c0_162, %c30_163], %164 {strides = array<i32>} : memref<10x150xf32, #tpu.memory_space<vmem>>, vector<10x6xf32>,
      %c1_i32_164 = arith.constant 1 : i32
      %166 = arith.addi %135, %c1_i32_164 : i32
      %c0_165 = arith.constant 0 : index
      %167 = arith.index_cast %166 : i32 to index
      %c1_166 = arith.constant 1 : index
      %c0_167 = arith.constant 0 : index
      %168 = vector.load %arg1[%c0_165, %167, %c1_166, %c0_167] : memref<1x14x14x6xf32, #tpu.memory_space<vmem>>, vector<1x1x10x6xf32>
      %169 = vector.shape_cast %168 : vector<1x1x10x6xf32> to vector<10x6xf32>
      %c0_168 = arith.constant 0 : index
      %c36_169 = arith.constant 36 : index
      %170 = vector.load %arg5[%c0_168, %c36_169] : memref<10x150xf32, #tpu.memory_space<vmem>>, vector<10x6xf32>
      tpu.vector_store %arg5[%c0_168, %c36_169], %169 {strides = array<i32>} : memref<10x150xf32, #tpu.memory_space<vmem>>, vector<10x6xf32>,
      %c1_i32_170 = arith.constant 1 : i32
      %171 = arith.addi %135, %c1_i32_170 : i32
      %c0_171 = arith.constant 0 : index
      %172 = arith.index_cast %171 : i32 to index
      %c2_172 = arith.constant 2 : index
      %c0_173 = arith.constant 0 : index
      %173 = vector.load %arg1[%c0_171, %172, %c2_172, %c0_173] : memref<1x14x14x6xf32, #tpu.memory_space<vmem>>, vector<1x1x10x6xf32>
      %174 = vector.shape_cast %173 : vector<1x1x10x6xf32> to vector<10x6xf32>
      %c0_174 = arith.constant 0 : index
      %c42_175 = arith.constant 42 : index
      %175 = vector.load %arg5[%c0_174, %c42_175] : memref<10x150xf32, #tpu.memory_space<vmem>>, vector<10x6xf32>
      tpu.vector_store %arg5[%c0_174, %c42_175], %174 {strides = array<i32>} : memref<10x150xf32, #tpu.memory_space<vmem>>, vector<10x6xf32>,
      %c1_i32_176 = arith.constant 1 : i32
      %176 = arith.addi %135, %c1_i32_176 : i32
      %c0_177 = arith.constant 0 : index
      %177 = arith.index_cast %176 : i32 to index
      %c3_178 = arith.constant 3 : index
      %c0_179 = arith.constant 0 : index
      %178 = vector.load %arg1[%c0_177, %177, %c3_178, %c0_179] : memref<1x14x14x6xf32, #tpu.memory_space<vmem>>, vector<1x1x10x6xf32>
      %179 = vector.shape_cast %178 : vector<1x1x10x6xf32> to vector<10x6xf32>
      %c0_180 = arith.constant 0 : index
      %c48_181 = arith.constant 48 : index
      %180 = vector.load %arg5[%c0_180, %c48_181] : memref<10x150xf32, #tpu.memory_space<vmem>>, vector<10x6xf32>
      tpu.vector_store %arg5[%c0_180, %c48_181], %179 {strides = array<i32>} : memref<10x150xf32, #tpu.memory_space<vmem>>, vector<10x6xf32>,
      %c1_i32_182 = arith.constant 1 : i32
      %181 = arith.addi %135, %c1_i32_182 : i32
      %c0_183 = arith.constant 0 : index
      %182 = arith.index_cast %181 : i32 to index
      %c4_184 = arith.constant 4 : index
      %c0_185 = arith.constant 0 : index
      %183 = vector.load %arg1[%c0_183, %182, %c4_184, %c0_185] : memref<1x14x14x6xf32, #tpu.memory_space<vmem>>, vector<1x1x10x6xf32>
      %184 = vector.shape_cast %183 : vector<1x1x10x6xf32> to vector<10x6xf32>
      %c0_186 = arith.constant 0 : index
      %c54_187 = arith.constant 54 : index
      %185 = vector.load %arg5[%c0_186, %c54_187] : memref<10x150xf32, #tpu.memory_space<vmem>>, vector<10x6xf32>
      tpu.vector_store %arg5[%c0_186, %c54_187], %184 {strides = array<i32>} : memref<10x150xf32, #tpu.memory_space<vmem>>, vector<10x6xf32>,
      %c2_i32_188 = arith.constant 2 : i32
      %186 = arith.addi %135, %c2_i32_188 : i32
      %c0_189 = arith.constant 0 : index
      %187 = arith.index_cast %186 : i32 to index
      %c0_190 = arith.constant 0 : index
      %c0_191 = arith.constant 0 : index
      %188 = vector.load %arg1[%c0_189, %187, %c0_190, %c0_191] : memref<1x14x14x6xf32, #tpu.memory_space<vmem>>, vector<1x1x10x6xf32>
      %189 = vector.shape_cast %188 : vector<1x1x10x6xf32> to vector<10x6xf32>
      %c0_192 = arith.constant 0 : index
      %c60_193 = arith.constant 60 : index
      %190 = vector.load %arg5[%c0_192, %c60_193] : memref<10x150xf32, #tpu.memory_space<vmem>>, vector<10x6xf32>
      tpu.vector_store %arg5[%c0_192, %c60_193], %189 {strides = array<i32>} : memref<10x150xf32, #tpu.memory_space<vmem>>, vector<10x6xf32>,
      %c2_i32_194 = arith.constant 2 : i32
      %191 = arith.addi %135, %c2_i32_194 : i32
      %c0_195 = arith.constant 0 : index
      %192 = arith.index_cast %191 : i32 to index
      %c1_196 = arith.constant 1 : index
      %c0_197 = arith.constant 0 : index
      %193 = vector.load %arg1[%c0_195, %192, %c1_196, %c0_197] : memref<1x14x14x6xf32, #tpu.memory_space<vmem>>, vector<1x1x10x6xf32>
      %194 = vector.shape_cast %193 : vector<1x1x10x6xf32> to vector<10x6xf32>
      %c0_198 = arith.constant 0 : index
      %c66_199 = arith.constant 66 : index
      %195 = vector.load %arg5[%c0_198, %c66_199] : memref<10x150xf32, #tpu.memory_space<vmem>>, vector<10x6xf32>
      tpu.vector_store %arg5[%c0_198, %c66_199], %194 {strides = array<i32>} : memref<10x150xf32, #tpu.memory_space<vmem>>, vector<10x6xf32>,
      %c2_i32_200 = arith.constant 2 : i32
      %196 = arith.addi %135, %c2_i32_200 : i32
      %c0_201 = arith.constant 0 : index
      %197 = arith.index_cast %196 : i32 to index
      %c2_202 = arith.constant 2 : index
      %c0_203 = arith.constant 0 : index
      %198 = vector.load %arg1[%c0_201, %197, %c2_202, %c0_203] : memref<1x14x14x6xf32, #tpu.memory_space<vmem>>, vector<1x1x10x6xf32>
      %199 = vector.shape_cast %198 : vector<1x1x10x6xf32> to vector<10x6xf32>
      %c0_204 = arith.constant 0 : index
      %c72_205 = arith.constant 72 : index
      %200 = vector.load %arg5[%c0_204, %c72_205] : memref<10x150xf32, #tpu.memory_space<vmem>>, vector<10x6xf32>
      tpu.vector_store %arg5[%c0_204, %c72_205], %199 {strides = array<i32>} : memref<10x150xf32, #tpu.memory_space<vmem>>, vector<10x6xf32>,
      %c2_i32_206 = arith.constant 2 : i32
      %201 = arith.addi %135, %c2_i32_206 : i32
      %c0_207 = arith.constant 0 : index
      %202 = arith.index_cast %201 : i32 to index
      %c3_208 = arith.constant 3 : index
      %c0_209 = arith.constant 0 : index
      %203 = vector.load %arg1[%c0_207, %202, %c3_208, %c0_209] : memref<1x14x14x6xf32, #tpu.memory_space<vmem>>, vector<1x1x10x6xf32>
      %204 = vector.shape_cast %203 : vector<1x1x10x6xf32> to vector<10x6xf32>
      %c0_210 = arith.constant 0 : index
      %c78_211 = arith.constant 78 : index
      %205 = vector.load %arg5[%c0_210, %c78_211] : memref<10x150xf32, #tpu.memory_space<vmem>>, vector<10x6xf32>
      tpu.vector_store %arg5[%c0_210, %c78_211], %204 {strides = array<i32>} : memref<10x150xf32, #tpu.memory_space<vmem>>, vector<10x6xf32>,
      %c2_i32_212 = arith.constant 2 : i32
      %206 = arith.addi %135, %c2_i32_212 : i32
      %c0_213 = arith.constant 0 : index
      %207 = arith.index_cast %206 : i32 to index
      %c4_214 = arith.constant 4 : index
      %c0_215 = arith.constant 0 : index
      %208 = vector.load %arg1[%c0_213, %207, %c4_214, %c0_215] : memref<1x14x14x6xf32, #tpu.memory_space<vmem>>, vector<1x1x10x6xf32>
      %209 = vector.shape_cast %208 : vector<1x1x10x6xf32> to vector<10x6xf32>
      %c0_216 = arith.constant 0 : index
      %c84_217 = arith.constant 84 : index
      %210 = vector.load %arg5[%c0_216, %c84_217] : memref<10x150xf32, #tpu.memory_space<vmem>>, vector<10x6xf32>
      tpu.vector_store %arg5[%c0_216, %c84_217], %209 {strides = array<i32>} : memref<10x150xf32, #tpu.memory_space<vmem>>, vector<10x6xf32>,
      %c3_i32_218 = arith.constant 3 : i32
      %211 = arith.addi %135, %c3_i32_218 : i32
      %c0_219 = arith.constant 0 : index
      %212 = arith.index_cast %211 : i32 to index
      %c0_220 = arith.constant 0 : index
      %c0_221 = arith.constant 0 : index
      %213 = vector.load %arg1[%c0_219, %212, %c0_220, %c0_221] : memref<1x14x14x6xf32, #tpu.memory_space<vmem>>, vector<1x1x10x6xf32>
      %214 = vector.shape_cast %213 : vector<1x1x10x6xf32> to vector<10x6xf32>
      %c0_222 = arith.constant 0 : index
      %c90_223 = arith.constant 90 : index
      %215 = vector.load %arg5[%c0_222, %c90_223] : memref<10x150xf32, #tpu.memory_space<vmem>>, vector<10x6xf32>
      tpu.vector_store %arg5[%c0_222, %c90_223], %214 {strides = array<i32>} : memref<10x150xf32, #tpu.memory_space<vmem>>, vector<10x6xf32>,
      %c3_i32_224 = arith.constant 3 : i32
      %216 = arith.addi %135, %c3_i32_224 : i32
      %c0_225 = arith.constant 0 : index
      %217 = arith.index_cast %216 : i32 to index
      %c1_226 = arith.constant 1 : index
      %c0_227 = arith.constant 0 : index
      %218 = vector.load %arg1[%c0_225, %217, %c1_226, %c0_227] : memref<1x14x14x6xf32, #tpu.memory_space<vmem>>, vector<1x1x10x6xf32>
      %219 = vector.shape_cast %218 : vector<1x1x10x6xf32> to vector<10x6xf32>
      %c0_228 = arith.constant 0 : index
      %c96_229 = arith.constant 96 : index
      %220 = vector.load %arg5[%c0_228, %c96_229] : memref<10x150xf32, #tpu.memory_space<vmem>>, vector<10x6xf32>
      tpu.vector_store %arg5[%c0_228, %c96_229], %219 {strides = array<i32>} : memref<10x150xf32, #tpu.memory_space<vmem>>, vector<10x6xf32>,
      %c3_i32_230 = arith.constant 3 : i32
      %221 = arith.addi %135, %c3_i32_230 : i32
      %c0_231 = arith.constant 0 : index
      %222 = arith.index_cast %221 : i32 to index
      %c2_232 = arith.constant 2 : index
      %c0_233 = arith.constant 0 : index
      %223 = vector.load %arg1[%c0_231, %222, %c2_232, %c0_233] : memref<1x14x14x6xf32, #tpu.memory_space<vmem>>, vector<1x1x10x6xf32>
      %224 = vector.shape_cast %223 : vector<1x1x10x6xf32> to vector<10x6xf32>
      %c0_234 = arith.constant 0 : index
      %c102_235 = arith.constant 102 : index
      %225 = vector.load %arg5[%c0_234, %c102_235] : memref<10x150xf32, #tpu.memory_space<vmem>>, vector<10x6xf32>
      tpu.vector_store %arg5[%c0_234, %c102_235], %224 {strides = array<i32>} : memref<10x150xf32, #tpu.memory_space<vmem>>, vector<10x6xf32>,
      %c3_i32_236 = arith.constant 3 : i32
      %226 = arith.addi %135, %c3_i32_236 : i32
      %c0_237 = arith.constant 0 : index
      %227 = arith.index_cast %226 : i32 to index
      %c3_238 = arith.constant 3 : index
      %c0_239 = arith.constant 0 : index
      %228 = vector.load %arg1[%c0_237, %227, %c3_238, %c0_239] : memref<1x14x14x6xf32, #tpu.memory_space<vmem>>, vector<1x1x10x6xf32>
      %229 = vector.shape_cast %228 : vector<1x1x10x6xf32> to vector<10x6xf32>
      %c0_240 = arith.constant 0 : index
      %c108_241 = arith.constant 108 : index
      %230 = vector.load %arg5[%c0_240, %c108_241] : memref<10x150xf32, #tpu.memory_space<vmem>>, vector<10x6xf32>
      tpu.vector_store %arg5[%c0_240, %c108_241], %229 {strides = array<i32>} : memref<10x150xf32, #tpu.memory_space<vmem>>, vector<10x6xf32>,
      %c3_i32_242 = arith.constant 3 : i32
      %231 = arith.addi %135, %c3_i32_242 : i32
      %c0_243 = arith.constant 0 : index
      %232 = arith.index_cast %231 : i32 to index
      %c4_244 = arith.constant 4 : index
      %c0_245 = arith.constant 0 : index
      %233 = vector.load %arg1[%c0_243, %232, %c4_244, %c0_245] : memref<1x14x14x6xf32, #tpu.memory_space<vmem>>, vector<1x1x10x6xf32>
      %234 = vector.shape_cast %233 : vector<1x1x10x6xf32> to vector<10x6xf32>
      %c0_246 = arith.constant 0 : index
      %c114_247 = arith.constant 114 : index
      %235 = vector.load %arg5[%c0_246, %c114_247] : memref<10x150xf32, #tpu.memory_space<vmem>>, vector<10x6xf32>
      tpu.vector_store %arg5[%c0_246, %c114_247], %234 {strides = array<i32>} : memref<10x150xf32, #tpu.memory_space<vmem>>, vector<10x6xf32>,
      %c4_i32_248 = arith.constant 4 : i32
      %236 = arith.addi %135, %c4_i32_248 : i32
      %c0_249 = arith.constant 0 : index
      %237 = arith.index_cast %236 : i32 to index
      %c0_250 = arith.constant 0 : index
      %c0_251 = arith.constant 0 : index
      %238 = vector.load %arg1[%c0_249, %237, %c0_250, %c0_251] : memref<1x14x14x6xf32, #tpu.memory_space<vmem>>, vector<1x1x10x6xf32>
      %239 = vector.shape_cast %238 : vector<1x1x10x6xf32> to vector<10x6xf32>
      %c0_252 = arith.constant 0 : index
      %c120_253 = arith.constant 120 : index
      %240 = vector.load %arg5[%c0_252, %c120_253] : memref<10x150xf32, #tpu.memory_space<vmem>>, vector<10x6xf32>
      tpu.vector_store %arg5[%c0_252, %c120_253], %239 {strides = array<i32>} : memref<10x150xf32, #tpu.memory_space<vmem>>, vector<10x6xf32>,
      %c4_i32_254 = arith.constant 4 : i32
      %241 = arith.addi %135, %c4_i32_254 : i32
      %c0_255 = arith.constant 0 : index
      %242 = arith.index_cast %241 : i32 to index
      %c1_256 = arith.constant 1 : index
      %c0_257 = arith.constant 0 : index
      %243 = vector.load %arg1[%c0_255, %242, %c1_256, %c0_257] : memref<1x14x14x6xf32, #tpu.memory_space<vmem>>, vector<1x1x10x6xf32>
      %244 = vector.shape_cast %243 : vector<1x1x10x6xf32> to vector<10x6xf32>
      %c0_258 = arith.constant 0 : index
      %c126_259 = arith.constant 126 : index
      %245 = vector.load %arg5[%c0_258, %c126_259] : memref<10x150xf32, #tpu.memory_space<vmem>>, vector<10x6xf32>
      tpu.vector_store %arg5[%c0_258, %c126_259], %244 {strides = array<i32>} : memref<10x150xf32, #tpu.memory_space<vmem>>, vector<10x6xf32>,
      %c4_i32_260 = arith.constant 4 : i32
      %246 = arith.addi %135, %c4_i32_260 : i32
      %c0_261 = arith.constant 0 : index
      %247 = arith.index_cast %246 : i32 to index
      %c2_262 = arith.constant 2 : index
      %c0_263 = arith.constant 0 : index
      %248 = vector.load %arg1[%c0_261, %247, %c2_262, %c0_263] : memref<1x14x14x6xf32, #tpu.memory_space<vmem>>, vector<1x1x10x6xf32>
      %249 = vector.shape_cast %248 : vector<1x1x10x6xf32> to vector<10x6xf32>
      %c0_264 = arith.constant 0 : index
      %c132_265 = arith.constant 132 : index
      %250 = vector.load %arg5[%c0_264, %c132_265] : memref<10x150xf32, #tpu.memory_space<vmem>>, vector<10x6xf32>
      tpu.vector_store %arg5[%c0_264, %c132_265], %249 {strides = array<i32>} : memref<10x150xf32, #tpu.memory_space<vmem>>, vector<10x6xf32>,
      %c4_i32_266 = arith.constant 4 : i32
      %251 = arith.addi %135, %c4_i32_266 : i32
      %c0_267 = arith.constant 0 : index
      %252 = arith.index_cast %251 : i32 to index
      %c3_268 = arith.constant 3 : index
      %c0_269 = arith.constant 0 : index
      %253 = vector.load %arg1[%c0_267, %252, %c3_268, %c0_269] : memref<1x14x14x6xf32, #tpu.memory_space<vmem>>, vector<1x1x10x6xf32>
      %254 = vector.shape_cast %253 : vector<1x1x10x6xf32> to vector<10x6xf32>
      %c0_270 = arith.constant 0 : index
      %c138_271 = arith.constant 138 : index
      %255 = vector.load %arg5[%c0_270, %c138_271] : memref<10x150xf32, #tpu.memory_space<vmem>>, vector<10x6xf32>
      tpu.vector_store %arg5[%c0_270, %c138_271], %254 {strides = array<i32>} : memref<10x150xf32, #tpu.memory_space<vmem>>, vector<10x6xf32>,
      %c4_i32_272 = arith.constant 4 : i32
      %256 = arith.addi %135, %c4_i32_272 : i32
      %c0_273 = arith.constant 0 : index
      %257 = arith.index_cast %256 : i32 to index
      %c4_274 = arith.constant 4 : index
      %c0_275 = arith.constant 0 : index
      %258 = vector.load %arg1[%c0_273, %257, %c4_274, %c0_275] : memref<1x14x14x6xf32, #tpu.memory_space<vmem>>, vector<1x1x10x6xf32>
      %259 = vector.shape_cast %258 : vector<1x1x10x6xf32> to vector<10x6xf32>
      %c0_276 = arith.constant 0 : index
      %c144_277 = arith.constant 144 : index
      %260 = vector.load %arg5[%c0_276, %c144_277] : memref<10x150xf32, #tpu.memory_space<vmem>>, vector<10x6xf32>
      tpu.vector_store %arg5[%c0_276, %c144_277], %259 {strides = array<i32>} : memref<10x150xf32, #tpu.memory_space<vmem>>, vector<10x6xf32>,
      %c0_278 = arith.constant 0 : index
      %c0_279 = arith.constant 0 : index
      %261 = vector.load %arg5[%c0_278, %c0_279] : memref<10x150xf32, #tpu.memory_space<vmem>>, vector<10x150xf32>
      %c0_280 = arith.constant 0 : index
      %c0_281 = arith.constant 0 : index
      %262 = vector.load %arg2[%c0_280, %c0_281] : memref<150x16xf32, #tpu.memory_space<vmem>>, vector<150x16xf32>
      %cst_282 = arith.constant dense<0.000000e+00> : vector<10x16xf32>
      %263 = tpu.matmul %261, %262, %cst_282 {dimension_numbers = #tpu.dot_dimension_numbers<[1], [0], [0], [1], [0, 0, 1, 1], [], []>} : vector<10x150xf32>, vector<150x16xf32>, vector<10x16xf32> -> vector<10x16xf32>
      %c0_283 = arith.constant 0 : index
      %c0_284 = arith.constant 0 : index
      %264 = vector.load %arg3[%c0_283, %c0_284] : memref<1x16xf32, #tpu.memory_space<vmem>>, vector<1x16xf32>
      %265 = vector.broadcast %264 : vector<1x16xf32> to vector<10x16xf32>
      %266 = arith.addf %263, %265 : vector<10x16xf32>
      %cst_285 = arith.constant 0.000000e+00 : f32
      %267 = vector.broadcast %cst_285 : f32 to vector<10x16xf32>
      %268 = arith.maximumf %266, %267 : vector<10x16xf32>
      %269 = arith.maximumf %134, %268 : vector<10x16xf32>
      %c0_286 = arith.constant 0 : index
      %c0_287 = arith.constant 0 : index
      %270 = vector.load %arg6[%c0_286, %c0_287] : memref<10x16xf32, #tpu.memory_space<vmem>>, vector<10x16xf32>
      tpu.vector_store %arg6[%c0_286, %c0_287], %269 {strides = array<i32>} : memref<10x16xf32, #tpu.memory_space<vmem>>, vector<10x16xf32>,
      %c0_288 = arith.constant 0 : index
      %c0_289 = arith.constant 0 : index
      %271 = tpu.strided_load %arg6[%c0_288, %c0_289] {strides = array<i32: 2, 1>} : memref<10x16xf32, #tpu.memory_space<vmem>>, vector<5x16xf32>
      %c1_290 = arith.constant 1 : index
      %c0_291 = arith.constant 0 : index
      %272 = tpu.strided_load %arg6[%c1_290, %c0_291] {strides = array<i32: 2, 1>} : memref<10x16xf32, #tpu.memory_space<vmem>>, vector<5x16xf32>
      %273 = arith.maximumf %271, %272 : vector<5x16xf32>
      %c0_292 = arith.constant 0 : index
      %274 = arith.index_cast %arg7 : i32 to index
      %c0_293 = arith.constant 0 : index
      %c0_294 = arith.constant 0 : index
      %275 = vector.load %arg4[%c0_292, %274, %c0_293, %c0_294] : memref<1x5x5x16xf32, #tpu.memory_space<vmem>>, vector<1x1x5x16xf32>
      %276 = vector.shape_cast %275 : vector<1x1x5x16xf32> to vector<5x16xf32>
      %277 = vector.shape_cast %273 : vector<5x16xf32> to vector<1x1x5x16xf32>
      tpu.vector_store %arg4[%c0_292, %274, %c0_293, %c0_294], %277 {strides = array<i32>} : memref<1x5x5x16xf32, #tpu.memory_space<vmem>>, vector<1x1x5x16xf32>,
    }
    %c5_i32_0 = arith.constant 5 : i32
    return
  }
  func.func @transform_0(%arg0: i32) -> (i32, i32, i32, i32) {
    %c0_i32 = arith.constant 0 : i32
    %c0_i32_0 = arith.constant 0 : i32
    %c0_i32_1 = arith.constant 0 : i32
    %c0_i32_2 = arith.constant 0 : i32
    return %arg0, %c0_i32, %c0_i32_0, %c0_i32_1 : i32, i32, i32, i32
  }
  func.func @transform_1(%arg0: i32) -> (i32, i32) {
    %c0_i32 = arith.constant 0 : i32
    %c0_i32_0 = arith.constant 0 : i32
    %c0_i32_1 = arith.constant 0 : i32
    return %c0_i32, %c0_i32_0 : i32, i32
  }
  func.func @transform_2(%arg0: i32) -> (i32, i32) {
    %c0_i32 = arith.constant 0 : i32
    %c0_i32_0 = arith.constant 0 : i32
    %c0_i32_1 = arith.constant 0 : i32
    return %c0_i32, %c0_i32_0 : i32, i32
  }
  func.func @transform_3(%arg0: i32) -> (i32, i32, i32, i32) {
    %c0_i32 = arith.constant 0 : i32
    %c0_i32_0 = arith.constant 0 : i32
    %c0_i32_1 = arith.constant 0 : i32
    %c0_i32_2 = arith.constant 0 : i32
    return %arg0, %c0_i32, %c0_i32_0, %c0_i32_1 : i32, i32, i32, i32
  }
}

module attributes {stable_mosaic.version = 11 : i64} {
  func.func @_fc_stack_kernel(%arg0: i32, %arg1: memref<8x400xf32, #tpu.memory_space<vmem>>, %arg2: memref<400x128xf32, #tpu.memory_space<vmem>>, %arg3: memref<1x128xf32, #tpu.memory_space<vmem>>, %arg4: memref<128x128xf32, #tpu.memory_space<vmem>>, %arg5: memref<1x128xf32, #tpu.memory_space<vmem>>, %arg6: memref<128x128xf32, #tpu.memory_space<vmem>>, %arg7: memref<1x128xf32, #tpu.memory_space<vmem>>, %arg8: memref<8x128xf32, #tpu.memory_space<vmem>>) attributes {dimension_semantics = [#tpu.dimension_semantics<parallel>], iteration_bounds = array<i64: 1>, scalar_prefetch = 0 : i64, scratch_operands = 0 : i64, tpu.core_type = #tpu.core_type<tc>, window_params = [{transform_indices = @transform_0, window_bounds = array<i64: 8, 400>}, {pipeline_mode = #tpu.pipeline_mode<synchronous>, transform_indices = @transform_1, window_bounds = array<i64: 400, 128>}, {pipeline_mode = #tpu.pipeline_mode<synchronous>, transform_indices = @transform_2, window_bounds = array<i64: 1, 128>}, {pipeline_mode = #tpu.pipeline_mode<synchronous>, transform_indices = @transform_3, window_bounds = array<i64: 128, 128>}, {pipeline_mode = #tpu.pipeline_mode<synchronous>, transform_indices = @transform_4, window_bounds = array<i64: 1, 128>}, {pipeline_mode = #tpu.pipeline_mode<synchronous>, transform_indices = @transform_5, window_bounds = array<i64: 128, 128>}, {pipeline_mode = #tpu.pipeline_mode<synchronous>, transform_indices = @transform_6, window_bounds = array<i64: 1, 128>}, {transform_indices = @transform_7, window_bounds = array<i64: 8, 128>}]} {
    %c0 = arith.constant 0 : index
    %c0_0 = arith.constant 0 : index
    %0 = vector.load %arg1[%c0, %c0_0] : memref<8x400xf32, #tpu.memory_space<vmem>>, vector<8x400xf32>
    %c0_1 = arith.constant 0 : index
    %c0_2 = arith.constant 0 : index
    %1 = vector.load %arg2[%c0_1, %c0_2] : memref<400x128xf32, #tpu.memory_space<vmem>>, vector<400x128xf32>
    %cst = arith.constant dense<0.000000e+00> : vector<8x128xf32>
    %2 = tpu.matmul %0, %1, %cst {dimension_numbers = #tpu.dot_dimension_numbers<[1], [0], [0], [1], [0, 0, 1, 1], [], []>} : vector<8x400xf32>, vector<400x128xf32>, vector<8x128xf32> -> vector<8x128xf32>
    %c0_3 = arith.constant 0 : index
    %c0_4 = arith.constant 0 : index
    %3 = vector.load %arg3[%c0_3, %c0_4] : memref<1x128xf32, #tpu.memory_space<vmem>>, vector<1x128xf32>
    %4 = vector.broadcast %3 : vector<1x128xf32> to vector<8x128xf32>
    %5 = arith.addf %2, %4 : vector<8x128xf32>
    %cst_5 = arith.constant 0.000000e+00 : f32
    %6 = vector.broadcast %cst_5 : f32 to vector<8x128xf32>
    %7 = arith.maximumf %5, %6 : vector<8x128xf32>
    %c0_6 = arith.constant 0 : index
    %c0_7 = arith.constant 0 : index
    %8 = vector.load %arg4[%c0_6, %c0_7] : memref<128x128xf32, #tpu.memory_space<vmem>>, vector<128x128xf32>
    %cst_8 = arith.constant dense<0.000000e+00> : vector<8x128xf32>
    %9 = tpu.matmul %7, %8, %cst_8 {dimension_numbers = #tpu.dot_dimension_numbers<[1], [0], [0], [1], [0, 0, 1, 1], [], []>} : vector<8x128xf32>, vector<128x128xf32>, vector<8x128xf32> -> vector<8x128xf32>
    %c0_9 = arith.constant 0 : index
    %c0_10 = arith.constant 0 : index
    %10 = vector.load %arg5[%c0_9, %c0_10] : memref<1x128xf32, #tpu.memory_space<vmem>>, vector<1x128xf32>
    %11 = vector.broadcast %10 : vector<1x128xf32> to vector<8x128xf32>
    %12 = arith.addf %9, %11 : vector<8x128xf32>
    %cst_11 = arith.constant 0.000000e+00 : f32
    %13 = vector.broadcast %cst_11 : f32 to vector<8x128xf32>
    %14 = arith.maximumf %12, %13 : vector<8x128xf32>
    %c0_12 = arith.constant 0 : index
    %c0_13 = arith.constant 0 : index
    %15 = vector.load %arg6[%c0_12, %c0_13] : memref<128x128xf32, #tpu.memory_space<vmem>>, vector<128x128xf32>
    %cst_14 = arith.constant dense<0.000000e+00> : vector<8x128xf32>
    %16 = tpu.matmul %14, %15, %cst_14 {dimension_numbers = #tpu.dot_dimension_numbers<[1], [0], [0], [1], [0, 0, 1, 1], [], []>} : vector<8x128xf32>, vector<128x128xf32>, vector<8x128xf32> -> vector<8x128xf32>
    %c0_15 = arith.constant 0 : index
    %c0_16 = arith.constant 0 : index
    %17 = vector.load %arg7[%c0_15, %c0_16] : memref<1x128xf32, #tpu.memory_space<vmem>>, vector<1x128xf32>
    %18 = vector.broadcast %17 : vector<1x128xf32> to vector<8x128xf32>
    %19 = arith.addf %16, %18 : vector<8x128xf32>
    %c0_17 = arith.constant 0 : index
    %c0_18 = arith.constant 0 : index
    %20 = vector.load %arg8[%c0_17, %c0_18] : memref<8x128xf32, #tpu.memory_space<vmem>>, vector<8x128xf32>
    tpu.vector_store %arg8[%c0_17, %c0_18], %19 {strides = array<i32>} : memref<8x128xf32, #tpu.memory_space<vmem>>, vector<8x128xf32>,
    return
  }
  func.func @transform_0(%arg0: i32) -> (i32, i32) {
    %c0_i32 = arith.constant 0 : i32
    %c0_i32_0 = arith.constant 0 : i32
    return %arg0, %c0_i32 : i32, i32
  }
  func.func @transform_1(%arg0: i32) -> (i32, i32) {
    %c0_i32 = arith.constant 0 : i32
    %c0_i32_0 = arith.constant 0 : i32
    %c0_i32_1 = arith.constant 0 : i32
    return %c0_i32, %c0_i32_0 : i32, i32
  }
  func.func @transform_2(%arg0: i32) -> (i32, i32) {
    %c0_i32 = arith.constant 0 : i32
    %c0_i32_0 = arith.constant 0 : i32
    %c0_i32_1 = arith.constant 0 : i32
    return %c0_i32, %c0_i32_0 : i32, i32
  }
  func.func @transform_3(%arg0: i32) -> (i32, i32) {
    %c0_i32 = arith.constant 0 : i32
    %c0_i32_0 = arith.constant 0 : i32
    %c0_i32_1 = arith.constant 0 : i32
    return %c0_i32, %c0_i32_0 : i32, i32
  }
  func.func @transform_4(%arg0: i32) -> (i32, i32) {
    %c0_i32 = arith.constant 0 : i32
    %c0_i32_0 = arith.constant 0 : i32
    %c0_i32_1 = arith.constant 0 : i32
    return %c0_i32, %c0_i32_0 : i32, i32
  }
  func.func @transform_5(%arg0: i32) -> (i32, i32) {
    %c0_i32 = arith.constant 0 : i32
    %c0_i32_0 = arith.constant 0 : i32
    %c0_i32_1 = arith.constant 0 : i32
    return %c0_i32, %c0_i32_0 : i32, i32
  }
  func.func @transform_6(%arg0: i32) -> (i32, i32) {
    %c0_i32 = arith.constant 0 : i32
    %c0_i32_0 = arith.constant 0 : i32
    %c0_i32_1 = arith.constant 0 : i32
    return %c0_i32, %c0_i32_0 : i32, i32
  }
  func.func @transform_7(%arg0: i32) -> (i32, i32) {
    %c0_i32 = arith.constant 0 : i32
    %c0_i32_0 = arith.constant 0 : i32
    return %arg0, %c0_i32 : i32, i32
  }
}

</mosaic_0001>

<llo_original>
// kernel: fashion_class_forward.5
$region0: #{fashion_class_forward.5}
  #allocation0 [shape = 'u32[]', space=smem, size = 0x4, offset = 0x4, fixed_abs, tag = 'smem constant byte address 0x4 - core index']
  #allocation1 [shape = 'u32[72,128]{1,0:T(1,128)}', space=vmem, size = 0x9000, scoped, tag = 'internal scratch']
  %s0 = inlined_call_operand.vmem [shape: f32[8,400], index: 0, kind: input, shape index: {}]
  %s1 = inlined_call_operand.vmem [shape: f32[400,128], index: 1, kind: input, shape index: {}]
  %s2 = inlined_call_operand.vmem [shape: f32[1,128], index: 2, kind: input, shape index: {}]
  %s3 = inlined_call_operand.vmem [shape: f32[128,128], index: 3, kind: input, shape index: {}]
  %s4 = inlined_call_operand.vmem [shape: f32[1,128], index: 4, kind: input, shape index: {}]
  %s5 = inlined_call_operand.vmem [shape: f32[128,128], index: 5, kind: input, shape index: {}]
  %s6 = inlined_call_operand.vmem [shape: f32[1,128], index: 6, kind: input, shape index: {}]
  %s7 = inlined_call_operand.vmem [shape: f32[8,128], index: 7, kind: output, shape index: {}]
  %s8 = sld [smem:[#allocation0]]
  $region38: #{fashion_class_forward.5} parent=0
    _
  %s10 = ssub.s32 1, %s8
  %s11 = scalar_select 0, %s10, %s8
  // Predicated region
  $region2: #{fashion_class_forward.5} parent=0 // pred_check
    _
  $region3: #{fashion_class_forward.5} parent=0 // pred_check_branch
    %13 = sbr.rel (0) target = $region5
  $region4: #{fashion_class_forward.5} parent=0 // pred_region
    _
  $region5: #{fashion_class_forward.5} parent=0 // pred_fallthru
    _
  // Predicated region
  $region6: #{fashion_class_forward.5} parent=0 // pred_check
    _
  $region7: #{fashion_class_forward.5} parent=0 // pred_check_branch
    %15 = sbr.rel (0) target = $region9
  $region8: #{fashion_class_forward.5} parent=0 // pred_region
    _
  $region9: #{fashion_class_forward.5} parent=0 // pred_fallthru
    _
  // Predicated region
  $region10: #{fashion_class_forward.5} parent=0 // pred_check
    _
  $region11: #{fashion_class_forward.5} parent=0 // pred_check_branch
    %17 = sbr.rel (0) target = $region13
  $region12: #{fashion_class_forward.5} parent=0 // pred_region
    _
  $region13: #{fashion_class_forward.5} parent=0 // pred_fallthru
    _
  // Predicated region
  $region14: #{fashion_class_forward.5} parent=0 // pred_check
    _
  $region15: #{fashion_class_forward.5} parent=0 // pred_check_branch
    %19 = sbr.rel (0) target = $region17
  $region16: #{fashion_class_forward.5} parent=0 // pred_region
    _
  $region17: #{fashion_class_forward.5} parent=0 // pred_fallthru
    _
  // Predicated region
  $region18: #{fashion_class_forward.5} parent=0 // pred_check
    _
  $region19: #{fashion_class_forward.5} parent=0 // pred_check_branch
    %21 = sbr.rel (0) target = $region21
  $region20: #{fashion_class_forward.5} parent=0 // pred_region
    _
  $region21: #{fashion_class_forward.5} parent=0 // pred_fallthru
    _
  // Predicated region
  $region22: #{fashion_class_forward.5} parent=0 // pred_check
    _
  $region23: #{fashion_class_forward.5} parent=0 // pred_check_branch
    %23 = sbr.rel (0) target = $region25
  $region24: #{fashion_class_forward.5} parent=0 // pred_region
    _
  $region25: #{fashion_class_forward.5} parent=0 // pred_fallthru
    _
  // Predicated region
  $region26: #{fashion_class_forward.5} parent=0 // pred_check
    _
  $region27: #{fashion_class_forward.5} parent=0 // pred_check_branch
    %25 = sbr.rel (0) target = $region29
  $region28: #{fashion_class_forward.5} parent=0 // pred_region
    _
  $region29: #{fashion_class_forward.5} parent=0 // pred_fallthru
    _
  %v26 = vld [vmem:[%s0] sm:$0xff]
  %v27 = vld [vmem:[%s0 + $0x8] sm:$0xff]
  %v28 = vld [vmem:[%s0 + $0x10] sm:$0xff]
  %v29 = vld [vmem:[%s0 + $0x18] sm:$0xff]
  %v30 = vld [vmem:[%s1] sm:$0xff]
  %v31 = vld [vmem:[%s1 + $0x8] sm:$0xff]
  %v32 = vld [vmem:[%s1 + $0x10] sm:$0xff]
  %v33 = vld [vmem:[%s1 + $0x18] sm:$0xff]
  %v34 = vld [vmem:[%s1 + $0x20] sm:$0xff]
  %v35 = vld [vmem:[%s1 + $0x28] sm:$0xff]
  %v36 = vld [vmem:[%s1 + $0x30] sm:$0xff]
  %v37 = vld [vmem:[%s1 + $0x38] sm:$0xff]
  %v38 = vld [vmem:[%s1 + $0x40] sm:$0xff]
  %v39 = vld [vmem:[%s1 + $0x48] sm:$0xff]
  %v40 = vld [vmem:[%s1 + $0x50] sm:$0xff]
  %v41 = vld [vmem:[%s1 + $0x58] sm:$0xff]
  %v42 = vld [vmem:[%s1 + $0x60] sm:$0xff]
  %v43 = vld [vmem:[%s1 + $0x68] sm:$0xff]
  %v44 = vld [vmem:[%s1 + $0x70] sm:$0xff]
  %v45 = vld [vmem:[%s1 + $0x78] sm:$0xff]
  %v46 = vld [vmem:[%s1 + $0x80] sm:$0xff]
  %v47 = vld [vmem:[%s1 + $0x88] sm:$0xff]
  %v48 = vld [vmem:[%s1 + $0x90] sm:$0xff]
  %v49 = vld [vmem:[%s1 + $0x98] sm:$0xff]
  %v50 = vld [vmem:[%s1 + $0xa0] sm:$0xff]
  %v51 = vld [vmem:[%s1 + $0xa8] sm:$0xff]
  %v52 = vld [vmem:[%s1 + $0xb0] sm:$0xff]
  %v53 = vld [vmem:[%s1 + $0xb8] sm:$0xff]
  %v54 = vld [vmem:[%s1 + $0xc0] sm:$0xff]
  %v55 = vld [vmem:[%s1 + $0xc8] sm:$0xff]
  %v56 = vld [vmem:[%s1 + $0xd0] sm:$0xff]
  %v57 = vld [vmem:[%s1 + $0xd8] sm:$0xff]
  %v58 = vld [vmem:[%s1 + $0xe0] sm:$0xff]
  %v59 = vld [vmem:[%s1 + $0xe8] sm:$0xff]
  %v60 = vld [vmem:[%s1 + $0xf0] sm:$0xff]
  %v61 = vld [vmem:[%s1 + $0xf8] sm:$0xff]
  %v62 = vld [vmem:[%s1 + $0x100] sm:$0xff]
  %v63 = vld [vmem:[%s1 + $0x108] sm:$0xff]
  %v64 = vld [vmem:[%s1 + $0x110] sm:$0xff]
  %v65 = vld [vmem:[%s1 + $0x118] sm:$0xff]
  %v66 = vld [vmem:[%s1 + $0x120] sm:$0xff]
  %v67 = vld [vmem:[%s1 + $0x128] sm:$0xff]
  %v68 = vld [vmem:[%s1 + $0x130] sm:$0xff]
  %v69 = vld [vmem:[%s1 + $0x138] sm:$0xff]
  %v70 = vld [vmem:[%s1 + $0x140] sm:$0xff]
  %v71 = vld [vmem:[%s1 + $0x148] sm:$0xff]
  %v72 = vld [vmem:[%s1 + $0x150] sm:$0xff]
  %v73 = vld [vmem:[%s1 + $0x158] sm:$0xff]
  %v74 = vld [vmem:[%s1 + $0x160] sm:$0xff]
  %v75 = vld [vmem:[%s1 + $0x168] sm:$0xff]
  %v76 = vld [vmem:[%s1 + $0x170] sm:$0xff]
  %v77 = vld [vmem:[%s1 + $0x178] sm:$0xff]
  %v78 = vld [vmem:[%s1 + $0x180] sm:$0xff]
  %v79 = vld [vmem:[%s1 + $0x188] sm:$0xff]
  %v80 = vld [vmem:[%s2] sm:$0x1]
  %v82 = vperm.slane %v80, 0
  %vm84 = vcmask 130048
  %v86 = vsel %vm84, %v29, 0
  %88 = vmatpush.msra.mxu0 %v45
  %89 = vmatpush.msra.mxu0 %v44
  %90 = vmatpush.msra.mxu0 %v43
  %91 = vmatpush.msra.mxu0 %v42
  %92 = vmatpush.msra.mxu0 %v41
  %93 = vmatpush.msra.mxu0 %v40
  %94 = vmatpush.msra.mxu0 %v39
  %95 = vmatpush.msra.mxu0 %v38
  %96 = vmatpush.msra.mxu0 %v37
  %97 = vmatpush.msra.mxu0 %v36
  %98 = vmatpush.msra.mxu0 %v35
  %99 = vmatpush.msra.mxu0 %v34
  %100 = vmatpush.msra.mxu0 %v33
  %101 = vmatpush.msra.mxu0 %v32
  %102 = vmatpush.msra.mxu0 %v31
  %103 = vmatpush.msra.mxu0 %v30
  %104 = vmatmul.f32.gmra.mxu0 %v26
  %v105 = vpop.f32.mrf.mxu0
  %v106 = vadd.f32 %v82, %v105
  %107 = vdwg.mxu0
  %108 = vmatpush.msra.mxu0 %v61
  %109 = vmatpush.msra.mxu0 %v60
  %110 = vmatpush.msra.mxu0 %v59
  %111 = vmatpush.msra.mxu0 %v58
  %112 = vmatpush.msra.mxu0 %v57
  %113 = vmatpush.msra.mxu0 %v56
  %114 = vmatpush.msra.mxu0 %v55
  %115 = vmatpush.msra.mxu0 %v54
  %116 = vmatpush.msra.mxu0 %v53
  %117 = vmatpush.msra.mxu0 %v52
  %118 = vmatpush.msra.mxu0 %v51
  %119 = vmatpush.msra.mxu0 %v50
  %120 = vmatpush.msra.mxu0 %v49
  %121 = vmatpush.msra.mxu0 %v48
  %122 = vmatpush.msra.mxu0 %v47
  %123 = vmatpush.msra.mxu0 %v46
  %124 = vmatmul.f32.gmra.mxu0 %v27
  %v125 = vpop.f32.mrf.mxu0
  %v126 = vadd.f32 %v106, %v125
  %127 = vdwg.mxu0
  %128 = vmatpush.msra.mxu0 %v77
  %129 = vmatpush.msra.mxu0 %v76
  %130 = vmatpush.msra.mxu0 %v75
  %131 = vmatpush.msra.mxu0 %v74
  %132 = vmatpush.msra.mxu0 %v73
  %133 = vmatpush.msra.mxu0 %v72
  %134 = vmatpush.msra.mxu0 %v71
  %135 = vmatpush.msra.mxu0 %v70
  %136 = vmatpush.msra.mxu0 %v69
  %137 = vmatpush.msra.mxu0 %v68
  %138 = vmatpush.msra.mxu0 %v67
  %139 = vmatpush.msra.mxu0 %v66
  %140 = vmatpush.msra.mxu0 %v65
  %141 = vmatpush.msra.mxu0 %v64
  %142 = vmatpush.msra.mxu0 %v63
  %143 = vmatpush.msra.mxu0 %v62
  %144 = vmatmul.f32.gmra.mxu0 %v28
  %v145 = vpop.f32.mrf.mxu0
  %v146 = vadd.f32 %v126, %v145
  %147 = vdwg.mxu0
  %148 = vmatpush.msra.mxu0 0.0
  %149 = vmatpush.msra.mxu0 0.0
  %150 = vmatpush.msra.mxu0 0.0
  %151 = vmatpush.msra.mxu0 0.0
  %152 = vmatpush.msra.mxu0 0.0
  %153 = vmatpush.msra.mxu0 0.0
  %154 = vmatpush.msra.mxu0 0.0
  %155 = vmatpush.msra.mxu0 0.0
  %156 = vmatpush.msra.mxu0 0.0
  %157 = vmatpush.msra.mxu0 0.0
  %158 = vmatpush.msra.mxu0 0.0
  %159 = vmatpush.msra.mxu0 0.0
  %160 = vmatpush.msra.mxu0 0.0
  %161 = vmatpush.msra.mxu0 0.0
  %162 = vmatpush.msra.mxu0 %v79
  %163 = vmatpush.msra.mxu0 %v78
  %164 = vmatmul.f32.gmra.mxu0 %v86
  %v165 = vpop.f32.mrf.mxu0
  %v166 = vadd.f32 %v146, %v165
  %167 = vdwg.mxu0
  %v168 = vmax.f32 %v166, 0.0
  %v169 = vld [vmem:[%s3] sm:$0xff]
  %v170 = vld [vmem:[%s3 + $0x8] sm:$0xff]
  %v171 = vld [vmem:[%s3 + $0x10] sm:$0xff]
  %v172 = vld [vmem:[%s3 + $0x18] sm:$0xff]
  %v173 = vld [vmem:[%s3 + $0x20] sm:$0xff]
  %v174 = vld [vmem:[%s3 + $0x28] sm:$0xff]
  %v175 = vld [vmem:[%s3 + $0x30] sm:$0xff]
  %v176 = vld [vmem:[%s3 + $0x38] sm:$0xff]
  %v177 = vld [vmem:[%s3 + $0x40] sm:$0xff]
  %v178 = vld [vmem:[%s3 + $0x48] sm:$0xff]
  %v179 = vld [vmem:[%s3 + $0x50] sm:$0xff]
  %v180 = vld [vmem:[%s3 + $0x58] sm:$0xff]
  %v181 = vld [vmem:[%s3 + $0x60] sm:$0xff]
  %v182 = vld [vmem:[%s3 + $0x68] sm:$0xff]
  %v183 = vld [vmem:[%s3 + $0x70] sm:$0xff]
  %v184 = vld [vmem:[%s3 + $0x78] sm:$0xff]
  %v185 = vld [vmem:[%s4] sm:$0x1]
  %v187 = vperm.slane %v185, 0
  %189 = vmatpush.msra.mxu0 %v184
  %190 = vmatpush.msra.mxu0 %v183
  %191 = vmatpush.msra.mxu0 %v182
  %192 = vmatpush.msra.mxu0 %v181
  %193 = vmatpush.msra.mxu0 %v180
  %194 = vmatpush.msra.mxu0 %v179
  %195 = vmatpush.msra.mxu0 %v178
  %196 = vmatpush.msra.mxu0 %v177
  %197 = vmatpush.msra.mxu0 %v176
  %198 = vmatpush.msra.mxu0 %v175
  %199 = vmatpush.msra.mxu0 %v174
  %200 = vmatpush.msra.mxu0 %v173
  %201 = vmatpush.msra.mxu0 %v172
  %202 = vmatpush.msra.mxu0 %v171
  %203 = vmatpush.msra.mxu0 %v170
  %204 = vmatpush.msra.mxu0 %v169
  %205 = vmatmul.f32.gmra.mxu0 %v168
  %v206 = vpop.f32.mrf.mxu0
  %v207 = vadd.f32 %v187, %v206
  %208 = vdwg.mxu0
  %v209 = vmax.f32 %v207, 0.0
  %v210 = vld [vmem:[%s5] sm:$0xff]
  %v211 = vld [vmem:[%s5 + $0x8] sm:$0xff]
  %v212 = vld [vmem:[%s5 + $0x10] sm:$0xff]
  %v213 = vld [vmem:[%s5 + $0x18] sm:$0xff]
  %v214 = vld [vmem:[%s5 + $0x20] sm:$0xff]
  %v215 = vld [vmem:[%s5 + $0x28] sm:$0xff]
  %v216 = vld [vmem:[%s5 + $0x30] sm:$0xff]
  %v217 = vld [vmem:[%s5 + $0x38] sm:$0xff]
  %v218 = vld [vmem:[%s5 + $0x40] sm:$0xff]
  %v219 = vld [vmem:[%s5 + $0x48] sm:$0xff]
  %v220 = vld [vmem:[%s5 + $0x50] sm:$0xff]
  %v221 = vld [vmem:[%s5 + $0x58] sm:$0xff]
  %v222 = vld [vmem:[%s5 + $0x60] sm:$0xff]
  %v223 = vld [vmem:[%s5 + $0x68] sm:$0xff]
  %v224 = vld [vmem:[%s5 + $0x70] sm:$0xff]
  %v225 = vld [vmem:[%s5 + $0x78] sm:$0xff]
  %v226 = vld [vmem:[%s6] sm:$0x1]
  %v228 = vperm.slane %v226, 0
  %230 = vmatpush.msra.mxu0 %v225
  %231 = vmatpush.msra.mxu0 %v224
  %232 = vmatpush.msra.mxu0 %v223
  %233 = vmatpush.msra.mxu0 %v222
  %234 = vmatpush.msra.mxu0 %v221
  %235 = vmatpush.msra.mxu0 %v220
  %236 = vmatpush.msra.mxu0 %v219
  %237 = vmatpush.msra.mxu0 %v218
  %238 = vmatpush.msra.mxu0 %v217
  %239 = vmatpush.msra.mxu0 %v216
  %240 = vmatpush.msra.mxu0 %v215
  %241 = vmatpush.msra.mxu0 %v214
  %242 = vmatpush.msra.mxu0 %v213
  %243 = vmatpush.msra.mxu0 %v212
  %244 = vmatpush.msra.mxu0 %v211
  %245 = vmatpush.msra.mxu0 %v210
  %246 = vmatmul.f32.gmra.mxu0 %v209
  %v247 = vpop.f32.mrf.mxu0
  %v248 = vadd.f32 %v228, %v247
  %249 = vdwg.mxu0
  %250 = vst [vmem:[%s7] sm:$0xff] %v248
  // Predicated region
  $region30: #{fashion_class_forward.5} parent=0 // pred_check
    _
  $region31: #{fashion_class_forward.5} parent=0 // pred_check_branch
    %252 = sbr.rel (0) target = $region33
  $region32: #{fashion_class_forward.5} parent=0 // pred_region
    _
  $region33: #{fashion_class_forward.5} parent=0 // pred_fallthru
    _
  // Predicated region
  $region34: #{fashion_class_forward.5} parent=0 // pred_check
    _
  $region35: #{fashion_class_forward.5} parent=0 // pred_check_branch
    %254 = sbr.rel (0) target = $region37
  $region36: #{fashion_class_forward.5} parent=0 // pred_region
    _
  $region37: #{fashion_class_forward.5} parent=0 // pred_fallthru
    _

// kernel: fashion_class_forward.4
$region0: #{fashion_class_forward.4}
  #allocation0 [shape = 'u32[]', space=smem, size = 0x4, offset = 0x4, fixed_abs, tag = 'smem constant byte address 0x4 - core index']
  #allocation1 [shape = 'u32[72,128]{1,0:T(1,128)}', space=vmem, size = 0x9000, scoped, tag = 'internal scratch']
  #allocation2 [shape = 'f32[10,150]{1,0:T(8,128)}', space=vmem, size = 0x4000, scoped, tag = 'scratch operand']
  #allocation3 [shape = 'f32[10,16]{1,0:T(8,128)}', space=vmem, size = 0x2000, scoped, tag = 'scratch operand']
  %s0 = inlined_call_operand.vmem [shape: f32[2,14,14,6], index: 0, kind: input, shape index: {}]
  %s1 = inlined_call_operand.vmem [shape: f32[150,16], index: 1, kind: input, shape index: {}]
  %s2 = inlined_call_operand.vmem [shape: f32[1,16], index: 2, kind: input, shape index: {}]
  %s3 = inlined_call_operand.vmem [shape: f32[2,5,5,16], index: 3, kind: output, shape index: {}]
  %s4 = sld [smem:[#allocation0]]
  $region52: #{fashion_class_forward.4} parent=0
    _
  %s6 = ssub.s32 1, %s4
  %s7 = scalar_select 0, %s6, %s4
  loop: start=0, step=1, limit=4
  $region2: #{fashion_class_forward.4} parent=0 // loop_pre_header
    _
  $region3: #{fashion_class_forward.4} parent=0 // loop_header
    %s9 = sphi 0, %s13
    %p10 = scmp.ge.s32.totalorder %s9, 4
    %s19 = sphi 0, %s21
    %s22 = sphi 0, %s19
    %s23 = sphi 0, %s22
    %s39 = sphi 0, %s23
    %s43 = sphi 0, %s43
    %s45 = sphi 0, %s43
    %s46 = sphi 0, %s45
    %s60 = sphi 0, %s46
    %s64 = sphi 0, %s64
    %s66 = sphi 0, %s64
    %s67 = sphi 0, %s66
    %s81 = sphi 0, %s67
    %s87 = sphi 0, %s89
    %s90 = sphi 0, %s87
    %s91 = sphi 0, %s90
    %s107 = sphi 0, %s91
  $region4: #{fashion_class_forward.4} parent=0 // loop_header_branch
    %12 = sbr.rel (%p10) target = $region8
  $region5: #{fashion_class_forward.4} parent=0 // loop_body
    %s14 = ssub.s32 %s9, 1
    %s15 = ssub.s32 %s9, 2
    %s16 = sadd.s32 %s9, 1
    %s17 = ssub.s32 %s9, %s16
    %p18 = scmp.eq.s32.totalorder %s17, 0
    %s20 = sadd.s32 %s19, 1
    %s21 = scalar_select %p18, %s19, %s20
    %p24 = pneg %p18
    %p25 = scmp.eq.s32.totalorder %s9, 1
    %p26 = por %p24, %p25
    %p27 = scmp.ne.s32.totalorder %s19, %s22
    %p28 = scmp.eq.s32.totalorder %s9, 0
    %p29 = por %p27, %p28
    %p30 = scmp.ne.s32.totalorder %s19, %s22
    %p31 = scmp.eq.s32.totalorder %s14, 1
    %p32 = por %p30, %p31
    %p33 = scmp.ne.s32.totalorder %s22, %s23
    %p34 = scmp.eq.s32.totalorder %s14, 0
    %p35 = por %p33, %p34
    %p36 = scmp.ne.s32.totalorder %s22, %s23
    %p37 = scmp.eq.s32.totalorder %s15, 1
    %p38 = por %p36, %p37
    %p40 = scmp.ne.s32.totalorder %s23, %s39
    %p41 = scmp.eq.s32.totalorder %s15, 0
    %p42 = por %p40, %p41
    %s44 = sadd.s32 %s43, 1
    %p47 = scmp.eq.s32.totalorder %s9, 1
    %p48 = scmp.ne.s32.totalorder %s43, %s45
    %p49 = scmp.eq.s32.totalorder %s9, 0
    %p50 = por %p48, %p49
    %p51 = scmp.ne.s32.totalorder %s43, %s45
    %p52 = scmp.eq.s32.totalorder %s14, 1
    %p53 = por %p51, %p52
    %p54 = scmp.ne.s32.totalorder %s45, %s46
    %p55 = scmp.eq.s32.totalorder %s14, 0
    %p56 = por %p54, %p55
    %p57 = scmp.ne.s32.totalorder %s45, %s46
    %p58 = scmp.eq.s32.totalorder %s15, 1
    %p59 = por %p57, %p58
    %p61 = scmp.ne.s32.totalorder %s46, %s60
    %p62 = scmp.eq.s32.totalorder %s15, 0
    %p63 = por %p61, %p62
    %s65 = sadd.s32 %s64, 1
    %p68 = scmp.eq.s32.totalorder %s9, 1
    %p69 = scmp.ne.s32.totalorder %s64, %s66
    %p70 = scmp.eq.s32.totalorder %s9, 0
    %p71 = por %p69, %p70
    %p72 = scmp.ne.s32.totalorder %s64, %s66
    %p73 = scmp.eq.s32.totalorder %s14, 1
    %p74 = por %p72, %p73
    %p75 = scmp.ne.s32.totalorder %s66, %s67
    %p76 = scmp.eq.s32.totalorder %s14, 0
    %p77 = por %p75, %p76
    %p78 = scmp.ne.s32.totalorder %s66, %s67
    %p79 = scmp.eq.s32.totalorder %s15, 1
    %p80 = por %p78, %p79
    %p82 = scmp.ne.s32.totalorder %s67, %s81
    %p83 = scmp.eq.s32.totalorder %s15, 0
    %p84 = por %p82, %p83
    %s85 = ssub.s32 %s9, %s16
    %p86 = scmp.eq.s32.totalorder %s85, 0
    %s88 = sadd.s32 %s87, 1
    %s89 = scalar_select %p86, %s87, %s88
    %p92 = pneg %p86
    %p93 = scmp.eq.s32.totalorder %s9, 1
    %p94 = por %p92, %p93
    %p95 = scmp.ne.s32.totalorder %s87, %s90
    %p96 = scmp.eq.s32.totalorder %s9, 0
    %p97 = por %p95, %p96
    %p98 = scmp.ne.s32.totalorder %s87, %s90
    %p99 = scmp.eq.s32.totalorder %s14, 1
    %p100 = por %p98, %p99
    %p101 = scmp.ne.s32.totalorder %s90, %s91
    %p102 = scmp.eq.s32.totalorder %s14, 0
    %p103 = por %p101, %p102
    %p104 = scmp.ne.s32.totalorder %s90, %s91
    %p105 = scmp.eq.s32.totalorder %s15, 1
    %p106 = por %p104, %p105
    %p108 = scmp.ne.s32.totalorder %s91, %s107
    %p109 = scmp.eq.s32.totalorder %s15, 0
    %p110 = por %p108, %p109
    %p111 = scmp.le.s32.totalorder 1, %s9
    %p112 = scmp.lt.s32.totalorder %s9, 3
    %p113 = pnand %p111, %p112
    %p114 = pneg %p113
    // Predicated region
    $region9: #{fashion_class_forward.4} parent=5 // pred_check
      _
    $region10: #{fashion_class_forward.4} parent=5 // pred_check_branch
      %116 = sbr.rel (%p113) target = $region12
    $region11: #{fashion_class_forward.4} parent=5 // pred_region
      %s117 = ssub.s32 %s9, 1
      // Predicated region
      $region13: #{fashion_class_forward.4} parent=11 // pred_check
        %p118 = pneg %p56
      $region14: #{fashion_class_forward.4} parent=11 // pred_check_branch
        %120 = sbr.rel (%p118) target = $region16
      $region15: #{fashion_class_forward.4} parent=11 // pred_region
        _
      $region16: #{fashion_class_forward.4} parent=11 // pred_fallthru
        _
      // Predicated region
      $region17: #{fashion_class_forward.4} parent=11 // pred_check
        %p121 = pneg %p77
      $region18: #{fashion_class_forward.4} parent=11 // pred_check_branch
        %123 = sbr.rel (%p121) target = $region20
      $region19: #{fashion_class_forward.4} parent=11 // pred_region
        _
      $region20: #{fashion_class_forward.4} parent=11 // pred_fallthru
        _
    $region12: #{fashion_class_forward.4} parent=5 // pred_fallthru
      _
    %p124 = scmp.lt.s32.totalorder %s9, 2
    // Predicated region
    $region21: #{fashion_class_forward.4} parent=5 // pred_check
      %p125 = pneg %p124
    $region22: #{fashion_class_forward.4} parent=5 // pred_check_branch
      %127 = sbr.rel (%p125) target = $region24
    $region23: #{fashion_class_forward.4} parent=5 // pred_region
      // Predicated region
      $region25: #{fashion_class_forward.4} parent=23 // pred_check
        %p128 = pneg %p29
      $region26: #{fashion_class_forward.4} parent=23 // pred_check_branch
        %130 = sbr.rel (%p128) target = $region28
      $region27: #{fashion_class_forward.4} parent=23 // pred_region
        %p131 = scmp.lt.s32.totalorder %s9, 1
        %s132 = scalar_select %p131, %s9, 1
        %s133 = smul.addr %s132, 28
        %s134 = smul.addr %s133, 8
        %s135 = scalar_lea.vmem %s0, %s134
      $region28: #{fashion_class_forward.4} parent=23 // pred_fallthru
        _
    $region24: #{fashion_class_forward.4} parent=5 // pred_fallthru
      _
    %p136 = scmp.le.s32.totalorder 1, %s9
    %p137 = scmp.lt.s32.totalorder %s9, 3
    %p138 = pnand %p136, %p137
    %p139 = pneg %p138
    // Predicated region
    $region29: #{fashion_class_forward.4} parent=5 // pred_check
      _
    $region30: #{fashion_class_forward.4} parent=5 // pred_check_branch
      %141 = sbr.rel (%p138) target = $region32
    $region31: #{fashion_class_forward.4} parent=5 // pred_region
      %s142 = ssub.s32 %s9, 1
      %p143 = scmp.lt.s32.totalorder %s14, 1
      %s144 = scalar_select %p143, %s14, 1
      %s145 = smul.addr %s144, 28
      %s146 = smul.addr %s145, 8
      %s147 = scalar_lea.vmem %s0, %s146
      %p148 = pneg %p35
      %p149 = pneg %p32
      %p150 = pneg %p56
      %p151 = pneg %p53
      %p152 = pneg %p77
      %p153 = pneg %p74
      %p154 = pneg %p103
      %p155 = pneg %p100
      %p156 = scmp.lt.s32.totalorder %s14, 1
      %s157 = scalar_select %p156, %s14, 1
      %s158 = smul.addr %s157, 5
      %s159 = smul.addr %s158, 8
      %s160 = scalar_lea.vmem %s3, %s159
      %p161 = scmp.lt.s32.totalorder %s14, 1
      %s162 = scalar_select %p161, %s14, 1
      %s163 = smul.addr %s162, 28
      %s164 = smul.addr %s163, 8
      %s165 = scalar_lea.vmem %s0, %s164
      %p166 = scmp.lt.s32.totalorder %s14, 1
      %s167 = scalar_select %p166, %s14, 1
      %s168 = smul.addr %s167, 5
      %s169 = smul.addr %s168, 8
      %s170 = scalar_lea.vmem %s3, %s169
      loop: start=0, step=1, limit=5
      $region33: #{fashion_class_forward.4} parent=31 // loop_pre_header
        _
      $region34: #{fashion_class_forward.4} parent=31 // loop_header
        %s172 = sphi 0, %s176
        %p173 = scmp.ge.s32.totalorder %s172, 5
      $region35: #{fashion_class_forward.4} parent=31 // loop_header_branch
        %175 = sbr.rel (%p173) target = $region39
      $region36: #{fashion_class_forward.4} parent=31 // loop_body
        %s177 = smul.u32 %s172, 2
        %s178 = smul.u32 %s177, 16
        %s179 = scalar_lea.vmem %s165, %s178
        %v180 = vld [vmem:[%s179] sm:$0xff]
        %v181 = vld [vmem:[%s179 + $0x8] sm:$0x3]
        %vm182 = vcmask 48128
        %183 = vst.msk [vmem:[#allocation2] sm:$0xff] %vm182, %v180
        %vm184 = vcmask 41984
        %185 = vst.msk [vmem:[#allocation2 + $0x10] sm:$0x3] %vm184, %v181
        %v186 = vld [vmem:[%s179 + $0x1] sm:$0xff]
        %v187 = vld [vmem:[%s179 + $0x9] sm:$0x3]
        %190 = vrot.lane.b32.xlu0 %v186, 6
        %v191 = vpop.permute.xlu0 %190
        %192 = vrot.lane.b32.xlu0 %v187, 6
        %v193 = vpop.permute.xlu0 %192
        %vm196 = vcmask 97328
        %197 = vst.msk [vmem:[#allocation2] sm:$0xff] %vm196, %v191
        %vm198 = vcmask 91184
        %199 = vst.msk [vmem:[#allocation2 + $0x10] sm:$0x3] %vm198, %v193
        %v200 = vld [vmem:[%s179 + $0x2] sm:$0xff]
        %v201 = vld [vmem:[%s179 + $0xa] sm:$0x3]
        %204 = vrot.lane.b32.xlu0 %v200, 12
        %v205 = vpop.permute.xlu0 %204
        %206 = vrot.lane.b32.xlu0 %v201, 12
        %v207 = vpop.permute.xlu0 %206
        %vm210 = vcmask 146528
        %211 = vst.msk [vmem:[#allocation2] sm:$0xff] %vm210, %v205
        %vm212 = vcmask 140384
        %213 = vst.msk [vmem:[#allocation2 + $0x10] sm:$0x3] %vm212, %v207
        %v214 = vld [vmem:[%s179 + $0x3] sm:$0xff]
        %v215 = vld [vmem:[%s179 + $0xb] sm:$0x3]
        %218 = vrot.lane.b32.xlu0 %v214, 18
        %v219 = vpop.permute.xlu0 %218
        %220 = vrot.lane.b32.xlu0 %v215, 18
        %v221 = vpop.permute.xlu0 %220
        %vm224 = vcmask 195728
        %225 = vst.msk [vmem:[#allocation2] sm:$0xff] %vm224, %v219
        %vm226 = vcmask 189584
        %227 = vst.msk [vmem:[#allocation2 + $0x10] sm:$0x3] %vm226, %v221
        %v228 = vld [vmem:[%s179 + $0x4] sm:$0xff]
        %v229 = vld [vmem:[%s179 + $0xc] sm:$0x3]
        %232 = vrot.lane.b32.xlu0 %v228, 24
        %v233 = vpop.permute.xlu0 %232
        %234 = vrot.lane.b32.xlu0 %v229, 24
        %v235 = vpop.permute.xlu0 %234
        %vm238 = vcmask 244928
        %239 = vst.msk [vmem:[#allocation2] sm:$0xff] %vm238, %v233
        %vm240 = vcmask 238784
        %241 = vst.msk [vmem:[#allocation2 + $0x10] sm:$0x3] %vm240, %v235
        %s242 = sadd.s32 %s177, 1
        %s243 = smul.u32 %s242, 16
        %s244 = scalar_lea.vmem %s165, %s243
        %v245 = vld [vmem:[%s244] sm:$0xff]
        %v246 = vld [vmem:[%s244 + $0x8] sm:$0x3]
        %249 = vrot.lane.b32.xlu0 %v245, 30
        %v250 = vpop.permute.xlu0 %249
        %251 = vrot.lane.b32.xlu0 %v246, 30
        %v252 = vpop.permute.xlu0 %251
        %vm255 = vcmask 294128
        %256 = vst.msk [vmem:[#allocation2] sm:$0xff] %vm255, %v250
        %vm257 = vcmask 287984
        %258 = vst.msk [vmem:[#allocation2 + $0x10] sm:$0x3] %vm257, %v252
        %v259 = vld [vmem:[%s244 + $0x1] sm:$0xff]
        %v260 = vld [vmem:[%s244 + $0x9] sm:$0x3]
        %263 = vrot.lane.b32.xlu0 %v259, 36
        %v264 = vpop.permute.xlu0 %263
        %265 = vrot.lane.b32.xlu0 %v260, 36
        %v266 = vpop.permute.xlu0 %265
        %vm269 = vcmask 343328
        %270 = vst.msk [vmem:[#allocation2] sm:$0xff] %vm269, %v264
        %vm271 = vcmask 337184
        %272 = vst.msk [vmem:[#allocation2 + $0x10] sm:$0x3] %vm271, %v266
        %v273 = vld [vmem:[%s244 + $0x2] sm:$0xff]
        %v274 = vld [vmem:[%s244 + $0xa] sm:$0x3]
        %277 = vrot.lane.b32.xlu0 %v273, 42
        %v278 = vpop.permute.xlu0 %277
        %279 = vrot.lane.b32.xlu0 %v274, 42
        %v280 = vpop.permute.xlu0 %279
        %vm283 = vcmask 392528
        %284 = vst.msk [vmem:[#allocation2] sm:$0xff] %vm283, %v278
        %vm285 = vcmask 386384
        %286 = vst.msk [vmem:[#allocation2 + $0x10] sm:$0x3] %vm285, %v280
        %v287 = vld [vmem:[%s244 + $0x3] sm:$0xff]
        %v288 = vld [vmem:[%s244 + $0xb] sm:$0x3]
        %291 = vrot.lane.b32.xlu0 %v287, 48
        %v292 = vpop.permute.xlu0 %291
        %293 = vrot.lane.b32.xlu0 %v288, 48
        %v294 = vpop.permute.xlu0 %293
        %vm297 = vcmask 441728
        %298 = vst.msk [vmem:[#allocation2] sm:$0xff] %vm297, %v292
        %vm299 = vcmask 435584
        %300 = vst.msk [vmem:[#allocation2 + $0x10] sm:$0x3] %vm299, %v294
        %v301 = vld [vmem:[%s244 + $0x4] sm:$0xff]
        %v302 = vld [vmem:[%s244 + $0xc] sm:$0x3]
        %305 = vrot.lane.b32.xlu0 %v301, 54
        %v306 = vpop.permute.xlu0 %305
        %307 = vrot.lane.b32.xlu0 %v302, 54
        %v308 = vpop.permute.xlu0 %307
        %vm311 = vcmask 490928
        %312 = vst.msk [vmem:[#allocation2] sm:$0xff] %vm311, %v306
        %vm313 = vcmask 484784
        %314 = vst.msk [vmem:[#allocation2 + $0x10] sm:$0x3] %vm313, %v308
        %s315 = sadd.s32 %s177, 2
        %s316 = smul.u32 %s315, 16
        %s317 = scalar_lea.vmem %s165, %s316
        %v318 = vld [vmem:[%s317] sm:$0xff]
        %v319 = vld [vmem:[%s317 + $0x8] sm:$0x3]
        %322 = vrot.lane.b32.xlu0 %v318, 60
        %v323 = vpop.permute.xlu0 %322
        %324 = vrot.lane.b32.xlu0 %v319, 60
        %v325 = vpop.permute.xlu0 %324
        %vm328 = vcmask 540128
        %329 = vst.msk [vmem:[#allocation2] sm:$0xff] %vm328, %v323
        %vm330 = vcmask 533984
        %331 = vst.msk [vmem:[#allocation2 + $0x10] sm:$0x3] %vm330, %v325
        %v332 = vld [vmem:[%s317 + $0x1] sm:$0xff]
        %v333 = vld [vmem:[%s317 + $0x9] sm:$0x3]
        %336 = vrot.lane.b32.xlu0 %v332, 66
        %v337 = vpop.permute.xlu0 %336
        %338 = vrot.lane.b32.xlu0 %v333, 66
        %v339 = vpop.permute.xlu0 %338
        %vm342 = vcmask 589328
        %343 = vst.msk [vmem:[#allocation2] sm:$0xff] %vm342, %v337
        %vm344 = vcmask 583184
        %345 = vst.msk [vmem:[#allocation2 + $0x10] sm:$0x3] %vm344, %v339
        %v346 = vld [vmem:[%s317 + $0x2] sm:$0xff]
        %v347 = vld [vmem:[%s317 + $0xa] sm:$0x3]
        %350 = vrot.lane.b32.xlu0 %v346, 72
        %v351 = vpop.permute.xlu0 %350
        %352 = vrot.lane.b32.xlu0 %v347, 72
        %v353 = vpop.permute.xlu0 %352
        %vm356 = vcmask 638528
        %357 = vst.msk [vmem:[#allocation2] sm:$0xff] %vm356, %v351
        %vm358 = vcmask 632384
        %359 = vst.msk [vmem:[#allocation2 + $0x10] sm:$0x3] %vm358, %v353
        %v360 = vld [vmem:[%s317 + $0x3] sm:$0xff]
        %v361 = vld [vmem:[%s317 + $0xb] sm:$0x3]
        %364 = vrot.lane.b32.xlu0 %v360, 78
        %v365 = vpop.permute.xlu0 %364
        %366 = vrot.lane.b32.xlu0 %v361, 78
        %v367 = vpop.permute.xlu0 %366
        %vm370 = vcmask 687728
        %371 = vst.msk [vmem:[#allocation2] sm:$0xff] %vm370, %v365
        %vm372 = vcmask 681584
        %373 = vst.msk [vmem:[#allocation2 + $0x10] sm:$0x3] %vm372, %v367
        %v374 = vld [vmem:[%s317 + $0x4] sm:$0xff]
        %v375 = vld [vmem:[%s317 + $0xc] sm:$0x3]
        %378 = vrot.lane.b32.xlu0 %v374, 84
        %v379 = vpop.permute.xlu0 %378
        %380 = vrot.lane.b32.xlu0 %v375, 84
        %v381 = vpop.permute.xlu0 %380
        %vm384 = vcmask 736928
        %385 = vst.msk [vmem:[#allocation2] sm:$0xff] %vm384, %v379
        %vm386 = vcmask 730784
        %387 = vst.msk [vmem:[#allocation2 + $0x10] sm:$0x3] %vm386, %v381
        %s388 = sadd.s32 %s177, 3
        %s389 = smul.u32 %s388, 16
        %s390 = scalar_lea.vmem %s165, %s389
        %v391 = vld [vmem:[%s390] sm:$0xff]
        %v392 = vld [vmem:[%s390 + $0x8] sm:$0x3]
        %395 = vrot.lane.b32.xlu0 %v391, 90
        %v396 = vpop.permute.xlu0 %395
        %397 = vrot.lane.b32.xlu0 %v392, 90
        %v398 = vpop.permute.xlu0 %397
        %vm401 = vcmask 786128
        %402 = vst.msk [vmem:[#allocation2] sm:$0xff] %vm401, %v396
        %vm403 = vcmask 779984
        %404 = vst.msk [vmem:[#allocation2 + $0x10] sm:$0x3] %vm403, %v398
        %v405 = vld [vmem:[%s390 + $0x1] sm:$0xff]
        %v406 = vld [vmem:[%s390 + $0x9] sm:$0x3]
        %409 = vrot.lane.b32.xlu0 %v405, 96
        %v410 = vpop.permute.xlu0 %409
        %411 = vrot.lane.b32.xlu0 %v406, 96
        %v412 = vpop.permute.xlu0 %411
        %vm415 = vcmask 835328
        %416 = vst.msk [vmem:[#allocation2] sm:$0xff] %vm415, %v410
        %vm417 = vcmask 829184
        %418 = vst.msk [vmem:[#allocation2 + $0x10] sm:$0x3] %vm417, %v412
        %v419 = vld [vmem:[%s390 + $0x2] sm:$0xff]
        %v420 = vld [vmem:[%s390 + $0xa] sm:$0x3]
        %423 = vrot.lane.b32.xlu0 %v419, 102
        %v424 = vpop.permute.xlu0 %423
        %425 = vrot.lane.b32.xlu0 %v420, 102
        %v426 = vpop.permute.xlu0 %425
        %vm429 = vcmask 884528
        %430 = vst.msk [vmem:[#allocation2] sm:$0xff] %vm429, %v424
        %vm431 = vcmask 878384
        %432 = vst.msk [vmem:[#allocation2 + $0x10] sm:$0x3] %vm431, %v426
        %v433 = vld [vmem:[%s390 + $0x3] sm:$0xff]
        %v434 = vld [vmem:[%s390 + $0xb] sm:$0x3]
        %437 = vrot.lane.b32.xlu0 %v433, 108
        %v438 = vpop.permute.xlu0 %437
        %439 = vrot.lane.b32.xlu0 %v434, 108
        %v440 = vpop.permute.xlu0 %439
        %vm443 = vcmask 933728
        %444 = vst.msk [vmem:[#allocation2] sm:$0xff] %vm443, %v438
        %vm445 = vcmask 927584
        %446 = vst.msk [vmem:[#allocation2 + $0x10] sm:$0x3] %vm445, %v440
        %v447 = vld [vmem:[%s390 + $0x4] sm:$0xff]
        %v448 = vld [vmem:[%s390 + $0xc] sm:$0x3]
        %451 = vrot.lane.b32.xlu0 %v447, 114
        %v452 = vpop.permute.xlu0 %451
        %453 = vrot.lane.b32.xlu0 %v448, 114
        %v454 = vpop.permute.xlu0 %453
        %vm457 = vcmask 982928
        %458 = vst.msk [vmem:[#allocation2] sm:$0xff] %vm457, %v452
        %vm459 = vcmask 976784
        %460 = vst.msk [vmem:[#allocation2 + $0x10] sm:$0x3] %vm459, %v454
        %s461 = sadd.s32 %s177, 4
        %s462 = smul.u32 %s461, 16
        %s463 = scalar_lea.vmem %s165, %s462
        %v464 = vld [vmem:[%s463] sm:$0xff]
        %v465 = vld [vmem:[%s463 + $0x8] sm:$0x3]
        %468 = vrot.lane.b32.xlu0 %v464, 120
        %v469 = vpop.permute.xlu0 %468
        %470 = vrot.lane.b32.xlu0 %v465, 120
        %v471 = vpop.permute.xlu0 %470
        %vm474 = vcmask 1032128
        %475 = vst.msk [vmem:[#allocation2] sm:$0xff] %vm474, %v469
        %vm476 = vcmask 1025984
        %477 = vst.msk [vmem:[#allocation2 + $0x10] sm:$0x3] %vm476, %v471
        %v478 = vld [vmem:[%s463 + $0x1] sm:$0xff]
        %v479 = vld [vmem:[%s463 + $0x9] sm:$0x3]
        %482 = vrot.lane.b32.xlu0 %v478, 126
        %v483 = vpop.permute.xlu0 %482
        %484 = vrot.lane.b32.xlu0 %v479, 126
        %v485 = vpop.permute.xlu0 %484
        %vm488 = vcmask 1048560
        %489 = vst.msk [vmem:[#allocation2] sm:$0xff] %vm488, %v483
        %vm490 = vcmask 31744
        %491 = vst.msk [vmem:[#allocation2 + $0x8] sm:$0xff] %vm490, %v483
        %vm492 = vcmask 1042416
        %493 = vst.msk [vmem:[#allocation2 + $0x10] sm:$0x3] %vm492, %v485
        %vm494 = vcmask 25600
        %495 = vst.msk [vmem:[#allocation2 + $0x18] sm:$0x3] %vm494, %v485
        %v496 = vld [vmem:[%s463 + $0x2] sm:$0xff]
        %v497 = vld [vmem:[%s463 + $0xa] sm:$0x3]
        %500 = vrot.lane.b32.xlu0 %v496, 4
        %v501 = vpop.permute.xlu0 %500
        %502 = vrot.lane.b32.xlu0 %v497, 4
        %v503 = vpop.permute.xlu0 %502
        %vm506 = vcmask 80928
        %507 = vst.msk [vmem:[#allocation2 + $0x8] sm:$0xff] %vm506, %v501
        %vm508 = vcmask 74784
        %509 = vst.msk [vmem:[#allocation2 + $0x18] sm:$0x3] %vm508, %v503
        %v510 = vld [vmem:[%s463 + $0x3] sm:$0xff]
        %v511 = vld [vmem:[%s463 + $0xb] sm:$0x3]
        %514 = vrot.lane.b32.xlu0 %v510, 10
        %v515 = vpop.permute.xlu0 %514
        %516 = vrot.lane.b32.xlu0 %v511, 10
        %v517 = vpop.permute.xlu0 %516
        %vm520 = vcmask 130128
        %521 = vst.msk [vmem:[#allocation2 + $0x8] sm:$0xff] %vm520, %v515
        %vm522 = vcmask 123984
        %523 = vst.msk [vmem:[#allocation2 + $0x18] sm:$0x3] %vm522, %v517
        %v524 = vld [vmem:[%s463 + $0x4] sm:$0xff]
        %v525 = vld [vmem:[%s463 + $0xc] sm:$0x3]
        %528 = vrot.lane.b32.xlu0 %v524, 16
        %v529 = vpop.permute.xlu0 %528
        %530 = vrot.lane.b32.xlu0 %v525, 16
        %v531 = vpop.permute.xlu0 %530
        %vm534 = vcmask 179328
        %535 = vst.msk [vmem:[#allocation2 + $0x8] sm:$0xff] %vm534, %v529
        %vm536 = vcmask 173184
        %537 = vst.msk [vmem:[#allocation2 + $0x18] sm:$0x3] %vm536, %v531
        %v538 = vld [vmem:[#allocation2] sm:$0xff]
        %v539 = vld [vmem:[#allocation2 + $0x8] sm:$0xff]
        %v540 = vld [vmem:[#allocation2 + $0x10] sm:$0x3]
        %v541 = vld [vmem:[#allocation2 + $0x18] sm:$0x3]
        %v542 = vld [vmem:[%s1] sm:$0xff]
        %v543 = vld [vmem:[%s1 + $0x8] sm:$0xff]
        %v544 = vld [vmem:[%s1 + $0x10] sm:$0xff]
        %v545 = vld [vmem:[%s1 + $0x18] sm:$0xff]
        %v546 = vld [vmem:[%s1 + $0x20] sm:$0xff]
        %v547 = vld [vmem:[%s1 + $0x28] sm:$0xff]
        %v548 = vld [vmem:[%s1 + $0x30] sm:$0xff]
        %v549 = vld [vmem:[%s1 + $0x38] sm:$0xff]
        %v550 = vld [vmem:[%s1 + $0x40] sm:$0xff]
        %v551 = vld [vmem:[%s1 + $0x48] sm:$0xff]
        %v552 = vld [vmem:[%s1 + $0x50] sm:$0xff]
        %v553 = vld [vmem:[%s1 + $0x58] sm:$0xff]
        %v554 = vld [vmem:[%s1 + $0x60] sm:$0xff]
        %v555 = vld [vmem:[%s1 + $0x68] sm:$0xff]
        %v556 = vld [vmem:[%s1 + $0x70] sm:$0xff]
        %v557 = vld [vmem:[%s1 + $0x78] sm:$0xff]
        %v558 = vld [vmem:[%s1 + $0x80] sm:$0xff]
        %v559 = vld [vmem:[%s1 + $0x88] sm:$0xff]
        %v560 = vld [vmem:[%s1 + $0x90] sm:$0x3f]
        %v561 = vld [vmem:[%s2] sm:$0x1]
        %v563 = vperm.slane %v561, 0
        %vm565 = vcmask 179200
        %v567 = vsel %vm565, %v539, 0
        %v570 = vsel %vm565, %v541, 0
        %vm572 = vcmask 1045504
        %v574 = vsel %vm572, %v560, 0
        %576 = vmatpush.msra.mxu0 %v557
        %577 = vmatpush.msra.mxu0 %v556
        %578 = vmatpush.msra.mxu0 %v555
        %579 = vmatpush.msra.mxu0 %v554
        %580 = vmatpush.msra.mxu0 %v553
        %581 = vmatpush.msra.mxu0 %v552
        %582 = vmatpush.msra.mxu0 %v551
        %583 = vmatpush.msra.mxu0 %v550
        %584 = vmatpush.msra.mxu0 %v549
        %585 = vmatpush.msra.mxu0 %v548
        %586 = vmatpush.msra.mxu0 %v547
        %587 = vmatpush.msra.mxu0 %v546
        %588 = vmatpush.msra.mxu0 %v545
        %589 = vmatpush.msra.mxu0 %v544
        %590 = vmatpush.msra.mxu0 %v543
        %591 = vmatpush.msra.mxu0 %v542
        %592 = vmatmul.f32.gmra.mxu0 %v538
        %v593 = vpop.f32.mrf.mxu0
        %v594 = vadd.f32 %v563, %v593
        %595 = vmatmul.f32.gmra.mxu0 %v540
        %v596 = vpop.f32.mrf.mxu0
        %v597 = vadd.f32 %v563, %v596
        %598 = vdwg.mxu0
        %599 = vmatpush.msra.mxu0 0.0
        %600 = vmatpush.msra.mxu0 0.0
        %601 = vmatpush.msra.mxu0 0.0
        %602 = vmatpush.msra.mxu0 0.0
        %603 = vmatpush.msra.mxu0 0.0
        %604 = vmatpush.msra.mxu0 0.0
        %605 = vmatpush.msra.mxu0 0.0
        %606 = vmatpush.msra.mxu0 0.0
        %607 = vmatpush.msra.mxu0 0.0
        %608 = vmatpush.msra.mxu0 0.0
        %609 = vmatpush.msra.mxu0 0.0
        %610 = vmatpush.msra.mxu0 0.0
        %611 = vmatpush.msra.mxu0 0.0
        %612 = vmatpush.msra.mxu0 %v574
        %613 = vmatpush.msra.mxu0 %v559
        %614 = vmatpush.msra.mxu0 %v558
        %615 = vmatmul.f32.gmra.mxu0 %v567
        %v616 = vpop.f32.mrf.mxu0
        %v617 = vadd.f32 %v594, %v616
        %618 = vmatmul.f32.gmra.mxu0 %v570
        %v619 = vpop.f32.mrf.mxu0
        %v620 = vadd.f32 %v597, %v619
        %621 = vdwg.mxu0
        %v622 = vmax.f32 %v617, 0.0
        %v623 = vmax.f32 %v620, 0.0
        %v624 = vld [vmem:[%s244] sm:$0xff]
        %v625 = vld [vmem:[%s244 + $0x8] sm:$0x3]
        %626 = vst.msk [vmem:[#allocation2] sm:$0xff] %vm182, %v624
        %627 = vst.msk [vmem:[#allocation2 + $0x10] sm:$0x3] %vm184, %v625
        %v628 = vld [vmem:[%s244 + $0x1] sm:$0xff]
        %v629 = vld [vmem:[%s244 + $0x9] sm:$0x3]
        %632 = vrot.lane.b32.xlu0 %v628, 6
        %v633 = vpop.permute.xlu0 %632
        %634 = vrot.lane.b32.xlu0 %v629, 6
        %v635 = vpop.permute.xlu0 %634
        %638 = vst.msk [vmem:[#allocation2] sm:$0xff] %vm196, %v633
        %639 = vst.msk [vmem:[#allocation2 + $0x10] sm:$0x3] %vm198, %v635
        %v640 = vld [vmem:[%s244 + $0x2] sm:$0xff]
        %v641 = vld [vmem:[%s244 + $0xa] sm:$0x3]
        %644 = vrot.lane.b32.xlu0 %v640, 12
        %v645 = vpop.permute.xlu0 %644
        %646 = vrot.lane.b32.xlu0 %v641, 12
        %v647 = vpop.permute.xlu0 %646
        %650 = vst.msk [vmem:[#allocation2] sm:$0xff] %vm210, %v645
        %651 = vst.msk [vmem:[#allocation2 + $0x10] sm:$0x3] %vm212, %v647
        %v652 = vld [vmem:[%s244 + $0x3] sm:$0xff]
        %v653 = vld [vmem:[%s244 + $0xb] sm:$0x3]
        %656 = vrot.lane.b32.xlu0 %v652, 18
        %v657 = vpop.permute.xlu0 %656
        %658 = vrot.lane.b32.xlu0 %v653, 18
        %v659 = vpop.permute.xlu0 %658
        %662 = vst.msk [vmem:[#allocation2] sm:$0xff] %vm224, %v657
        %663 = vst.msk [vmem:[#allocation2 + $0x10] sm:$0x3] %vm226, %v659
        %v664 = vld [vmem:[%s244 + $0x4] sm:$0xff]
        %v665 = vld [vmem:[%s244 + $0xc] sm:$0x3]
        %668 = vrot.lane.b32.xlu0 %v664, 24
        %v669 = vpop.permute.xlu0 %668
        %670 = vrot.lane.b32.xlu0 %v665, 24
        %v671 = vpop.permute.xlu0 %670
        %674 = vst.msk [vmem:[#allocation2] sm:$0xff] %vm238, %v669
        %675 = vst.msk [vmem:[#allocation2 + $0x10] sm:$0x3] %vm240, %v671
        %v676 = vld [vmem:[%s317] sm:$0xff]
        %v677 = vld [vmem:[%s317 + $0x8] sm:$0x3]
        %680 = vrot.lane.b32.xlu0 %v676, 30
        %v681 = vpop.permute.xlu0 %680
        %682 = vrot.lane.b32.xlu0 %v677, 30
        %v683 = vpop.permute.xlu0 %682
        %686 = vst.msk [vmem:[#allocation2] sm:$0xff] %vm255, %v681
        %687 = vst.msk [vmem:[#allocation2 + $0x10] sm:$0x3] %vm257, %v683
        %v688 = vld [vmem:[%s317 + $0x1] sm:$0xff]
        %v689 = vld [vmem:[%s317 + $0x9] sm:$0x3]
        %692 = vrot.lane.b32.xlu0 %v688, 36
        %v693 = vpop.permute.xlu0 %692
        %694 = vrot.lane.b32.xlu0 %v689, 36
        %v695 = vpop.permute.xlu0 %694
        %698 = vst.msk [vmem:[#allocation2] sm:$0xff] %vm269, %v693
        %699 = vst.msk [vmem:[#allocation2 + $0x10] sm:$0x3] %vm271, %v695
        %v700 = vld [vmem:[%s317 + $0x2] sm:$0xff]
        %v701 = vld [vmem:[%s317 + $0xa] sm:$0x3]
        %704 = vrot.lane.b32.xlu0 %v700, 42
        %v705 = vpop.permute.xlu0 %704
        %706 = vrot.lane.b32.xlu0 %v701, 42
        %v707 = vpop.permute.xlu0 %706
        %710 = vst.msk [vmem:[#allocation2] sm:$0xff] %vm283, %v705
        %711 = vst.msk [vmem:[#allocation2 + $0x10] sm:$0x3] %vm285, %v707
        %v712 = vld [vmem:[%s317 + $0x3] sm:$0xff]
        %v713 = vld [vmem:[%s317 + $0xb] sm:$0x3]
        %716 = vrot.lane.b32.xlu0 %v712, 48
        %v717 = vpop.permute.xlu0 %716
        %718 = vrot.lane.b32.xlu0 %v713, 48
        %v719 = vpop.permute.xlu0 %718
        %722 = vst.msk [vmem:[#allocation2] sm:$0xff] %vm297, %v717
        %723 = vst.msk [vmem:[#allocation2 + $0x10] sm:$0x3] %vm299, %v719
        %v724 = vld [vmem:[%s317 + $0x4] sm:$0xff]
        %v725 = vld [vmem:[%s317 + $0xc] sm:$0x3]
        %728 = vrot.lane.b32.xlu0 %v724, 54
        %v729 = vpop.permute.xlu0 %728
        %730 = vrot.lane.b32.xlu0 %v725, 54
        %v731 = vpop.permute.xlu0 %730
        %734 = vst.msk [vmem:[#allocation2] sm:$0xff] %vm311, %v729
        %735 = vst.msk [vmem:[#allocation2 + $0x10] sm:$0x3] %vm313, %v731
        %v736 = vld [vmem:[%s390] sm:$0xff]
        %v737 = vld [vmem:[%s390 + $0x8] sm:$0x3]
        %740 = vrot.lane.b32.xlu0 %v736, 60
        %v741 = vpop.permute.xlu0 %740
        %742 = vrot.lane.b32.xlu0 %v737, 60
        %v743 = vpop.permute.xlu0 %742
        %746 = vst.msk [vmem:[#allocation2] sm:$0xff] %vm328, %v741
        %747 = vst.msk [vmem:[#allocation2 + $0x10] sm:$0x3] %vm330, %v743
        %v748 = vld [vmem:[%s390 + $0x1] sm:$0xff]
        %v749 = vld [vmem:[%s390 + $0x9] sm:$0x3]
        %752 = vrot.lane.b32.xlu0 %v748, 66
        %v753 = vpop.permute.xlu0 %752
        %754 = vrot.lane.b32.xlu0 %v749, 66
        %v755 = vpop.permute.xlu0 %754
        %758 = vst.msk [vmem:[#allocation2] sm:$0xff] %vm342, %v753
        %759 = vst.msk [vmem:[#allocation2 + $0x10] sm:$0x3] %vm344, %v755
        %v760 = vld [vmem:[%s390 + $0x2] sm:$0xff]
        %v761 = vld [vmem:[%s390 + $0xa] sm:$0x3]
        %764 = vrot.lane.b32.xlu0 %v760, 72
        %v765 = vpop.permute.xlu0 %764
        %766 = vrot.lane.b32.xlu0 %v761, 72
        %v767 = vpop.permute.xlu0 %766
        %770 = vst.msk [vmem:[#allocation2] sm:$0xff] %vm356, %v765
        %771 = vst.msk [vmem:[#allocation2 + $0x10] sm:$0x3] %vm358, %v767
        %v772 = vld [vmem:[%s390 + $0x3] sm:$0xff]
        %v773 = vld [vmem:[%s390 + $0xb] sm:$0x3]
        %776 = vrot.lane.b32.xlu0 %v772, 78
        %v777 = vpop.permute.xlu0 %776
        %778 = vrot.lane.b32.xlu0 %v773, 78
        %v779 = vpop.permute.xlu0 %778
        %782 = vst.msk [vmem:[#allocation2] sm:$0xff] %vm370, %v777
        %783 = vst.msk [vmem:[#allocation2 + $0x10] sm:$0x3] %vm372, %v779
        %v784 = vld [vmem:[%s390 + $0x4] sm:$0xff]
        %v785 = vld [vmem:[%s390 + $0xc] sm:$0x3]
        %788 = vrot.lane.b32.xlu0 %v784, 84
        %v789 = vpop.permute.xlu0 %788
        %790 = vrot.lane.b32.xlu0 %v785, 84
        %v791 = vpop.permute.xlu0 %790
        %794 = vst.msk [vmem:[#allocation2] sm:$0xff] %vm384, %v789
        %795 = vst.msk [vmem:[#allocation2 + $0x10] sm:$0x3] %vm386, %v791
        %v796 = vld [vmem:[%s463] sm:$0xff]
        %v797 = vld [vmem:[%s463 + $0x8] sm:$0x3]
        %800 = vrot.lane.b32.xlu0 %v796, 90
        %v801 = vpop.permute.xlu0 %800
        %802 = vrot.lane.b32.xlu0 %v797, 90
        %v803 = vpop.permute.xlu0 %802
        %806 = vst.msk [vmem:[#allocation2] sm:$0xff] %vm401, %v801
        %807 = vst.msk [vmem:[#allocation2 + $0x10] sm:$0x3] %vm403, %v803
        %v808 = vld [vmem:[%s463 + $0x1] sm:$0xff]
        %v809 = vld [vmem:[%s463 + $0x9] sm:$0x3]
        %812 = vrot.lane.b32.xlu0 %v808, 96
        %v813 = vpop.permute.xlu0 %812
        %814 = vrot.lane.b32.xlu0 %v809, 96
        %v815 = vpop.permute.xlu0 %814
        %818 = vst.msk [vmem:[#allocation2] sm:$0xff] %vm415, %v813
        %819 = vst.msk [vmem:[#allocation2 + $0x10] sm:$0x3] %vm417, %v815
        %v820 = vld [vmem:[%s463 + $0x2] sm:$0xff]
        %v821 = vld [vmem:[%s463 + $0xa] sm:$0x3]
        %824 = vrot.lane.b32.xlu0 %v820, 102
        %v825 = vpop.permute.xlu0 %824
        %826 = vrot.lane.b32.xlu0 %v821, 102
        %v827 = vpop.permute.xlu0 %826
        %830 = vst.msk [vmem:[#allocation2] sm:$0xff] %vm429, %v825
        %831 = vst.msk [vmem:[#allocation2 + $0x10] sm:$0x3] %vm431, %v827
        %v832 = vld [vmem:[%s463 + $0x3] sm:$0xff]
        %v833 = vld [vmem:[%s463 + $0xb] sm:$0x3]
        %836 = vrot.lane.b32.xlu0 %v832, 108
        %v837 = vpop.permute.xlu0 %836
        %838 = vrot.lane.b32.xlu0 %v833, 108
        %v839 = vpop.permute.xlu0 %838
        %842 = vst.msk [vmem:[#allocation2] sm:$0xff] %vm443, %v837
        %843 = vst.msk [vmem:[#allocation2 + $0x10] sm:$0x3] %vm445, %v839
        %v844 = vld [vmem:[%s463 + $0x4] sm:$0xff]
        %v845 = vld [vmem:[%s463 + $0xc] sm:$0x3]
        %848 = vrot.lane.b32.xlu0 %v844, 114
        %v849 = vpop.permute.xlu0 %848
        %850 = vrot.lane.b32.xlu0 %v845, 114
        %v851 = vpop.permute.xlu0 %850
        %854 = vst.msk [vmem:[#allocation2] sm:$0xff] %vm457, %v849
        %855 = vst.msk [vmem:[#allocation2 + $0x10] sm:$0x3] %vm459, %v851
        %s856 = sadd.s32 %s177, 5
        %s857 = smul.u32 %s856, 16
        %s858 = scalar_lea.vmem %s165, %s857
        %v859 = vld [vmem:[%s858] sm:$0xff]
        %v860 = vld [vmem:[%s858 + $0x8] sm:$0x3]
        %863 = vrot.lane.b32.xlu0 %v859, 120
        %v864 = vpop.permute.xlu0 %863
        %865 = vrot.lane.b32.xlu0 %v860, 120
        %v866 = vpop.permute.xlu0 %865
        %869 = vst.msk [vmem:[#allocation2] sm:$0xff] %vm474, %v864
        %870 = vst.msk [vmem:[#allocation2 + $0x10] sm:$0x3] %vm476, %v866
        %v871 = vld [vmem:[%s858 + $0x1] sm:$0xff]
        %v872 = vld [vmem:[%s858 + $0x9] sm:$0x3]
        %875 = vrot.lane.b32.xlu0 %v871, 126
        %v876 = vpop.permute.xlu0 %875
        %877 = vrot.lane.b32.xlu0 %v872, 126
        %v878 = vpop.permute.xlu0 %877
        %881 = vst.msk [vmem:[#allocation2] sm:$0xff] %vm488, %v876
        %882 = vst.msk [vmem:[#allocation2 + $0x8] sm:$0xff] %vm490, %v876
        %883 = vst.msk [vmem:[#allocation2 + $0x10] sm:$0x3] %vm492, %v878
        %884 = vst.msk [vmem:[#allocation2 + $0x18] sm:$0x3] %vm494, %v878
        %v885 = vld [vmem:[%s858 + $0x2] sm:$0xff]
        %v886 = vld [vmem:[%s858 + $0xa] sm:$0x3]
        %889 = vrot.lane.b32.xlu0 %v885, 4
        %v890 = vpop.permute.xlu0 %889
        %891 = vrot.lane.b32.xlu0 %v886, 4
        %v892 = vpop.permute.xlu0 %891
        %895 = vst.msk [vmem:[#allocation2 + $0x8] sm:$0xff] %vm506, %v890
        %896 = vst.msk [vmem:[#allocation2 + $0x18] sm:$0x3] %vm508, %v892
        %v897 = vld [vmem:[%s858 + $0x3] sm:$0xff]
        %v898 = vld [vmem:[%s858 + $0xb] sm:$0x3]
        %901 = vrot.lane.b32.xlu0 %v897, 10
        %v902 = vpop.permute.xlu0 %901
        %903 = vrot.lane.b32.xlu0 %v898, 10
        %v904 = vpop.permute.xlu0 %903
        %907 = vst.msk [vmem:[#allocation2 + $0x8] sm:$0xff] %vm520, %v902
        %908 = vst.msk [vmem:[#allocation2 + $0x18] sm:$0x3] %vm522, %v904
        %v909 = vld [vmem:[%s858 + $0x4] sm:$0xff]
        %v910 = vld [vmem:[%s858 + $0xc] sm:$0x3]
        %913 = vrot.lane.b32.xlu0 %v909, 16
        %v914 = vpop.permute.xlu0 %913
        %915 = vrot.lane.b32.xlu0 %v910, 16
        %v916 = vpop.permute.xlu0 %915
        %919 = vst.msk [vmem:[#allocation2 + $0x8] sm:$0xff] %vm534, %v914
        %920 = vst.msk [vmem:[#allocation2 + $0x18] sm:$0x3] %vm536, %v916
        %v921 = vld [vmem:[#allocation2] sm:$0xff]
        %v922 = vld [vmem:[#allocation2 + $0x8] sm:$0xff]
        %v923 = vld [vmem:[#allocation2 + $0x10] sm:$0x3]
        %v924 = vld [vmem:[#allocation2 + $0x18] sm:$0x3]
        %v925 = vld [vmem:[%s1] sm:$0xff]
        %v926 = vld [vmem:[%s1 + $0x8] sm:$0xff]
        %v927 = vld [vmem:[%s1 + $0x10] sm:$0xff]
        %v928 = vld [vmem:[%s1 + $0x18] sm:$0xff]
        %v929 = vld [vmem:[%s1 + $0x20] sm:$0xff]
        %v930 = vld [vmem:[%s1 + $0x28] sm:$0xff]
        %v931 = vld [vmem:[%s1 + $0x30] sm:$0xff]
        %v932 = vld [vmem:[%s1 + $0x38] sm:$0xff]
        %v933 = vld [vmem:[%s1 + $0x40] sm:$0xff]
        %v934 = vld [vmem:[%s1 + $0x48] sm:$0xff]
        %v935 = vld [vmem:[%s1 + $0x50] sm:$0xff]
        %v936 = vld [vmem:[%s1 + $0x58] sm:$0xff]
        %v937 = vld [vmem:[%s1 + $0x60] sm:$0xff]
        %v938 = vld [vmem:[%s1 + $0x68] sm:$0xff]
        %v939 = vld [vmem:[%s1 + $0x70] sm:$0xff]
        %v940 = vld [vmem:[%s1 + $0x78] sm:$0xff]
        %v941 = vld [vmem:[%s1 + $0x80] sm:$0xff]
        %v942 = vld [vmem:[%s1 + $0x88] sm:$0xff]
        %v943 = vld [vmem:[%s1 + $0x90] sm:$0x3f]
        %v944 = vld [vmem:[%s2] sm:$0x1]
        %v946 = vperm.slane %v944, 0
        %v949 = vsel %vm565, %v922, 0
        %v952 = vsel %vm565, %v924, 0
        %v955 = vsel %vm572, %v943, 0
        %957 = vmatpush.msra.mxu0 %v940
        %958 = vmatpush.msra.mxu0 %v939
        %959 = vmatpush.msra.mxu0 %v938
        %960 = vmatpush.msra.mxu0 %v937
        %961 = vmatpush.msra.mxu0 %v936
        %962 = vmatpush.msra.mxu0 %v935
        %963 = vmatpush.msra.mxu0 %v934
        %964 = vmatpush.msra.mxu0 %v933
        %965 = vmatpush.msra.mxu0 %v932
        %966 = vmatpush.msra.mxu0 %v931
        %967 = vmatpush.msra.mxu0 %v930
        %968 = vmatpush.msra.mxu0 %v929
        %969 = vmatpush.msra.mxu0 %v928
        %970 = vmatpush.msra.mxu0 %v927
        %971 = vmatpush.msra.mxu0 %v926
        %972 = vmatpush.msra.mxu0 %v925
        %973 = vmatmul.f32.gmra.mxu0 %v921
        %v974 = vpop.f32.mrf.mxu0
        %v975 = vadd.f32 %v946, %v974
        %976 = vmatmul.f32.gmra.mxu0 %v923
        %v977 = vpop.f32.mrf.mxu0
        %v978 = vadd.f32 %v946, %v977
        %979 = vdwg.mxu0
        %980 = vmatpush.msra.mxu0 0.0
        %981 = vmatpush.msra.mxu0 0.0
        %982 = vmatpush.msra.mxu0 0.0
        %983 = vmatpush.msra.mxu0 0.0
        %984 = vmatpush.msra.mxu0 0.0
        %985 = vmatpush.msra.mxu0 0.0
        %986 = vmatpush.msra.mxu0 0.0
        %987 = vmatpush.msra.mxu0 0.0
        %988 = vmatpush.msra.mxu0 0.0
        %989 = vmatpush.msra.mxu0 0.0
        %990 = vmatpush.msra.mxu0 0.0
        %991 = vmatpush.msra.mxu0 0.0
        %992 = vmatpush.msra.mxu0 0.0
        %993 = vmatpush.msra.mxu0 %v955
        %994 = vmatpush.msra.mxu0 %v942
        %995 = vmatpush.msra.mxu0 %v941
        %996 = vmatmul.f32.gmra.mxu0 %v949
        %v997 = vpop.f32.mrf.mxu0
        %v998 = vadd.f32 %v975, %v997
        %999 = vmatmul.f32.gmra.mxu0 %v952
        %v1000 = vpop.f32.mrf.mxu0
        %v1001 = vadd.f32 %v978, %v1000
        %1002 = vdwg.mxu0
        %v1003 = vmax.f32 %v998, 0.0
        %v1004 = vmax.f32 %v1001, 0.0
        %v1005 = vmax.f32 %v622, %v1003
        %v1006 = vmax.f32 %v623, %v1004
        %vm1007 = vcmask 130048
        %1008 = vst.msk [vmem:[#allocation3] sm:$0xff] %vm1007, %v1005
        %vm1009 = vcmask 123904
        %1010 = vst.msk [vmem:[#allocation3 + $0x8] sm:$0x3] %vm1009, %v1006
        %v1011 = vld [vmem:[#allocation3] ss:$2 sm:$0x1f]
        %s1012 = scalar_lea.vmem [#allocation3], 1
        %v1013 = vld [vmem:[%s1012] ss:$2 sm:$0x1f]
        %v1014 = vmax.f32 %v1011, %v1013
        %s1015 = smul.u32 %s172, 8
        %s1016 = scalar_lea.vmem %s170, %s1015
        %vm1017 = vcmask 126976
        %1018 = vst.msk [vmem:[%s1016] sm:$0x1f] %vm1017, %v1014
      $region37: #{fashion_class_forward.4} parent=31 // loop_footer
        %s176 = sadd.s32 1, %s172
      $region38: #{fashion_class_forward.4} parent=31 // loop_footer_branch
        %171 = sbr.rel target = $region34
      $region39: #{fashion_class_forward.4} parent=31 // loop_exit
        _
      %p1019 = scmp.lt.s32.totalorder %s14, 1
      %s1020 = scalar_select %p1019, %s14, 1
      %s1021 = smul.addr %s1020, 5
      %s1022 = smul.addr %s1021, 8
      %s1023 = scalar_lea.vmem %s3, %s1022
      // Predicated region
      $region40: #{fashion_class_forward.4} parent=31 // pred_check
        %p1024 = pneg %p100
      $region41: #{fashion_class_forward.4} parent=31 // pred_check_branch
        %1026 = sbr.rel (%p1024) target = $region43
      $region42: #{fashion_class_forward.4} parent=31 // pred_region
        _
      $region43: #{fashion_class_forward.4} parent=31 // pred_fallthru
        _
    $region32: #{fashion_class_forward.4} parent=5 // pred_fallthru
      _
    %p1027 = scmp.le.s32.totalorder 2, %s9
    // Predicated region
    $region44: #{fashion_class_forward.4} parent=5 // pred_check
      %p1028 = pneg %p1027
    $region45: #{fashion_class_forward.4} parent=5 // pred_check_branch
      %1030 = sbr.rel (%p1028) target = $region47
    $region46: #{fashion_class_forward.4} parent=5 // pred_region
      %s1031 = ssub.s32 %s9, 2
      // Predicated region
      $region48: #{fashion_class_forward.4} parent=46 // pred_check
        %p1032 = pneg %p106
      $region49: #{fashion_class_forward.4} parent=46 // pred_check_branch
        %1034 = sbr.rel (%p1032) target = $region51
      $region50: #{fashion_class_forward.4} parent=46 // pred_region
        %p1035 = scmp.lt.s32.totalorder %s15, 1
        %s1036 = scalar_select %p1035, %s15, 1
        %s1037 = smul.addr %s1036, 5
        %s1038 = smul.addr %s1037, 8
        %s1039 = scalar_lea.vmem %s3, %s1038
      $region51: #{fashion_class_forward.4} parent=46 // pred_fallthru
        _
    $region47: #{fashion_class_forward.4} parent=5 // pred_fallthru
      _
  $region6: #{fashion_class_forward.4} parent=0 // loop_footer
    %s13 = sadd.s32 1, %s9
  $region7: #{fashion_class_forward.4} parent=0 // loop_footer_branch
    %8 = sbr.rel target = $region3
  $region8: #{fashion_class_forward.4} parent=0 // loop_exit
    _

// kernel: fashion_class_forward.3
$region0: #{fashion_class_forward.3}
  #allocation0 [shape = 'u32[]', space=smem, size = 0x4, offset = 0x4, fixed_abs, tag = 'smem constant byte address 0x4 - core index']
  #allocation1 [shape = 'u32[72,128]{1,0:T(1,128)}', space=vmem, size = 0x9000, scoped, tag = 'internal scratch']
  #allocation2 [shape = 'f32[28,25]{1,0:T(8,128)}', space=vmem, size = 0x4000, scoped, tag = 'scratch operand']
  #allocation3 [shape = 'f32[28,6]{1,0:T(8,128)}', space=vmem, size = 0x4000, scoped, tag = 'scratch operand']
  %s0 = inlined_call_operand.vmem [shape: f32[2,32,32,1], index: 0, kind: input, shape index: {}]
  %s1 = inlined_call_operand.vmem [shape: f32[25,6], index: 1, kind: input, shape index: {}]
  %s2 = inlined_call_operand.vmem [shape: f32[1,6], index: 2, kind: input, shape index: {}]
  %s3 = inlined_call_operand.vmem [shape: f32[2,14,14,6], index: 3, kind: output, shape index: {}]
  %s4 = sld [smem:[#allocation0]]
  $region52: #{fashion_class_forward.3} parent=0
    _
  %s6 = ssub.s32 1, %s4
  %s7 = scalar_select 0, %s6, %s4
  loop: start=0, step=1, limit=4
  $region2: #{fashion_class_forward.3} parent=0 // loop_pre_header
    _
  $region3: #{fashion_class_forward.3} parent=0 // loop_header
    %s9 = sphi 0, %s13
    %p10 = scmp.ge.s32.totalorder %s9, 4
    %s19 = sphi 0, %s21
    %s22 = sphi 0, %s19
    %s23 = sphi 0, %s22
    %s39 = sphi 0, %s23
    %s43 = sphi 0, %s43
    %s45 = sphi 0, %s43
    %s46 = sphi 0, %s45
    %s60 = sphi 0, %s46
    %s64 = sphi 0, %s64
    %s66 = sphi 0, %s64
    %s67 = sphi 0, %s66
    %s81 = sphi 0, %s67
    %s87 = sphi 0, %s89
    %s90 = sphi 0, %s87
    %s91 = sphi 0, %s90
    %s107 = sphi 0, %s91
  $region4: #{fashion_class_forward.3} parent=0 // loop_header_branch
    %12 = sbr.rel (%p10) target = $region8
  $region5: #{fashion_class_forward.3} parent=0 // loop_body
    %s14 = ssub.s32 %s9, 1
    %s15 = ssub.s32 %s9, 2
    %s16 = sadd.s32 %s9, 1
    %s17 = ssub.s32 %s9, %s16
    %p18 = scmp.eq.s32.totalorder %s17, 0
    %s20 = sadd.s32 %s19, 1
    %s21 = scalar_select %p18, %s19, %s20
    %p24 = pneg %p18
    %p25 = scmp.eq.s32.totalorder %s9, 1
    %p26 = por %p24, %p25
    %p27 = scmp.ne.s32.totalorder %s19, %s22
    %p28 = scmp.eq.s32.totalorder %s9, 0
    %p29 = por %p27, %p28
    %p30 = scmp.ne.s32.totalorder %s19, %s22
    %p31 = scmp.eq.s32.totalorder %s14, 1
    %p32 = por %p30, %p31
    %p33 = scmp.ne.s32.totalorder %s22, %s23
    %p34 = scmp.eq.s32.totalorder %s14, 0
    %p35 = por %p33, %p34
    %p36 = scmp.ne.s32.totalorder %s22, %s23
    %p37 = scmp.eq.s32.totalorder %s15, 1
    %p38 = por %p36, %p37
    %p40 = scmp.ne.s32.totalorder %s23, %s39
    %p41 = scmp.eq.s32.totalorder %s15, 0
    %p42 = por %p40, %p41
    %s44 = sadd.s32 %s43, 1
    %p47 = scmp.eq.s32.totalorder %s9, 1
    %p48 = scmp.ne.s32.totalorder %s43, %s45
    %p49 = scmp.eq.s32.totalorder %s9, 0
    %p50 = por %p48, %p49
    %p51 = scmp.ne.s32.totalorder %s43, %s45
    %p52 = scmp.eq.s32.totalorder %s14, 1
    %p53 = por %p51, %p52
    %p54 = scmp.ne.s32.totalorder %s45, %s46
    %p55 = scmp.eq.s32.totalorder %s14, 0
    %p56 = por %p54, %p55
    %p57 = scmp.ne.s32.totalorder %s45, %s46
    %p58 = scmp.eq.s32.totalorder %s15, 1
    %p59 = por %p57, %p58
    %p61 = scmp.ne.s32.totalorder %s46, %s60
    %p62 = scmp.eq.s32.totalorder %s15, 0
    %p63 = por %p61, %p62
    %s65 = sadd.s32 %s64, 1
    %p68 = scmp.eq.s32.totalorder %s9, 1
    %p69 = scmp.ne.s32.totalorder %s64, %s66
    %p70 = scmp.eq.s32.totalorder %s9, 0
    %p71 = por %p69, %p70
    %p72 = scmp.ne.s32.totalorder %s64, %s66
    %p73 = scmp.eq.s32.totalorder %s14, 1
    %p74 = por %p72, %p73
    %p75 = scmp.ne.s32.totalorder %s66, %s67
    %p76 = scmp.eq.s32.totalorder %s14, 0
    %p77 = por %p75, %p76
    %p78 = scmp.ne.s32.totalorder %s66, %s67
    %p79 = scmp.eq.s32.totalorder %s15, 1
    %p80 = por %p78, %p79
    %p82 = scmp.ne.s32.totalorder %s67, %s81
    %p83 = scmp.eq.s32.totalorder %s15, 0
    %p84 = por %p82, %p83
    %s85 = ssub.s32 %s9, %s16
    %p86 = scmp.eq.s32.totalorder %s85, 0
    %s88 = sadd.s32 %s87, 1
    %s89 = scalar_select %p86, %s87, %s88
    %p92 = pneg %p86
    %p93 = scmp.eq.s32.totalorder %s9, 1
    %p94 = por %p92, %p93
    %p95 = scmp.ne.s32.totalorder %s87, %s90
    %p96 = scmp.eq.s32.totalorder %s9, 0
    %p97 = por %p95, %p96
    %p98 = scmp.ne.s32.totalorder %s87, %s90
    %p99 = scmp.eq.s32.totalorder %s14, 1
    %p100 = por %p98, %p99
    %p101 = scmp.ne.s32.totalorder %s90, %s91
    %p102 = scmp.eq.s32.totalorder %s14, 0
    %p103 = por %p101, %p102
    %p104 = scmp.ne.s32.totalorder %s90, %s91
    %p105 = scmp.eq.s32.totalorder %s15, 1
    %p106 = por %p104, %p105
    %p108 = scmp.ne.s32.totalorder %s91, %s107
    %p109 = scmp.eq.s32.totalorder %s15, 0
    %p110 = por %p108, %p109
    %p111 = scmp.le.s32.totalorder 1, %s9
    %p112 = scmp.lt.s32.totalorder %s9, 3
    %p113 = pnand %p111, %p112
    %p114 = pneg %p113
    // Predicated region
    $region9: #{fashion_class_forward.3} parent=5 // pred_check
      _
    $region10: #{fashion_class_forward.3} parent=5 // pred_check_branch
      %116 = sbr.rel (%p113) target = $region12
    $region11: #{fashion_class_forward.3} parent=5 // pred_region
      %s117 = ssub.s32 %s9, 1
      // Predicated region
      $region13: #{fashion_class_forward.3} parent=11 // pred_check
        %p118 = pneg %p56
      $region14: #{fashion_class_forward.3} parent=11 // pred_check_branch
        %120 = sbr.rel (%p118) target = $region16
      $region15: #{fashion_class_forward.3} parent=11 // pred_region
        _
      $region16: #{fashion_class_forward.3} parent=11 // pred_fallthru
        _
      // Predicated region
      $region17: #{fashion_class_forward.3} parent=11 // pred_check
        %p121 = pneg %p77
      $region18: #{fashion_class_forward.3} parent=11 // pred_check_branch
        %123 = sbr.rel (%p121) target = $region20
      $region19: #{fashion_class_forward.3} parent=11 // pred_region
        _
      $region20: #{fashion_class_forward.3} parent=11 // pred_fallthru
        _
    $region12: #{fashion_class_forward.3} parent=5 // pred_fallthru
      _
    %p124 = scmp.lt.s32.totalorder %s9, 2
    // Predicated region
    $region21: #{fashion_class_forward.3} parent=5 // pred_check
      %p125 = pneg %p124
    $region22: #{fashion_class_forward.3} parent=5 // pred_check_branch
      %127 = sbr.rel (%p125) target = $region24
    $region23: #{fashion_class_forward.3} parent=5 // pred_region
      // Predicated region
      $region25: #{fashion_class_forward.3} parent=23 // pred_check
        %p128 = pneg %p29
      $region26: #{fashion_class_forward.3} parent=23 // pred_check_branch
        %130 = sbr.rel (%p128) target = $region28
      $region27: #{fashion_class_forward.3} parent=23 // pred_region
        %p131 = scmp.lt.s32.totalorder %s9, 1
        %s132 = scalar_select %p131, %s9, 1
        %s133 = smul.addr %s132, 128
        %s134 = smul.addr %s133, 8
        %s135 = scalar_lea.vmem %s0, %s134
      $region28: #{fashion_class_forward.3} parent=23 // pred_fallthru
        _
    $region24: #{fashion_class_forward.3} parent=5 // pred_fallthru
      _
    %p136 = scmp.le.s32.totalorder 1, %s9
    %p137 = scmp.lt.s32.totalorder %s9, 3
    %p138 = pnand %p136, %p137
    %p139 = pneg %p138
    // Predicated region
    $region29: #{fashion_class_forward.3} parent=5 // pred_check
      _
    $region30: #{fashion_class_forward.3} parent=5 // pred_check_branch
      %141 = sbr.rel (%p138) target = $region32
    $region31: #{fashion_class_forward.3} parent=5 // pred_region
      %s142 = ssub.s32 %s9, 1
      %p143 = scmp.lt.s32.totalorder %s14, 1
      %s144 = scalar_select %p143, %s14, 1
      %s145 = smul.addr %s144, 128
      %s146 = smul.addr %s145, 8
      %s147 = scalar_lea.vmem %s0, %s146
      %p148 = pneg %p35
      %p149 = pneg %p32
      %p150 = pneg %p56
      %p151 = pneg %p53
      %p152 = pneg %p77
      %p153 = pneg %p74
      %p154 = pneg %p103
      %p155 = pneg %p100
      %p156 = scmp.lt.s32.totalorder %s14, 1
      %s157 = scalar_select %p156, %s14, 1
      %s158 = smul.addr %s157, 28
      %s159 = smul.addr %s158, 8
      %s160 = scalar_lea.vmem %s3, %s159
      %p161 = scmp.lt.s32.totalorder %s14, 1
      %s162 = scalar_select %p161, %s14, 1
      %s163 = smul.addr %s162, 128
      %s164 = smul.addr %s163, 8
      %s165 = scalar_lea.vmem %s0, %s164
      %p166 = scmp.lt.s32.totalorder %s14, 1
      %s167 = scalar_select %p166, %s14, 1
      %s168 = smul.addr %s167, 28
      %s169 = smul.addr %s168, 8
      %s170 = scalar_lea.vmem %s3, %s169
      loop: start=0, step=1, limit=14
      $region33: #{fashion_class_forward.3} parent=31 // loop_pre_header
        _
      $region34: #{fashion_class_forward.3} parent=31 // loop_header
        %s172 = sphi 0, %s176
        %p173 = scmp.ge.s32.totalorder %s172, 14
      $region35: #{fashion_class_forward.3} parent=31 // loop_header_branch
        %175 = sbr.rel (%p173) target = $region39
      $region36: #{fashion_class_forward.3} parent=31 // loop_body
        %s177 = smul.u32 %s172, 2
        %s178 = smul.u32 %s177, 32
        %s179 = scalar_lea.vmem %s165, %s178
        %v180 = vld [vmem:[%s179] sm:$0xff]
        %v181 = vld [vmem:[%s179 + $0x8] sm:$0xff]
        %v182 = vld [vmem:[%s179 + $0x10] sm:$0xff]
        %v183 = vld [vmem:[%s179 + $0x18] sm:$0xf]
        %vm184 = vcmask 7168
        %185 = vst.msk [vmem:[#allocation2] sm:$0xff] %vm184, %v180
        %186 = vst.msk [vmem:[#allocation2 + $0x8] sm:$0xff] %vm184, %v181
        %187 = vst.msk [vmem:[#allocation2 + $0x10] sm:$0xff] %vm184, %v182
        %vm188 = vcmask 3072
        %189 = vst.msk [vmem:[#allocation2 + $0x18] sm:$0xf] %vm188, %v183
        %v190 = vld [vmem:[%s179 + $0x1] sm:$0xff]
        %v191 = vld [vmem:[%s179 + $0x9] sm:$0xff]
        %v192 = vld [vmem:[%s179 + $0x11] sm:$0xff]
        %v193 = vld [vmem:[%s179 + $0x19] sm:$0xf]
        %198 = vrot.lane.b32.xlu0 %v190, 1
        %v199 = vpop.permute.xlu0 %198
        %200 = vrot.lane.b32.xlu0 %v191, 1
        %v201 = vpop.permute.xlu0 %200
        %202 = vrot.lane.b32.xlu0 %v192, 1
        %v203 = vpop.permute.xlu0 %202
        %204 = vrot.lane.b32.xlu0 %v193, 1
        %v205 = vpop.permute.xlu0 %204
        %vm210 = vcmask 15368
        %211 = vst.msk [vmem:[#allocation2] sm:$0xff] %vm210, %v199
        %212 = vst.msk [vmem:[#allocation2 + $0x8] sm:$0xff] %vm210, %v201
        %213 = vst.msk [vmem:[#allocation2 + $0x10] sm:$0xff] %vm210, %v203
        %vm214 = vcmask 11272
        %215 = vst.msk [vmem:[#allocation2 + $0x18] sm:$0xf] %vm214, %v205
        %v216 = vld [vmem:[%s179 + $0x2] sm:$0xff]
        %v217 = vld [vmem:[%s179 + $0xa] sm:$0xff]
        %v218 = vld [vmem:[%s179 + $0x12] sm:$0xff]
        %v219 = vld [vmem:[%s179 + $0x1a] sm:$0xf]
        %224 = vrot.lane.b32.xlu0 %v216, 2
        %v225 = vpop.permute.xlu0 %224
        %226 = vrot.lane.b32.xlu0 %v217, 2
        %v227 = vpop.permute.xlu0 %226
        %228 = vrot.lane.b32.xlu0 %v218, 2
        %v229 = vpop.permute.xlu0 %228
        %230 = vrot.lane.b32.xlu0 %v219, 2
        %v231 = vpop.permute.xlu0 %230
        %vm236 = vcmask 23568
        %237 = vst.msk [vmem:[#allocation2] sm:$0xff] %vm236, %v225
        %238 = vst.msk [vmem:[#allocation2 + $0x8] sm:$0xff] %vm236, %v227
        %239 = vst.msk [vmem:[#allocation2 + $0x10] sm:$0xff] %vm236, %v229
        %vm240 = vcmask 19472
        %241 = vst.msk [vmem:[#allocation2 + $0x18] sm:$0xf] %vm240, %v231
        %v242 = vld [vmem:[%s179 + $0x3] sm:$0xff]
        %v243 = vld [vmem:[%s179 + $0xb] sm:$0xff]
        %v244 = vld [vmem:[%s179 + $0x13] sm:$0xff]
        %v245 = vld [vmem:[%s179 + $0x1b] sm:$0xf]
        %250 = vrot.lane.b32.xlu0 %v242, 3
        %v251 = vpop.permute.xlu0 %250
        %252 = vrot.lane.b32.xlu0 %v243, 3
        %v253 = vpop.permute.xlu0 %252
        %254 = vrot.lane.b32.xlu0 %v244, 3
        %v255 = vpop.permute.xlu0 %254
        %256 = vrot.lane.b32.xlu0 %v245, 3
        %v257 = vpop.permute.xlu0 %256
        %vm262 = vcmask 31768
        %263 = vst.msk [vmem:[#allocation2] sm:$0xff] %vm262, %v251
        %264 = vst.msk [vmem:[#allocation2 + $0x8] sm:$0xff] %vm262, %v253
        %265 = vst.msk [vmem:[#allocation2 + $0x10] sm:$0xff] %vm262, %v255
        %vm266 = vcmask 27672
        %267 = vst.msk [vmem:[#allocation2 + $0x18] sm:$0xf] %vm266, %v257
        %v268 = vld [vmem:[%s179 + $0x4] sm:$0xff]
        %v269 = vld [vmem:[%s179 + $0xc] sm:$0xff]
        %v270 = vld [vmem:[%s179 + $0x14] sm:$0xff]
        %v271 = vld [vmem:[%s179 + $0x1c] sm:$0xf]
        %276 = vrot.lane.b32.xlu0 %v268, 4
        %v277 = vpop.permute.xlu0 %276
        %278 = vrot.lane.b32.xlu0 %v269, 4
        %v279 = vpop.permute.xlu0 %278
        %280 = vrot.lane.b32.xlu0 %v270, 4
        %v281 = vpop.permute.xlu0 %280
        %282 = vrot.lane.b32.xlu0 %v271, 4
        %v283 = vpop.permute.xlu0 %282
        %vm288 = vcmask 39968
        %289 = vst.msk [vmem:[#allocation2] sm:$0xff] %vm288, %v277
        %290 = vst.msk [vmem:[#allocation2 + $0x8] sm:$0xff] %vm288, %v279
        %291 = vst.msk [vmem:[#allocation2 + $0x10] sm:$0xff] %vm288, %v281
        %vm292 = vcmask 35872
        %293 = vst.msk [vmem:[#allocation2 + $0x18] sm:$0xf] %vm292, %v283
        %s294 = sadd.s32 %s177, 1
        %s295 = smul.u32 %s294, 32
        %s296 = scalar_lea.vmem %s165, %s295
        %v297 = vld [vmem:[%s296] sm:$0xff]
        %v298 = vld [vmem:[%s296 + $0x8] sm:$0xff]
        %v299 = vld [vmem:[%s296 + $0x10] sm:$0xff]
        %v300 = vld [vmem:[%s296 + $0x18] sm:$0xf]
        %305 = vrot.lane.b32.xlu0 %v297, 5
        %v306 = vpop.permute.xlu0 %305
        %307 = vrot.lane.b32.xlu0 %v298, 5
        %v308 = vpop.permute.xlu0 %307
        %309 = vrot.lane.b32.xlu0 %v299, 5
        %v310 = vpop.permute.xlu0 %309
        %311 = vrot.lane.b32.xlu0 %v300, 5
        %v312 = vpop.permute.xlu0 %311
        %vm317 = vcmask 48168
        %318 = vst.msk [vmem:[#allocation2] sm:$0xff] %vm317, %v306
        %319 = vst.msk [vmem:[#allocation2 + $0x8] sm:$0xff] %vm317, %v308
        %320 = vst.msk [vmem:[#allocation2 + $0x10] sm:$0xff] %vm317, %v310
        %vm321 = vcmask 44072
        %322 = vst.msk [vmem:[#allocation2 + $0x18] sm:$0xf] %vm321, %v312
        %v323 = vld [vmem:[%s296 + $0x1] sm:$0xff]
        %v324 = vld [vmem:[%s296 + $0x9] sm:$0xff]
        %v325 = vld [vmem:[%s296 + $0x11] sm:$0xff]
        %v326 = vld [vmem:[%s296 + $0x19] sm:$0xf]
        %331 = vrot.lane.b32.xlu0 %v323, 6
        %v332 = vpop.permute.xlu0 %331
        %333 = vrot.lane.b32.xlu0 %v324, 6
        %v334 = vpop.permute.xlu0 %333
        %335 = vrot.lane.b32.xlu0 %v325, 6
        %v336 = vpop.permute.xlu0 %335
        %337 = vrot.lane.b32.xlu0 %v326, 6
        %v338 = vpop.permute.xlu0 %337
        %vm343 = vcmask 56368
        %344 = vst.msk [vmem:[#allocation2] sm:$0xff] %vm343, %v332
        %345 = vst.msk [vmem:[#allocation2 + $0x8] sm:$0xff] %vm343, %v334
        %346 = vst.msk [vmem:[#allocation2 + $0x10] sm:$0xff] %vm343, %v336
        %vm347 = vcmask 52272
        %348 = vst.msk [vmem:[#allocation2 + $0x18] sm:$0xf] %vm347, %v338
        %v349 = vld [vmem:[%s296 + $0x2] sm:$0xff]
        %v350 = vld [vmem:[%s296 + $0xa] sm:$0xff]
        %v351 = vld [vmem:[%s296 + $0x12] sm:$0xff]
        %v352 = vld [vmem:[%s296 + $0x1a] sm:$0xf]
        %357 = vrot.lane.b32.xlu0 %v349, 7
        %v358 = vpop.permute.xlu0 %357
        %359 = vrot.lane.b32.xlu0 %v350, 7
        %v360 = vpop.permute.xlu0 %359
        %361 = vrot.lane.b32.xlu0 %v351, 7
        %v362 = vpop.permute.xlu0 %361
        %363 = vrot.lane.b32.xlu0 %v352, 7
        %v364 = vpop.permute.xlu0 %363
        %vm369 = vcmask 64568
        %370 = vst.msk [vmem:[#allocation2] sm:$0xff] %vm369, %v358
        %371 = vst.msk [vmem:[#allocation2 + $0x8] sm:$0xff] %vm369, %v360
        %372 = vst.msk [vmem:[#allocation2 + $0x10] sm:$0xff] %vm369, %v362
        %vm373 = vcmask 60472
        %374 = vst.msk [vmem:[#allocation2 + $0x18] sm:$0xf] %vm373, %v364
        %v375 = vld [vmem:[%s296 + $0x3] sm:$0xff]
        %v376 = vld [vmem:[%s296 + $0xb] sm:$0xff]
        %v377 = vld [vmem:[%s296 + $0x13] sm:$0xff]
        %v378 = vld [vmem:[%s296 + $0x1b] sm:$0xf]
        %383 = vrot.lane.b32.xlu0 %v375, 8
        %v384 = vpop.permute.xlu0 %383
        %385 = vrot.lane.b32.xlu0 %v376, 8
        %v386 = vpop.permute.xlu0 %385
        %387 = vrot.lane.b32.xlu0 %v377, 8
        %v388 = vpop.permute.xlu0 %387
        %389 = vrot.lane.b32.xlu0 %v378, 8
        %v390 = vpop.permute.xlu0 %389
        %vm395 = vcmask 72768
        %396 = vst.msk [vmem:[#allocation2] sm:$0xff] %vm395, %v384
        %397 = vst.msk [vmem:[#allocation2 + $0x8] sm:$0xff] %vm395, %v386
        %398 = vst.msk [vmem:[#allocation2 + $0x10] sm:$0xff] %vm395, %v388
        %vm399 = vcmask 68672
        %400 = vst.msk [vmem:[#allocation2 + $0x18] sm:$0xf] %vm399, %v390
        %v401 = vld [vmem:[%s296 + $0x4] sm:$0xff]
        %v402 = vld [vmem:[%s296 + $0xc] sm:$0xff]
        %v403 = vld [vmem:[%s296 + $0x14] sm:$0xff]
        %v404 = vld [vmem:[%s296 + $0x1c] sm:$0xf]
        %409 = vrot.lane.b32.xlu0 %v401, 9
        %v410 = vpop.permute.xlu0 %409
        %411 = vrot.lane.b32.xlu0 %v402, 9
        %v412 = vpop.permute.xlu0 %411
        %413 = vrot.lane.b32.xlu0 %v403, 9
        %v414 = vpop.permute.xlu0 %413
        %415 = vrot.lane.b32.xlu0 %v404, 9
        %v416 = vpop.permute.xlu0 %415
        %vm421 = vcmask 80968
        %422 = vst.msk [vmem:[#allocation2] sm:$0xff] %vm421, %v410
        %423 = vst.msk [vmem:[#allocation2 + $0x8] sm:$0xff] %vm421, %v412
        %424 = vst.msk [vmem:[#allocation2 + $0x10] sm:$0xff] %vm421, %v414
        %vm425 = vcmask 76872
        %426 = vst.msk [vmem:[#allocation2 + $0x18] sm:$0xf] %vm425, %v416
        %s427 = sadd.s32 %s177, 2
        %s428 = smul.u32 %s427, 32
        %s429 = scalar_lea.vmem %s165, %s428
        %v430 = vld [vmem:[%s429] sm:$0xff]
        %v431 = vld [vmem:[%s429 + $0x8] sm:$0xff]
        %v432 = vld [vmem:[%s429 + $0x10] sm:$0xff]
        %v433 = vld [vmem:[%s429 + $0x18] sm:$0xf]
        %438 = vrot.lane.b32.xlu0 %v430, 10
        %v439 = vpop.permute.xlu0 %438
        %440 = vrot.lane.b32.xlu0 %v431, 10
        %v441 = vpop.permute.xlu0 %440
        %442 = vrot.lane.b32.xlu0 %v432, 10
        %v443 = vpop.permute.xlu0 %442
        %444 = vrot.lane.b32.xlu0 %v433, 10
        %v445 = vpop.permute.xlu0 %444
        %vm450 = vcmask 89168
        %451 = vst.msk [vmem:[#allocation2] sm:$0xff] %vm450, %v439
        %452 = vst.msk [vmem:[#allocation2 + $0x8] sm:$0xff] %vm450, %v441
        %453 = vst.msk [vmem:[#allocation2 + $0x10] sm:$0xff] %vm450, %v443
        %vm454 = vcmask 85072
        %455 = vst.msk [vmem:[#allocation2 + $0x18] sm:$0xf] %vm454, %v445
        %v456 = vld [vmem:[%s429 + $0x1] sm:$0xff]
        %v457 = vld [vmem:[%s429 + $0x9] sm:$0xff]
        %v458 = vld [vmem:[%s429 + $0x11] sm:$0xff]
        %v459 = vld [vmem:[%s429 + $0x19] sm:$0xf]
        %464 = vrot.lane.b32.xlu0 %v456, 11
        %v465 = vpop.permute.xlu0 %464
        %466 = vrot.lane.b32.xlu0 %v457, 11
        %v467 = vpop.permute.xlu0 %466
        %468 = vrot.lane.b32.xlu0 %v458, 11
        %v469 = vpop.permute.xlu0 %468
        %470 = vrot.lane.b32.xlu0 %v459, 11
        %v471 = vpop.permute.xlu0 %470
        %vm476 = vcmask 97368
        %477 = vst.msk [vmem:[#allocation2] sm:$0xff] %vm476, %v465
        %478 = vst.msk [vmem:[#allocation2 + $0x8] sm:$0xff] %vm476, %v467
        %479 = vst.msk [vmem:[#allocation2 + $0x10] sm:$0xff] %vm476, %v469
        %vm480 = vcmask 93272
        %481 = vst.msk [vmem:[#allocation2 + $0x18] sm:$0xf] %vm480, %v471
        %v482 = vld [vmem:[%s429 + $0x2] sm:$0xff]
        %v483 = vld [vmem:[%s429 + $0xa] sm:$0xff]
        %v484 = vld [vmem:[%s429 + $0x12] sm:$0xff]
        %v485 = vld [vmem:[%s429 + $0x1a] sm:$0xf]
        %490 = vrot.lane.b32.xlu0 %v482, 12
        %v491 = vpop.permute.xlu0 %490
        %492 = vrot.lane.b32.xlu0 %v483, 12
        %v493 = vpop.permute.xlu0 %492
        %494 = vrot.lane.b32.xlu0 %v484, 12
        %v495 = vpop.permute.xlu0 %494
        %496 = vrot.lane.b32.xlu0 %v485, 12
        %v497 = vpop.permute.xlu0 %496
        %vm502 = vcmask 105568
        %503 = vst.msk [vmem:[#allocation2] sm:$0xff] %vm502, %v491
        %504 = vst.msk [vmem:[#allocation2 + $0x8] sm:$0xff] %vm502, %v493
        %505 = vst.msk [vmem:[#allocation2 + $0x10] sm:$0xff] %vm502, %v495
        %vm506 = vcmask 101472
        %507 = vst.msk [vmem:[#allocation2 + $0x18] sm:$0xf] %vm506, %v497
        %v508 = vld [vmem:[%s429 + $0x3] sm:$0xff]
        %v509 = vld [vmem:[%s429 + $0xb] sm:$0xff]
        %v510 = vld [vmem:[%s429 + $0x13] sm:$0xff]
        %v511 = vld [vmem:[%s429 + $0x1b] sm:$0xf]
        %516 = vrot.lane.b32.xlu0 %v508, 13
        %v517 = vpop.permute.xlu0 %516
        %518 = vrot.lane.b32.xlu0 %v509, 13
        %v519 = vpop.permute.xlu0 %518
        %520 = vrot.lane.b32.xlu0 %v510, 13
        %v521 = vpop.permute.xlu0 %520
        %522 = vrot.lane.b32.xlu0 %v511, 13
        %v523 = vpop.permute.xlu0 %522
        %vm528 = vcmask 113768
        %529 = vst.msk [vmem:[#allocation2] sm:$0xff] %vm528, %v517
        %530 = vst.msk [vmem:[#allocation2 + $0x8] sm:$0xff] %vm528, %v519
        %531 = vst.msk [vmem:[#allocation2 + $0x10] sm:$0xff] %vm528, %v521
        %vm532 = vcmask 109672
        %533 = vst.msk [vmem:[#allocation2 + $0x18] sm:$0xf] %vm532, %v523
        %v534 = vld [vmem:[%s429 + $0x4] sm:$0xff]
        %v535 = vld [vmem:[%s429 + $0xc] sm:$0xff]
        %v536 = vld [vmem:[%s429 + $0x14] sm:$0xff]
        %v537 = vld [vmem:[%s429 + $0x1c] sm:$0xf]
        %542 = vrot.lane.b32.xlu0 %v534, 14
        %v543 = vpop.permute.xlu0 %542
        %544 = vrot.lane.b32.xlu0 %v535, 14
        %v545 = vpop.permute.xlu0 %544
        %546 = vrot.lane.b32.xlu0 %v536, 14
        %v547 = vpop.permute.xlu0 %546
        %548 = vrot.lane.b32.xlu0 %v537, 14
        %v549 = vpop.permute.xlu0 %548
        %vm554 = vcmask 121968
        %555 = vst.msk [vmem:[#allocation2] sm:$0xff] %vm554, %v543
        %556 = vst.msk [vmem:[#allocation2 + $0x8] sm:$0xff] %vm554, %v545
        %557 = vst.msk [vmem:[#allocation2 + $0x10] sm:$0xff] %vm554, %v547
        %vm558 = vcmask 117872
        %559 = vst.msk [vmem:[#allocation2 + $0x18] sm:$0xf] %vm558, %v549
        %s560 = sadd.s32 %s177, 3
        %s561 = smul.u32 %s560, 32
        %s562 = scalar_lea.vmem %s165, %s561
        %v563 = vld [vmem:[%s562] sm:$0xff]
        %v564 = vld [vmem:[%s562 + $0x8] sm:$0xff]
        %v565 = vld [vmem:[%s562 + $0x10] sm:$0xff]
        %v566 = vld [vmem:[%s562 + $0x18] sm:$0xf]
        %571 = vrot.lane.b32.xlu0 %v563, 15
        %v572 = vpop.permute.xlu0 %571
        %573 = vrot.lane.b32.xlu0 %v564, 15
        %v574 = vpop.permute.xlu0 %573
        %575 = vrot.lane.b32.xlu0 %v565, 15
        %v576 = vpop.permute.xlu0 %575
        %577 = vrot.lane.b32.xlu0 %v566, 15
        %v578 = vpop.permute.xlu0 %577
        %vm583 = vcmask 130168
        %584 = vst.msk [vmem:[#allocation2] sm:$0xff] %vm583, %v572
        %585 = vst.msk [vmem:[#allocation2 + $0x8] sm:$0xff] %vm583, %v574
        %586 = vst.msk [vmem:[#allocation2 + $0x10] sm:$0xff] %vm583, %v576
        %vm587 = vcmask 126072
        %588 = vst.msk [vmem:[#allocation2 + $0x18] sm:$0xf] %vm587, %v578
        %v589 = vld [vmem:[%s562 + $0x1] sm:$0xff]
        %v590 = vld [vmem:[%s562 + $0x9] sm:$0xff]
        %v591 = vld [vmem:[%s562 + $0x11] sm:$0xff]
        %v592 = vld [vmem:[%s562 + $0x19] sm:$0xf]
        %597 = vrot.lane.b32.xlu0 %v589, 16
        %v598 = vpop.permute.xlu0 %597
        %599 = vrot.lane.b32.xlu0 %v590, 16
        %v600 = vpop.permute.xlu0 %599
        %601 = vrot.lane.b32.xlu0 %v591, 16
        %v602 = vpop.permute.xlu0 %601
        %603 = vrot.lane.b32.xlu0 %v592, 16
        %v604 = vpop.permute.xlu0 %603
        %vm609 = vcmask 138368
        %610 = vst.msk [vmem:[#allocation2] sm:$0xff] %vm609, %v598
        %611 = vst.msk [vmem:[#allocation2 + $0x8] sm:$0xff] %vm609, %v600
        %612 = vst.msk [vmem:[#allocation2 + $0x10] sm:$0xff] %vm609, %v602
        %vm613 = vcmask 134272
        %614 = vst.msk [vmem:[#allocation2 + $0x18] sm:$0xf] %vm613, %v604
        %v615 = vld [vmem:[%s562 + $0x2] sm:$0xff]
        %v616 = vld [vmem:[%s562 + $0xa] sm:$0xff]
        %v617 = vld [vmem:[%s562 + $0x12] sm:$0xff]
        %v618 = vld [vmem:[%s562 + $0x1a] sm:$0xf]
        %623 = vrot.lane.b32.xlu0 %v615, 17
        %v624 = vpop.permute.xlu0 %623
        %625 = vrot.lane.b32.xlu0 %v616, 17
        %v626 = vpop.permute.xlu0 %625
        %627 = vrot.lane.b32.xlu0 %v617, 17
        %v628 = vpop.permute.xlu0 %627
        %629 = vrot.lane.b32.xlu0 %v618, 17
        %v630 = vpop.permute.xlu0 %629
        %vm635 = vcmask 146568
        %636 = vst.msk [vmem:[#allocation2] sm:$0xff] %vm635, %v624
        %637 = vst.msk [vmem:[#allocation2 + $0x8] sm:$0xff] %vm635, %v626
        %638 = vst.msk [vmem:[#allocation2 + $0x10] sm:$0xff] %vm635, %v628
        %vm639 = vcmask 142472
        %640 = vst.msk [vmem:[#allocation2 + $0x18] sm:$0xf] %vm639, %v630
        %v641 = vld [vmem:[%s562 + $0x3] sm:$0xff]
        %v642 = vld [vmem:[%s562 + $0xb] sm:$0xff]
        %v643 = vld [vmem:[%s562 + $0x13] sm:$0xff]
        %v644 = vld [vmem:[%s562 + $0x1b] sm:$0xf]
        %649 = vrot.lane.b32.xlu0 %v641, 18
        %v650 = vpop.permute.xlu0 %649
        %651 = vrot.lane.b32.xlu0 %v642, 18
        %v652 = vpop.permute.xlu0 %651
        %653 = vrot.lane.b32.xlu0 %v643, 18
        %v654 = vpop.permute.xlu0 %653
        %655 = vrot.lane.b32.xlu0 %v644, 18
        %v656 = vpop.permute.xlu0 %655
        %vm661 = vcmask 154768
        %662 = vst.msk [vmem:[#allocation2] sm:$0xff] %vm661, %v650
        %663 = vst.msk [vmem:[#allocation2 + $0x8] sm:$0xff] %vm661, %v652
        %664 = vst.msk [vmem:[#allocation2 + $0x10] sm:$0xff] %vm661, %v654
        %vm665 = vcmask 150672
        %666 = vst.msk [vmem:[#allocation2 + $0x18] sm:$0xf] %vm665, %v656
        %v667 = vld [vmem:[%s562 + $0x4] sm:$0xff]
        %v668 = vld [vmem:[%s562 + $0xc] sm:$0xff]
        %v669 = vld [vmem:[%s562 + $0x14] sm:$0xff]
        %v670 = vld [vmem:[%s562 + $0x1c] sm:$0xf]
        %675 = vrot.lane.b32.xlu0 %v667, 19
        %v676 = vpop.permute.xlu0 %675
        %677 = vrot.lane.b32.xlu0 %v668, 19
        %v678 = vpop.permute.xlu0 %677
        %679 = vrot.lane.b32.xlu0 %v669, 19
        %v680 = vpop.permute.xlu0 %679
        %681 = vrot.lane.b32.xlu0 %v670, 19
        %v682 = vpop.permute.xlu0 %681
        %vm687 = vcmask 162968
        %688 = vst.msk [vmem:[#allocation2] sm:$0xff] %vm687, %v676
        %689 = vst.msk [vmem:[#allocation2 + $0x8] sm:$0xff] %vm687, %v678
        %690 = vst.msk [vmem:[#allocation2 + $0x10] sm:$0xff] %vm687, %v680
        %vm691 = vcmask 158872
        %692 = vst.msk [vmem:[#allocation2 + $0x18] sm:$0xf] %vm691, %v682
        %s693 = sadd.s32 %s177, 4
        %s694 = smul.u32 %s693, 32
        %s695 = scalar_lea.vmem %s165, %s694
        %v696 = vld [vmem:[%s695] sm:$0xff]
        %v697 = vld [vmem:[%s695 + $0x8] sm:$0xff]
        %v698 = vld [vmem:[%s695 + $0x10] sm:$0xff]
        %v699 = vld [vmem:[%s695 + $0x18] sm:$0xf]
        %704 = vrot.lane.b32.xlu0 %v696, 20
        %v705 = vpop.permute.xlu0 %704
        %706 = vrot.lane.b32.xlu0 %v697, 20
        %v707 = vpop.permute.xlu0 %706
        %708 = vrot.lane.b32.xlu0 %v698, 20
        %v709 = vpop.permute.xlu0 %708
        %710 = vrot.lane.b32.xlu0 %v699, 20
        %v711 = vpop.permute.xlu0 %710
        %vm716 = vcmask 171168
        %717 = vst.msk [vmem:[#allocation2] sm:$0xff] %vm716, %v705
        %718 = vst.msk [vmem:[#allocation2 + $0x8] sm:$0xff] %vm716, %v707
        %719 = vst.msk [vmem:[#allocation2 + $0x10] sm:$0xff] %vm716, %v709
        %vm720 = vcmask 167072
        %721 = vst.msk [vmem:[#allocation2 + $0x18] sm:$0xf] %vm720, %v711
        %v722 = vld [vmem:[%s695 + $0x1] sm:$0xff]
        %v723 = vld [vmem:[%s695 + $0x9] sm:$0xff]
        %v724 = vld [vmem:[%s695 + $0x11] sm:$0xff]
        %v725 = vld [vmem:[%s695 + $0x19] sm:$0xf]
        %730 = vrot.lane.b32.xlu0 %v722, 21
        %v731 = vpop.permute.xlu0 %730
        %732 = vrot.lane.b32.xlu0 %v723, 21
        %v733 = vpop.permute.xlu0 %732
        %734 = vrot.lane.b32.xlu0 %v724, 21
        %v735 = vpop.permute.xlu0 %734
        %736 = vrot.lane.b32.xlu0 %v725, 21
        %v737 = vpop.permute.xlu0 %736
        %vm742 = vcmask 179368
        %743 = vst.msk [vmem:[#allocation2] sm:$0xff] %vm742, %v731
        %744 = vst.msk [vmem:[#allocation2 + $0x8] sm:$0xff] %vm742, %v733
        %745 = vst.msk [vmem:[#allocation2 + $0x10] sm:$0xff] %vm742, %v735
        %vm746 = vcmask 175272
        %747 = vst.msk [vmem:[#allocation2 + $0x18] sm:$0xf] %vm746, %v737
        %v748 = vld [vmem:[%s695 + $0x2] sm:$0xff]
        %v749 = vld [vmem:[%s695 + $0xa] sm:$0xff]
        %v750 = vld [vmem:[%s695 + $0x12] sm:$0xff]
        %v751 = vld [vmem:[%s695 + $0x1a] sm:$0xf]
        %756 = vrot.lane.b32.xlu0 %v748, 22
        %v757 = vpop.permute.xlu0 %756
        %758 = vrot.lane.b32.xlu0 %v749, 22
        %v759 = vpop.permute.xlu0 %758
        %760 = vrot.lane.b32.xlu0 %v750, 22
        %v761 = vpop.permute.xlu0 %760
        %762 = vrot.lane.b32.xlu0 %v751, 22
        %v763 = vpop.permute.xlu0 %762
        %vm768 = vcmask 187568
        %769 = vst.msk [vmem:[#allocation2] sm:$0xff] %vm768, %v757
        %770 = vst.msk [vmem:[#allocation2 + $0x8] sm:$0xff] %vm768, %v759
        %771 = vst.msk [vmem:[#allocation2 + $0x10] sm:$0xff] %vm768, %v761
        %vm772 = vcmask 183472
        %773 = vst.msk [vmem:[#allocation2 + $0x18] sm:$0xf] %vm772, %v763
        %v774 = vld [vmem:[%s695 + $0x3] sm:$0xff]
        %v775 = vld [vmem:[%s695 + $0xb] sm:$0xff]
        %v776 = vld [vmem:[%s695 + $0x13] sm:$0xff]
        %v777 = vld [vmem:[%s695 + $0x1b] sm:$0xf]
        %782 = vrot.lane.b32.xlu0 %v774, 23
        %v783 = vpop.permute.xlu0 %782
        %784 = vrot.lane.b32.xlu0 %v775, 23
        %v785 = vpop.permute.xlu0 %784
        %786 = vrot.lane.b32.xlu0 %v776, 23
        %v787 = vpop.permute.xlu0 %786
        %788 = vrot.lane.b32.xlu0 %v777, 23
        %v789 = vpop.permute.xlu0 %788
        %vm794 = vcmask 195768
        %795 = vst.msk [vmem:[#allocation2] sm:$0xff] %vm794, %v783
        %796 = vst.msk [vmem:[#allocation2 + $0x8] sm:$0xff] %vm794, %v785
        %797 = vst.msk [vmem:[#allocation2 + $0x10] sm:$0xff] %vm794, %v787
        %vm798 = vcmask 191672
        %799 = vst.msk [vmem:[#allocation2 + $0x18] sm:$0xf] %vm798, %v789
        %v800 = vld [vmem:[%s695 + $0x4] sm:$0xff]
        %v801 = vld [vmem:[%s695 + $0xc] sm:$0xff]
        %v802 = vld [vmem:[%s695 + $0x14] sm:$0xff]
        %v803 = vld [vmem:[%s695 + $0x1c] sm:$0xf]
        %808 = vrot.lane.b32.xlu0 %v800, 24
        %v809 = vpop.permute.xlu0 %808
        %810 = vrot.lane.b32.xlu0 %v801, 24
        %v811 = vpop.permute.xlu0 %810
        %812 = vrot.lane.b32.xlu0 %v802, 24
        %v813 = vpop.permute.xlu0 %812
        %814 = vrot.lane.b32.xlu0 %v803, 24
        %v815 = vpop.permute.xlu0 %814
        %vm820 = vcmask 203968
        %821 = vst.msk [vmem:[#allocation2] sm:$0xff] %vm820, %v809
        %822 = vst.msk [vmem:[#allocation2 + $0x8] sm:$0xff] %vm820, %v811
        %823 = vst.msk [vmem:[#allocation2 + $0x10] sm:$0xff] %vm820, %v813
        %vm824 = vcmask 199872
        %825 = vst.msk [vmem:[#allocation2 + $0x18] sm:$0xf] %vm824, %v815
        %v826 = vld [vmem:[#allocation2] sm:$0xff]
        %v827 = vld [vmem:[#allocation2 + $0x8] sm:$0xff]
        %v828 = vld [vmem:[#allocation2 + $0x10] sm:$0xff]
        %v829 = vld [vmem:[#allocation2 + $0x18] sm:$0xf]
        %v830 = vld [vmem:[%s1] sm:$0xff]
        %v831 = vld [vmem:[%s1 + $0x8] sm:$0xff]
        %v832 = vld [vmem:[%s1 + $0x10] sm:$0xff]
        %v833 = vld [vmem:[%s1 + $0x18] sm:$0x1]
        %v834 = vld [vmem:[%s2] sm:$0x1]
        %v836 = vperm.slane %v834, 0
        %vm838 = vcmask 203776
        %v840 = vsel %vm838, %v826, 0
        %v843 = vsel %vm838, %v827, 0
        %v846 = vsel %vm838, %v828, 0
        %v849 = vsel %vm838, %v829, 0
        %vm851 = vcmask 1040384
        %v853 = vsel %vm851, %v833, 0
        %855 = vmatpush.msra.mxu0 0.0
        %856 = vmatpush.msra.mxu0 0.0
        %857 = vmatpush.msra.mxu0 0.0
        %858 = vmatpush.msra.mxu0 0.0
        %859 = vmatpush.msra.mxu0 0.0
        %860 = vmatpush.msra.mxu0 0.0
        %861 = vmatpush.msra.mxu0 0.0
        %862 = vmatpush.msra.mxu0 0.0
        %863 = vmatpush.msra.mxu0 0.0
        %864 = vmatpush.msra.mxu0 0.0
        %865 = vmatpush.msra.mxu0 0.0
        %866 = vmatpush.msra.mxu0 0.0
        %867 = vmatpush.msra.mxu0 %v853
        %868 = vmatpush.msra.mxu0 %v832
        %869 = vmatpush.msra.mxu0 %v831
        %870 = vmatpush.msra.mxu0 %v830
        %871 = vmatmul.f32.gmra.mxu0 %v840
        %v872 = vpop.f32.mrf.mxu0
        %v873 = vadd.f32 %v836, %v872
        %874 = vmatmul.f32.gmra.mxu0 %v843
        %v875 = vpop.f32.mrf.mxu0
        %v876 = vadd.f32 %v836, %v875
        %877 = vmatmul.f32.gmra.mxu0 %v846
        %v878 = vpop.f32.mrf.mxu0
        %v879 = vadd.f32 %v836, %v878
        %880 = vmatmul.f32.gmra.mxu0 %v849
        %v881 = vpop.f32.mrf.mxu0
        %v882 = vadd.f32 %v836, %v881
        %883 = vdwg.mxu0
        %v884 = vmax.f32 %v873, 0.0
        %v885 = vmax.f32 %v876, 0.0
        %v886 = vmax.f32 %v879, 0.0
        %v887 = vmax.f32 %v882, 0.0
        %v888 = vld [vmem:[%s296] sm:$0xff]
        %v889 = vld [vmem:[%s296 + $0x8] sm:$0xff]
        %v890 = vld [vmem:[%s296 + $0x10] sm:$0xff]
        %v891 = vld [vmem:[%s296 + $0x18] sm:$0xf]
        %892 = vst.msk [vmem:[#allocation2] sm:$0xff] %vm184, %v888
        %893 = vst.msk [vmem:[#allocation2 + $0x8] sm:$0xff] %vm184, %v889
        %894 = vst.msk [vmem:[#allocation2 + $0x10] sm:$0xff] %vm184, %v890
        %895 = vst.msk [vmem:[#allocation2 + $0x18] sm:$0xf] %vm188, %v891
        %v896 = vld [vmem:[%s296 + $0x1] sm:$0xff]
        %v897 = vld [vmem:[%s296 + $0x9] sm:$0xff]
        %v898 = vld [vmem:[%s296 + $0x11] sm:$0xff]
        %v899 = vld [vmem:[%s296 + $0x19] sm:$0xf]
        %904 = vrot.lane.b32.xlu0 %v896, 1
        %v905 = vpop.permute.xlu0 %904
        %906 = vrot.lane.b32.xlu0 %v897, 1
        %v907 = vpop.permute.xlu0 %906
        %908 = vrot.lane.b32.xlu0 %v898, 1
        %v909 = vpop.permute.xlu0 %908
        %910 = vrot.lane.b32.xlu0 %v899, 1
        %v911 = vpop.permute.xlu0 %910
        %916 = vst.msk [vmem:[#allocation2] sm:$0xff] %vm210, %v905
        %917 = vst.msk [vmem:[#allocation2 + $0x8] sm:$0xff] %vm210, %v907
        %918 = vst.msk [vmem:[#allocation2 + $0x10] sm:$0xff] %vm210, %v909
        %919 = vst.msk [vmem:[#allocation2 + $0x18] sm:$0xf] %vm214, %v911
        %v920 = vld [vmem:[%s296 + $0x2] sm:$0xff]
        %v921 = vld [vmem:[%s296 + $0xa] sm:$0xff]
        %v922 = vld [vmem:[%s296 + $0x12] sm:$0xff]
        %v923 = vld [vmem:[%s296 + $0x1a] sm:$0xf]
        %928 = vrot.lane.b32.xlu0 %v920, 2
        %v929 = vpop.permute.xlu0 %928
        %930 = vrot.lane.b32.xlu0 %v921, 2
        %v931 = vpop.permute.xlu0 %930
        %932 = vrot.lane.b32.xlu0 %v922, 2
        %v933 = vpop.permute.xlu0 %932
        %934 = vrot.lane.b32.xlu0 %v923, 2
        %v935 = vpop.permute.xlu0 %934
        %940 = vst.msk [vmem:[#allocation2] sm:$0xff] %vm236, %v929
        %941 = vst.msk [vmem:[#allocation2 + $0x8] sm:$0xff] %vm236, %v931
        %942 = vst.msk [vmem:[#allocation2 + $0x10] sm:$0xff] %vm236, %v933
        %943 = vst.msk [vmem:[#allocation2 + $0x18] sm:$0xf] %vm240, %v935
        %v944 = vld [vmem:[%s296 + $0x3] sm:$0xff]
        %v945 = vld [vmem:[%s296 + $0xb] sm:$0xff]
        %v946 = vld [vmem:[%s296 + $0x13] sm:$0xff]
        %v947 = vld [vmem:[%s296 + $0x1b] sm:$0xf]
        %952 = vrot.lane.b32.xlu0 %v944, 3
        %v953 = vpop.permute.xlu0 %952
        %954 = vrot.lane.b32.xlu0 %v945, 3
        %v955 = vpop.permute.xlu0 %954
        %956 = vrot.lane.b32.xlu0 %v946, 3
        %v957 = vpop.permute.xlu0 %956
        %958 = vrot.lane.b32.xlu0 %v947, 3
        %v959 = vpop.permute.xlu0 %958
        %964 = vst.msk [vmem:[#allocation2] sm:$0xff] %vm262, %v953
        %965 = vst.msk [vmem:[#allocation2 + $0x8] sm:$0xff] %vm262, %v955
        %966 = vst.msk [vmem:[#allocation2 + $0x10] sm:$0xff] %vm262, %v957
        %967 = vst.msk [vmem:[#allocation2 + $0x18] sm:$0xf] %vm266, %v959
        %v968 = vld [vmem:[%s296 + $0x4] sm:$0xff]
        %v969 = vld [vmem:[%s296 + $0xc] sm:$0xff]
        %v970 = vld [vmem:[%s296 + $0x14] sm:$0xff]
        %v971 = vld [vmem:[%s296 + $0x1c] sm:$0xf]
        %976 = vrot.lane.b32.xlu0 %v968, 4
        %v977 = vpop.permute.xlu0 %976
        %978 = vrot.lane.b32.xlu0 %v969, 4
        %v979 = vpop.permute.xlu0 %978
        %980 = vrot.lane.b32.xlu0 %v970, 4
        %v981 = vpop.permute.xlu0 %980
        %982 = vrot.lane.b32.xlu0 %v971, 4
        %v983 = vpop.permute.xlu0 %982
        %988 = vst.msk [vmem:[#allocation2] sm:$0xff] %vm288, %v977
        %989 = vst.msk [vmem:[#allocation2 + $0x8] sm:$0xff] %vm288, %v979
        %990 = vst.msk [vmem:[#allocation2 + $0x10] sm:$0xff] %vm288, %v981
        %991 = vst.msk [vmem:[#allocation2 + $0x18] sm:$0xf] %vm292, %v983
        %v992 = vld [vmem:[%s429] sm:$0xff]
        %v993 = vld [vmem:[%s429 + $0x8] sm:$0xff]
        %v994 = vld [vmem:[%s429 + $0x10] sm:$0xff]
        %v995 = vld [vmem:[%s429 + $0x18] sm:$0xf]
        %1000 = vrot.lane.b32.xlu0 %v992, 5
        %v1001 = vpop.permute.xlu0 %1000
        %1002 = vrot.lane.b32.xlu0 %v993, 5
        %v1003 = vpop.permute.xlu0 %1002
        %1004 = vrot.lane.b32.xlu0 %v994, 5
        %v1005 = vpop.permute.xlu0 %1004
        %1006 = vrot.lane.b32.xlu0 %v995, 5
        %v1007 = vpop.permute.xlu0 %1006
        %1012 = vst.msk [vmem:[#allocation2] sm:$0xff] %vm317, %v1001
        %1013 = vst.msk [vmem:[#allocation2 + $0x8] sm:$0xff] %vm317, %v1003
        %1014 = vst.msk [vmem:[#allocation2 + $0x10] sm:$0xff] %vm317, %v1005
        %1015 = vst.msk [vmem:[#allocation2 + $0x18] sm:$0xf] %vm321, %v1007
        %v1016 = vld [vmem:[%s429 + $0x1] sm:$0xff]
        %v1017 = vld [vmem:[%s429 + $0x9] sm:$0xff]
        %v1018 = vld [vmem:[%s429 + $0x11] sm:$0xff]
        %v1019 = vld [vmem:[%s429 + $0x19] sm:$0xf]
        %1024 = vrot.lane.b32.xlu0 %v1016, 6
        %v1025 = vpop.permute.xlu0 %1024
        %1026 = vrot.lane.b32.xlu0 %v1017, 6
        %v1027 = vpop.permute.xlu0 %1026
        %1028 = vrot.lane.b32.xlu0 %v1018, 6
        %v1029 = vpop.permute.xlu0 %1028
        %1030 = vrot.lane.b32.xlu0 %v1019, 6
        %v1031 = vpop.permute.xlu0 %1030
        %1036 = vst.msk [vmem:[#allocation2] sm:$0xff] %vm343, %v1025
        %1037 = vst.msk [vmem:[#allocation2 + $0x8] sm:$0xff] %vm343, %v1027
        %1038 = vst.msk [vmem:[#allocation2 + $0x10] sm:$0xff] %vm343, %v1029
        %1039 = vst.msk [vmem:[#allocation2 + $0x18] sm:$0xf] %vm347, %v1031
        %v1040 = vld [vmem:[%s429 + $0x2] sm:$0xff]
        %v1041 = vld [vmem:[%s429 + $0xa] sm:$0xff]
        %v1042 = vld [vmem:[%s429 + $0x12] sm:$0xff]
        %v1043 = vld [vmem:[%s429 + $0x1a] sm:$0xf]
        %1048 = vrot.lane.b32.xlu0 %v1040, 7
        %v1049 = vpop.permute.xlu0 %1048
        %1050 = vrot.lane.b32.xlu0 %v1041, 7
        %v1051 = vpop.permute.xlu0 %1050
        %1052 = vrot.lane.b32.xlu0 %v1042, 7
        %v1053 = vpop.permute.xlu0 %1052
        %1054 = vrot.lane.b32.xlu0 %v1043, 7
        %v1055 = vpop.permute.xlu0 %1054
        %1060 = vst.msk [vmem:[#allocation2] sm:$0xff] %vm369, %v1049
        %1061 = vst.msk [vmem:[#allocation2 + $0x8] sm:$0xff] %vm369, %v1051
        %1062 = vst.msk [vmem:[#allocation2 + $0x10] sm:$0xff] %vm369, %v1053
        %1063 = vst.msk [vmem:[#allocation2 + $0x18] sm:$0xf] %vm373, %v1055
        %v1064 = vld [vmem:[%s429 + $0x3] sm:$0xff]
        %v1065 = vld [vmem:[%s429 + $0xb] sm:$0xff]
        %v1066 = vld [vmem:[%s429 + $0x13] sm:$0xff]
        %v1067 = vld [vmem:[%s429 + $0x1b] sm:$0xf]
        %1072 = vrot.lane.b32.xlu0 %v1064, 8
        %v1073 = vpop.permute.xlu0 %1072
        %1074 = vrot.lane.b32.xlu0 %v1065, 8
        %v1075 = vpop.permute.xlu0 %1074
        %1076 = vrot.lane.b32.xlu0 %v1066, 8
        %v1077 = vpop.permute.xlu0 %1076
        %1078 = vrot.lane.b32.xlu0 %v1067, 8
        %v1079 = vpop.permute.xlu0 %1078
        %1084 = vst.msk [vmem:[#allocation2] sm:$0xff] %vm395, %v1073
        %1085 = vst.msk [vmem:[#allocation2 + $0x8] sm:$0xff] %vm395, %v1075
        %1086 = vst.msk [vmem:[#allocation2 + $0x10] sm:$0xff] %vm395, %v1077
        %1087 = vst.msk [vmem:[#allocation2 + $0x18] sm:$0xf] %vm399, %v1079
        %v1088 = vld [vmem:[%s429 + $0x4] sm:$0xff]
        %v1089 = vld [vmem:[%s429 + $0xc] sm:$0xff]
        %v1090 = vld [vmem:[%s429 + $0x14] sm:$0xff]
        %v1091 = vld [vmem:[%s429 + $0x1c] sm:$0xf]
        %1096 = vrot.lane.b32.xlu0 %v1088, 9
        %v1097 = vpop.permute.xlu0 %1096
        %1098 = vrot.lane.b32.xlu0 %v1089, 9
        %v1099 = vpop.permute.xlu0 %1098
        %1100 = vrot.lane.b32.xlu0 %v1090, 9
        %v1101 = vpop.permute.xlu0 %1100
        %1102 = vrot.lane.b32.xlu0 %v1091, 9
        %v1103 = vpop.permute.xlu0 %1102
        %1108 = vst.msk [vmem:[#allocation2] sm:$0xff] %vm421, %v1097
        %1109 = vst.msk [vmem:[#allocation2 + $0x8] sm:$0xff] %vm421, %v1099
        %1110 = vst.msk [vmem:[#allocation2 + $0x10] sm:$0xff] %vm421, %v1101
        %1111 = vst.msk [vmem:[#allocation2 + $0x18] sm:$0xf] %vm425, %v1103
        %v1112 = vld [vmem:[%s562] sm:$0xff]
        %v1113 = vld [vmem:[%s562 + $0x8] sm:$0xff]
        %v1114 = vld [vmem:[%s562 + $0x10] sm:$0xff]
        %v1115 = vld [vmem:[%s562 + $0x18] sm:$0xf]
        %1120 = vrot.lane.b32.xlu0 %v1112, 10
        %v1121 = vpop.permute.xlu0 %1120
        %1122 = vrot.lane.b32.xlu0 %v1113, 10
        %v1123 = vpop.permute.xlu0 %1122
        %1124 = vrot.lane.b32.xlu0 %v1114, 10
        %v1125 = vpop.permute.xlu0 %1124
        %1126 = vrot.lane.b32.xlu0 %v1115, 10
        %v1127 = vpop.permute.xlu0 %1126
        %1132 = vst.msk [vmem:[#allocation2] sm:$0xff] %vm450, %v1121
        %1133 = vst.msk [vmem:[#allocation2 + $0x8] sm:$0xff] %vm450, %v1123
        %1134 = vst.msk [vmem:[#allocation2 + $0x10] sm:$0xff] %vm450, %v1125
        %1135 = vst.msk [vmem:[#allocation2 + $0x18] sm:$0xf] %vm454, %v1127
        %v1136 = vld [vmem:[%s562 + $0x1] sm:$0xff]
        %v1137 = vld [vmem:[%s562 + $0x9] sm:$0xff]
        %v1138 = vld [vmem:[%s562 + $0x11] sm:$0xff]
        %v1139 = vld [vmem:[%s562 + $0x19] sm:$0xf]
        %1144 = vrot.lane.b32.xlu0 %v1136, 11
        %v1145 = vpop.permute.xlu0 %1144
        %1146 = vrot.lane.b32.xlu0 %v1137, 11
        %v1147 = vpop.permute.xlu0 %1146
        %1148 = vrot.lane.b32.xlu0 %v1138, 11
        %v1149 = vpop.permute.xlu0 %1148
        %1150 = vrot.lane.b32.xlu0 %v1139, 11
        %v1151 = vpop.permute.xlu0 %1150
        %1156 = vst.msk [vmem:[#allocation2] sm:$0xff] %vm476, %v1145
        %1157 = vst.msk [vmem:[#allocation2 + $0x8] sm:$0xff] %vm476, %v1147
        %1158 = vst.msk [vmem:[#allocation2 + $0x10] sm:$0xff] %vm476, %v1149
        %1159 = vst.msk [vmem:[#allocation2 + $0x18] sm:$0xf] %vm480, %v1151
        %v1160 = vld [vmem:[%s562 + $0x2] sm:$0xff]
        %v1161 = vld [vmem:[%s562 + $0xa] sm:$0xff]
        %v1162 = vld [vmem:[%s562 + $0x12] sm:$0xff]
        %v1163 = vld [vmem:[%s562 + $0x1a] sm:$0xf]
        %1168 = vrot.lane.b32.xlu0 %v1160, 12
        %v1169 = vpop.permute.xlu0 %1168
        %1170 = vrot.lane.b32.xlu0 %v1161, 12
        %v1171 = vpop.permute.xlu0 %1170
        %1172 = vrot.lane.b32.xlu0 %v1162, 12
        %v1173 = vpop.permute.xlu0 %1172
        %1174 = vrot.lane.b32.xlu0 %v1163, 12
        %v1175 = vpop.permute.xlu0 %1174
        %1180 = vst.msk [vmem:[#allocation2] sm:$0xff] %vm502, %v1169
        %1181 = vst.msk [vmem:[#allocation2 + $0x8] sm:$0xff] %vm502, %v1171
        %1182 = vst.msk [vmem:[#allocation2 + $0x10] sm:$0xff] %vm502, %v1173
        %1183 = vst.msk [vmem:[#allocation2 + $0x18] sm:$0xf] %vm506, %v1175
        %v1184 = vld [vmem:[%s562 + $0x3] sm:$0xff]
        %v1185 = vld [vmem:[%s562 + $0xb] sm:$0xff]
        %v1186 = vld [vmem:[%s562 + $0x13] sm:$0xff]
        %v1187 = vld [vmem:[%s562 + $0x1b] sm:$0xf]
        %1192 = vrot.lane.b32.xlu0 %v1184, 13
        %v1193 = vpop.permute.xlu0 %1192
        %1194 = vrot.lane.b32.xlu0 %v1185, 13
        %v1195 = vpop.permute.xlu0 %1194
        %1196 = vrot.lane.b32.xlu0 %v1186, 13
        %v1197 = vpop.permute.xlu0 %1196
        %1198 = vrot.lane.b32.xlu0 %v1187, 13
        %v1199 = vpop.permute.xlu0 %1198
        %1204 = vst.msk [vmem:[#allocation2] sm:$0xff] %vm528, %v1193
        %1205 = vst.msk [vmem:[#allocation2 + $0x8] sm:$0xff] %vm528, %v1195
        %1206 = vst.msk [vmem:[#allocation2 + $0x10] sm:$0xff] %vm528, %v1197
        %1207 = vst.msk [vmem:[#allocation2 + $0x18] sm:$0xf] %vm532, %v1199
        %v1208 = vld [vmem:[%s562 + $0x4] sm:$0xff]
        %v1209 = vld [vmem:[%s562 + $0xc] sm:$0xff]
        %v1210 = vld [vmem:[%s562 + $0x14] sm:$0xff]
        %v1211 = vld [vmem:[%s562 + $0x1c] sm:$0xf]
        %1216 = vrot.lane.b32.xlu0 %v1208, 14
        %v1217 = vpop.permute.xlu0 %1216
        %1218 = vrot.lane.b32.xlu0 %v1209, 14
        %v1219 = vpop.permute.xlu0 %1218
        %1220 = vrot.lane.b32.xlu0 %v1210, 14
        %v1221 = vpop.permute.xlu0 %1220
        %1222 = vrot.lane.b32.xlu0 %v1211, 14
        %v1223 = vpop.permute.xlu0 %1222
        %1228 = vst.msk [vmem:[#allocation2] sm:$0xff] %vm554, %v1217
        %1229 = vst.msk [vmem:[#allocation2 + $0x8] sm:$0xff] %vm554, %v1219
        %1230 = vst.msk [vmem:[#allocation2 + $0x10] sm:$0xff] %vm554, %v1221
        %1231 = vst.msk [vmem:[#allocation2 + $0x18] sm:$0xf] %vm558, %v1223
        %v1232 = vld [vmem:[%s695] sm:$0xff]
        %v1233 = vld [vmem:[%s695 + $0x8] sm:$0xff]
        %v1234 = vld [vmem:[%s695 + $0x10] sm:$0xff]
        %v1235 = vld [vmem:[%s695 + $0x18] sm:$0xf]
        %1240 = vrot.lane.b32.xlu0 %v1232, 15
        %v1241 = vpop.permute.xlu0 %1240
        %1242 = vrot.lane.b32.xlu0 %v1233, 15
        %v1243 = vpop.permute.xlu0 %1242
        %1244 = vrot.lane.b32.xlu0 %v1234, 15
        %v1245 = vpop.permute.xlu0 %1244
        %1246 = vrot.lane.b32.xlu0 %v1235, 15
        %v1247 = vpop.permute.xlu0 %1246
        %1252 = vst.msk [vmem:[#allocation2] sm:$0xff] %vm583, %v1241
        %1253 = vst.msk [vmem:[#allocation2 + $0x8] sm:$0xff] %vm583, %v1243
        %1254 = vst.msk [vmem:[#allocation2 + $0x10] sm:$0xff] %vm583, %v1245
        %1255 = vst.msk [vmem:[#allocation2 + $0x18] sm:$0xf] %vm587, %v1247
        %v1256 = vld [vmem:[%s695 + $0x1] sm:$0xff]
        %v1257 = vld [vmem:[%s695 + $0x9] sm:$0xff]
        %v1258 = vld [vmem:[%s695 + $0x11] sm:$0xff]
        %v1259 = vld [vmem:[%s695 + $0x19] sm:$0xf]
        %1264 = vrot.lane.b32.xlu0 %v1256, 16
        %v1265 = vpop.permute.xlu0 %1264
        %1266 = vrot.lane.b32.xlu0 %v1257, 16
        %v1267 = vpop.permute.xlu0 %1266
        %1268 = vrot.lane.b32.xlu0 %v1258, 16
        %v1269 = vpop.permute.xlu0 %1268
        %1270 = vrot.lane.b32.xlu0 %v1259, 16
        %v1271 = vpop.permute.xlu0 %1270
        %1276 = vst.msk [vmem:[#allocation2] sm:$0xff] %vm609, %v1265
        %1277 = vst.msk [vmem:[#allocation2 + $0x8] sm:$0xff] %vm609, %v1267
        %1278 = vst.msk [vmem:[#allocation2 + $0x10] sm:$0xff] %vm609, %v1269
        %1279 = vst.msk [vmem:[#allocation2 + $0x18] sm:$0xf] %vm613, %v1271
        %v1280 = vld [vmem:[%s695 + $0x2] sm:$0xff]
        %v1281 = vld [vmem:[%s695 + $0xa] sm:$0xff]
        %v1282 = vld [vmem:[%s695 + $0x12] sm:$0xff]
        %v1283 = vld [vmem:[%s695 + $0x1a] sm:$0xf]
        %1288 = vrot.lane.b32.xlu0 %v1280, 17
        %v1289 = vpop.permute.xlu0 %1288
        %1290 = vrot.lane.b32.xlu0 %v1281, 17
        %v1291 = vpop.permute.xlu0 %1290
        %1292 = vrot.lane.b32.xlu0 %v1282, 17
        %v1293 = vpop.permute.xlu0 %1292
        %1294 = vrot.lane.b32.xlu0 %v1283, 17
        %v1295 = vpop.permute.xlu0 %1294
        %1300 = vst.msk [vmem:[#allocation2] sm:$0xff] %vm635, %v1289
        %1301 = vst.msk [vmem:[#allocation2 + $0x8] sm:$0xff] %vm635, %v1291
        %1302 = vst.msk [vmem:[#allocation2 + $0x10] sm:$0xff] %vm635, %v1293
        %1303 = vst.msk [vmem:[#allocation2 + $0x18] sm:$0xf] %vm639, %v1295
        %v1304 = vld [vmem:[%s695 + $0x3] sm:$0xff]
        %v1305 = vld [vmem:[%s695 + $0xb] sm:$0xff]
        %v1306 = vld [vmem:[%s695 + $0x13] sm:$0xff]
        %v1307 = vld [vmem:[%s695 + $0x1b] sm:$0xf]
        %1312 = vrot.lane.b32.xlu0 %v1304, 18
        %v1313 = vpop.permute.xlu0 %1312
        %1314 = vrot.lane.b32.xlu0 %v1305, 18
        %v1315 = vpop.permute.xlu0 %1314
        %1316 = vrot.lane.b32.xlu0 %v1306, 18
        %v1317 = vpop.permute.xlu0 %1316
        %1318 = vrot.lane.b32.xlu0 %v1307, 18
        %v1319 = vpop.permute.xlu0 %1318
        %1324 = vst.msk [vmem:[#allocation2] sm:$0xff] %vm661, %v1313
        %1325 = vst.msk [vmem:[#allocation2 + $0x8] sm:$0xff] %vm661, %v1315
        %1326 = vst.msk [vmem:[#allocation2 + $0x10] sm:$0xff] %vm661, %v1317
        %1327 = vst.msk [vmem:[#allocation2 + $0x18] sm:$0xf] %vm665, %v1319
        %v1328 = vld [vmem:[%s695 + $0x4] sm:$0xff]
        %v1329 = vld [vmem:[%s695 + $0xc] sm:$0xff]
        %v1330 = vld [vmem:[%s695 + $0x14] sm:$0xff]
        %v1331 = vld [vmem:[%s695 + $0x1c] sm:$0xf]
        %1336 = vrot.lane.b32.xlu0 %v1328, 19
        %v1337 = vpop.permute.xlu0 %1336
        %1338 = vrot.lane.b32.xlu0 %v1329, 19
        %v1339 = vpop.permute.xlu0 %1338
        %1340 = vrot.lane.b32.xlu0 %v1330, 19
        %v1341 = vpop.permute.xlu0 %1340
        %1342 = vrot.lane.b32.xlu0 %v1331, 19
        %v1343 = vpop.permute.xlu0 %1342
        %1348 = vst.msk [vmem:[#allocation2] sm:$0xff] %vm687, %v1337
        %1349 = vst.msk [vmem:[#allocation2 + $0x8] sm:$0xff] %vm687, %v1339
        %1350 = vst.msk [vmem:[#allocation2 + $0x10] sm:$0xff] %vm687, %v1341
        %1351 = vst.msk [vmem:[#allocation2 + $0x18] sm:$0xf] %vm691, %v1343
        %s1352 = sadd.s32 %s177, 5
        %s1353 = smul.u32 %s1352, 32
        %s1354 = scalar_lea.vmem %s165, %s1353
        %v1355 = vld [vmem:[%s1354] sm:$0xff]
        %v1356 = vld [vmem:[%s1354 + $0x8] sm:$0xff]
        %v1357 = vld [vmem:[%s1354 + $0x10] sm:$0xff]
        %v1358 = vld [vmem:[%s1354 + $0x18] sm:$0xf]
        %1363 = vrot.lane.b32.xlu0 %v1355, 20
        %v1364 = vpop.permute.xlu0 %1363
        %1365 = vrot.lane.b32.xlu0 %v1356, 20
        %v1366 = vpop.permute.xlu0 %1365
        %1367 = vrot.lane.b32.xlu0 %v1357, 20
        %v1368 = vpop.permute.xlu0 %1367
        %1369 = vrot.lane.b32.xlu0 %v1358, 20
        %v1370 = vpop.permute.xlu0 %1369
        %1375 = vst.msk [vmem:[#allocation2] sm:$0xff] %vm716, %v1364
        %1376 = vst.msk [vmem:[#allocation2 + $0x8] sm:$0xff] %vm716, %v1366
        %1377 = vst.msk [vmem:[#allocation2 + $0x10] sm:$0xff] %vm716, %v1368
        %1378 = vst.msk [vmem:[#allocation2 + $0x18] sm:$0xf] %vm720, %v1370
        %v1379 = vld [vmem:[%s1354 + $0x1] sm:$0xff]
        %v1380 = vld [vmem:[%s1354 + $0x9] sm:$0xff]
        %v1381 = vld [vmem:[%s1354 + $0x11] sm:$0xff]
        %v1382 = vld [vmem:[%s1354 + $0x19] sm:$0xf]
        %1387 = vrot.lane.b32.xlu0 %v1379, 21
        %v1388 = vpop.permute.xlu0 %1387
        %1389 = vrot.lane.b32.xlu0 %v1380, 21
        %v1390 = vpop.permute.xlu0 %1389
        %1391 = vrot.lane.b32.xlu0 %v1381, 21
        %v1392 = vpop.permute.xlu0 %1391
        %1393 = vrot.lane.b32.xlu0 %v1382, 21
        %v1394 = vpop.permute.xlu0 %1393
        %1399 = vst.msk [vmem:[#allocation2] sm:$0xff] %vm742, %v1388
        %1400 = vst.msk [vmem:[#allocation2 + $0x8] sm:$0xff] %vm742, %v1390
        %1401 = vst.msk [vmem:[#allocation2 + $0x10] sm:$0xff] %vm742, %v1392
        %1402 = vst.msk [vmem:[#allocation2 + $0x18] sm:$0xf] %vm746, %v1394
        %v1403 = vld [vmem:[%s1354 + $0x2] sm:$0xff]
        %v1404 = vld [vmem:[%s1354 + $0xa] sm:$0xff]
        %v1405 = vld [vmem:[%s1354 + $0x12] sm:$0xff]
        %v1406 = vld [vmem:[%s1354 + $0x1a] sm:$0xf]
        %1411 = vrot.lane.b32.xlu0 %v1403, 22
        %v1412 = vpop.permute.xlu0 %1411
        %1413 = vrot.lane.b32.xlu0 %v1404, 22
        %v1414 = vpop.permute.xlu0 %1413
        %1415 = vrot.lane.b32.xlu0 %v1405, 22
        %v1416 = vpop.permute.xlu0 %1415
        %1417 = vrot.lane.b32.xlu0 %v1406, 22
        %v1418 = vpop.permute.xlu0 %1417
        %1423 = vst.msk [vmem:[#allocation2] sm:$0xff] %vm768, %v1412
        %1424 = vst.msk [vmem:[#allocation2 + $0x8] sm:$0xff] %vm768, %v1414
        %1425 = vst.msk [vmem:[#allocation2 + $0x10] sm:$0xff] %vm768, %v1416
        %1426 = vst.msk [vmem:[#allocation2 + $0x18] sm:$0xf] %vm772, %v1418
        %v1427 = vld [vmem:[%s1354 + $0x3] sm:$0xff]
        %v1428 = vld [vmem:[%s1354 + $0xb] sm:$0xff]
        %v1429 = vld [vmem:[%s1354 + $0x13] sm:$0xff]
        %v1430 = vld [vmem:[%s1354 + $0x1b] sm:$0xf]
        %1435 = vrot.lane.b32.xlu0 %v1427, 23
        %v1436 = vpop.permute.xlu0 %1435
        %1437 = vrot.lane.b32.xlu0 %v1428, 23
        %v1438 = vpop.permute.xlu0 %1437
        %1439 = vrot.lane.b32.xlu0 %v1429, 23
        %v1440 = vpop.permute.xlu0 %1439
        %1441 = vrot.lane.b32.xlu0 %v1430, 23
        %v1442 = vpop.permute.xlu0 %1441
        %1447 = vst.msk [vmem:[#allocation2] sm:$0xff] %vm794, %v1436
        %1448 = vst.msk [vmem:[#allocation2 + $0x8] sm:$0xff] %vm794, %v1438
        %1449 = vst.msk [vmem:[#allocation2 + $0x10] sm:$0xff] %vm794, %v1440
        %1450 = vst.msk [vmem:[#allocation2 + $0x18] sm:$0xf] %vm798, %v1442
        %v1451 = vld [vmem:[%s1354 + $0x4] sm:$0xff]
        %v1452 = vld [vmem:[%s1354 + $0xc] sm:$0xff]
        %v1453 = vld [vmem:[%s1354 + $0x14] sm:$0xff]
        %v1454 = vld [vmem:[%s1354 + $0x1c] sm:$0xf]
        %1459 = vrot.lane.b32.xlu0 %v1451, 24
        %v1460 = vpop.permute.xlu0 %1459
        %1461 = vrot.lane.b32.xlu0 %v1452, 24
        %v1462 = vpop.permute.xlu0 %1461
        %1463 = vrot.lane.b32.xlu0 %v1453, 24
        %v1464 = vpop.permute.xlu0 %1463
        %1465 = vrot.lane.b32.xlu0 %v1454, 24
        %v1466 = vpop.permute.xlu0 %1465
        %1471 = vst.msk [vmem:[#allocation2] sm:$0xff] %vm820, %v1460
        %1472 = vst.msk [vmem:[#allocation2 + $0x8] sm:$0xff] %vm820, %v1462
        %1473 = vst.msk [vmem:[#allocation2 + $0x10] sm:$0xff] %vm820, %v1464
        %1474 = vst.msk [vmem:[#allocation2 + $0x18] sm:$0xf] %vm824, %v1466
        %v1475 = vld [vmem:[#allocation2] sm:$0xff]
        %v1476 = vld [vmem:[#allocation2 + $0x8] sm:$0xff]
        %v1477 = vld [vmem:[#allocation2 + $0x10] sm:$0xff]
        %v1478 = vld [vmem:[#allocation2 + $0x18] sm:$0xf]
        %v1479 = vld [vmem:[%s1] sm:$0xff]
        %v1480 = vld [vmem:[%s1 + $0x8] sm:$0xff]
        %v1481 = vld [vmem:[%s1 + $0x10] sm:$0xff]
        %v1482 = vld [vmem:[%s1 + $0x18] sm:$0x1]
        %v1483 = vld [vmem:[%s2] sm:$0x1]
        %v1485 = vperm.slane %v1483, 0
        %v1488 = vsel %vm838, %v1475, 0
        %v1491 = vsel %vm838, %v1476, 0
        %v1494 = vsel %vm838, %v1477, 0
        %v1497 = vsel %vm838, %v1478, 0
        %v1500 = vsel %vm851, %v1482, 0
        %1502 = vmatpush.msra.mxu0 0.0
        %1503 = vmatpush.msra.mxu0 0.0
        %1504 = vmatpush.msra.mxu0 0.0
        %1505 = vmatpush.msra.mxu0 0.0
        %1506 = vmatpush.msra.mxu0 0.0
        %1507 = vmatpush.msra.mxu0 0.0
        %1508 = vmatpush.msra.mxu0 0.0
        %1509 = vmatpush.msra.mxu0 0.0
        %1510 = vmatpush.msra.mxu0 0.0
        %1511 = vmatpush.msra.mxu0 0.0
        %1512 = vmatpush.msra.mxu0 0.0
        %1513 = vmatpush.msra.mxu0 0.0
        %1514 = vmatpush.msra.mxu0 %v1500
        %1515 = vmatpush.msra.mxu0 %v1481
        %1516 = vmatpush.msra.mxu0 %v1480
        %1517 = vmatpush.msra.mxu0 %v1479
        %1518 = vmatmul.f32.gmra.mxu0 %v1488
        %v1519 = vpop.f32.mrf.mxu0
        %v1520 = vadd.f32 %v1485, %v1519
        %1521 = vmatmul.f32.gmra.mxu0 %v1491
        %v1522 = vpop.f32.mrf.mxu0
        %v1523 = vadd.f32 %v1485, %v1522
        %1524 = vmatmul.f32.gmra.mxu0 %v1494
        %v1525 = vpop.f32.mrf.mxu0
        %v1526 = vadd.f32 %v1485, %v1525
        %1527 = vmatmul.f32.gmra.mxu0 %v1497
        %v1528 = vpop.f32.mrf.mxu0
        %v1529 = vadd.f32 %v1485, %v1528
        %1530 = vdwg.mxu0
        %v1531 = vmax.f32 %v1520, 0.0
        %v1532 = vmax.f32 %v1523, 0.0
        %v1533 = vmax.f32 %v1526, 0.0
        %v1534 = vmax.f32 %v1529, 0.0
        %v1535 = vmax.f32 %v884, %v1531
        %v1536 = vmax.f32 %v885, %v1532
        %v1537 = vmax.f32 %v886, %v1533
        %v1538 = vmax.f32 %v887, %v1534
        %vm1539 = vcmask 48128
        %1540 = vst.msk [vmem:[#allocation3] sm:$0xff] %vm1539, %v1535
        %1541 = vst.msk [vmem:[#allocation3 + $0x8] sm:$0xff] %vm1539, %v1536
        %1542 = vst.msk [vmem:[#allocation3 + $0x10] sm:$0xff] %vm1539, %v1537
        %vm1543 = vcmask 44032
        %1544 = vst.msk [vmem:[#allocation3 + $0x18] sm:$0xf] %vm1543, %v1538
        %v1545 = vld [vmem:[#allocation3] ss:$2 sm:$0xff]
        %s1546 = scalar_lea.vmem [#allocation3], 16
        %v1547 = vld [vmem:[%s1546] ss:$2 sm:$0x3f]
        %s1548 = scalar_lea.vmem [#allocation3], 1
        %v1549 = vld [vmem:[%s1548] ss:$2 sm:$0xff]
        %s1550 = scalar_lea.vmem [#allocation3], 17
        %v1551 = vld [vmem:[%s1550] ss:$2 sm:$0x3f]
        %v1552 = vmax.f32 %v1545, %v1549
        %v1553 = vmax.f32 %v1547, %v1551
        %s1554 = smul.u32 %s172, 16
        %s1555 = scalar_lea.vmem %s170, %s1554
        %1556 = vst.msk [vmem:[%s1555] sm:$0xff] %vm1539, %v1552
        %vm1557 = vcmask 46080
        %1558 = vst.msk [vmem:[%s1555 + $0x8] sm:$0x3f] %vm1557, %v1553
      $region37: #{fashion_class_forward.3} parent=31 // loop_footer
        %s176 = sadd.s32 1, %s172
      $region38: #{fashion_class_forward.3} parent=31 // loop_footer_branch
        %171 = sbr.rel target = $region34
      $region39: #{fashion_class_forward.3} parent=31 // loop_exit
        _
      %p1559 = scmp.lt.s32.totalorder %s14, 1
      %s1560 = scalar_select %p1559, %s14, 1
      %s1561 = smul.addr %s1560, 28
      %s1562 = smul.addr %s1561, 8
      %s1563 = scalar_lea.vmem %s3, %s1562
      // Predicated region
      $region40: #{fashion_class_forward.3} parent=31 // pred_check
        %p1564 = pneg %p100
      $region41: #{fashion_class_forward.3} parent=31 // pred_check_branch
        %1566 = sbr.rel (%p1564) target = $region43
      $region42: #{fashion_class_forward.3} parent=31 // pred_region
        _
      $region43: #{fashion_class_forward.3} parent=31 // pred_fallthru
        _
    $region32: #{fashion_class_forward.3} parent=5 // pred_fallthru
      _
    %p1567 = scmp.le.s32.totalorder 2, %s9
    // Predicated region
    $region44: #{fashion_class_forward.3} parent=5 // pred_check
      %p1568 = pneg %p1567
    $region45: #{fashion_class_forward.3} parent=5 // pred_check_branch
      %1570 = sbr.rel (%p1568) target = $region47
    $region46: #{fashion_class_forward.3} parent=5 // pred_region
      %s1571 = ssub.s32 %s9, 2
      // Predicated region
      $region48: #{fashion_class_forward.3} parent=46 // pred_check
        %p1572 = pneg %p106
      $region49: #{fashion_class_forward.3} parent=46 // pred_check_branch
        %1574 = sbr.rel (%p1572) target = $region51
      $region50: #{fashion_class_forward.3} parent=46 // pred_region
        %p1575 = scmp.lt.s32.totalorder %s15, 1
        %s1576 = scalar_select %p1575, %s15, 1
        %s1577 = smul.addr %s1576, 28
        %s1578 = smul.addr %s1577, 8
        %s1579 = scalar_lea.vmem %s3, %s1578
      $region51: #{fashion_class_forward.3} parent=46 // pred_fallthru
        _
    $region47: #{fashion_class_forward.3} parent=5 // pred_fallthru
      _
  $region6: #{fashion_class_forward.3} parent=0 // loop_footer
    %s13 = sadd.s32 1, %s9
  $region7: #{fashion_class_forward.3} parent=0 // loop_footer_branch
    %8 = sbr.rel target = $region3
  $region8: #{fashion_class_forward.3} parent=0 // loop_exit
    _

</llo_original>
